<compile_context>
chip_gen: v5e
topology: v5e:2x2
jax: 0.10.0
libtpu: 0.0.40
codegen_flags: <defaults>
</compile_context>

<pallas_src>
import math

import jax
import jax.numpy as jnp
from jax import lax
from jax.experimental import pallas as pl
from jax.experimental.pallas import tpu as pltpu

# ----------------------- model hyper-parameters (small) ---------------------
D_MODEL = 32
NUM_HEADS = 4
HEAD_DIM = D_MODEL // NUM_HEADS
NUM_LAYERS = 2
D_FF = 4 * D_MODEL
EPS = 1e-5                       # nn.LayerNorm default
NEG_INF = -1e9                   # masked_fill value
SCALE = 1.0 / math.sqrt(HEAD_DIM)
MXU_DTYPE = jnp.bfloat16         # MXU-native operand dtype (f32 accumulation)


# ============================ in-kernel helpers ==============================

def _layer_norm(y, g, b):
    # y: (M, D)   g, b: (1, D) — f32 math
    mu = jnp.mean(y, axis=-1, keepdims=True)
    var = jnp.mean((y - mu) ** 2, axis=-1, keepdims=True)
    return (y - mu) * lax.rsqrt(var + EPS) * g + b


def _head_proj(x_b, w, b):
    # x_b: (H, M, D) bf16   w: (H, D, hd) bf16   b: (H, hd) f32  ->  (H, M, hd) f32
    out = lax.dot_general(x_b, w, (((2,), (1,)), ((0,), (0,))),
                          preferred_element_type=jnp.float32)
    return out + b[:, None, :]


def _attention(q, k, v, bias, BB, Sq, Sk):
    # q: (H, BB*Sq, hd)  k, v: (H, BB*Sk, hd)  (f32), bias: (Sq, Sk) or None.
    # Head-batched QK^T / PV; the batch loop (static, usually BB == 1) wraps
    # only scores + softmax so projections stay folded over the batch.
    outs = []
    for b in range(BB):
        qb = q[:, b * Sq:(b + 1) * Sq, :].astype(MXU_DTYPE)
        kb = k[:, b * Sk:(b + 1) * Sk, :].astype(MXU_DTYPE)
        vb = v[:, b * Sk:(b + 1) * Sk, :].astype(MXU_DTYPE)
        s = lax.dot_general(qb, kb, (((2,), (2,)), ((0,), (0,))),
                            preferred_element_type=jnp.float32) * SCALE
        if bias is not None:
            s = s + bias
        m = jnp.max(s, axis=-1, keepdims=True)
        e = jnp.exp(s - m)
        p = e / jnp.sum(e, axis=-1, keepdims=True)       # exact divide (parity)
        outs.append(lax.dot_general(p.astype(MXU_DTYPE), vb,
                                    (((2,), (1,)), ((0,), (0,))),
                                    preferred_element_type=jnp.float32))
    return outs[0] if BB == 1 else jnp.concatenate(outs, axis=1)   # (H, BB*Sq, hd)


def _merge_heads_proj(attn, w_o, b_o):
    # Fold Wo per head and reduce over heads (no lane concat / transpose).
    # attn: (H, M, hd) f32   w_o: (H, hd, D) bf16   b_o: (1, D) f32  -> (M, D)
    o = lax.dot_general(attn.astype(MXU_DTYPE), w_o,
                        (((2,), (1,)), ((0,), (0,))),
                        preferred_element_type=jnp.float32)        # (H, M, D)
    return jnp.sum(o, axis=0) + b_o


# =============================== fused kernel ================================

def _decoder_kernel(x_ref, enc_ref, pe_ref, causal_ref,
                    w_attn_ref, b_attn_ref, w_o_ref,
                    w_ff1_ref, b_ff1_ref, w_ff2_ref, rows_ref,
                    o_ref):
    BB, S, D = x_ref.shape
    Se = enc_ref.shape[1]
    L = w_ff1_ref.shape[0]
    H = NUM_HEADS
    M = BB * S
    Me = BB * Se

    # PE add (dropout = identity); fold batch into the M dimension.
    x = (x_ref[...].astype(jnp.float32) + pe_ref[...]).reshape(M, D)
    enc = enc_ref[...].astype(jnp.float32).reshape(Me, D)
    enc_b = jnp.broadcast_to(enc.astype(MXU_DTYPE)[None], (H, Me, D))  # hoisted
    causal = causal_ref[...]                                           # (S, S) f32

    for l in range(L):                       # statically unrolled (L == 2)
        rows = rows_ref[l]                   # (9, D): g1,g2,g3,b1,b2,b3,bo_s,bo_c,b_ff2
        wa = lambda j: w_attn_ref[l * 6 + j]     # (H, D, hd) bf16
        ba = lambda j: b_attn_ref[l * 6 + j]     # (H, hd)    f32

        # ---- masked self-attention (head-major, batched dots) ----
        x_b = jnp.broadcast_to(x.astype(MXU_DTYPE)[None], (H, M, D))
        q = _head_proj(x_b, wa(0), ba(0))
        k = _head_proj(x_b, wa(1), ba(1))
        v = _head_proj(x_b, wa(2), ba(2))
        attn = _attention(q, k, v, causal, BB, S, S)
        a = _merge_heads_proj(attn, w_o_ref[l * 2 + 0], rows[6:7])
        x = _layer_norm(x + a, rows[0:1], rows[3:4])          # AddAndNorm 1

        # ---- encoder-decoder cross-attention (no mask) ----
        x_b = jnp.broadcast_to(x.astype(MXU_DTYPE)[None], (H, M, D))
        q = _head_proj(x_b, wa(3), ba(3))
        k = _head_proj(enc_b, wa(4), ba(4))
        v = _head_proj(enc_b, wa(5), ba(5))
        attn = _attention(q, k, v, None, BB, S, Se)
        a = _merge_heads_proj(attn, w_o_ref[l * 2 + 1], rows[7:8])
        x = _layer_norm(x + a, rows[1:2], rows[4:5])          # AddAndNorm 2

        # ---- position-wise feed-forward ----
        h = jnp.dot(x.astype(MXU_DTYPE), w_ff1_ref[l],
                    preferred_element_type=jnp.float32) + b_ff1_ref[l]
        h = jnp.maximum(h, 0.0)
        f = jnp.dot(h.astype(MXU_DTYPE), w_ff2_ref[l],
                    preferred_element_type=jnp.float32) + rows[8:9]
        x = _layer_norm(x + f, rows[2:3], rows[5:6])          # AddAndNorm 3

    o_ref[...] = x.reshape(BB, S, D).astype(o_ref.dtype)


# ============================ JAX-level wrapper ==============================

def sinusoidal_pe(seq_len, d_model):
    pos = jnp.arange(seq_len, dtype=jnp.float32)[:, None]
    div = jnp.exp(jnp.arange(0, d_model, 2, dtype=jnp.float32)
                  * (-math.log(10000.0) / d_model))
    pe = jnp.zeros((seq_len, d_model), jnp.float32)
    pe = pe.at[:, 0::2].set(jnp.sin(pos * div))
    pe = pe.at[:, 1::2].set(jnp.cos(pos * div))
    return pe


_WEIGHT_KEYS = ["w_attn", "b_attn", "w_o", "w_ff1", "b_ff1", "w_ff2", "rows"]


def decoder_forward(x, encoder_output, params, mask=None, grid_blocks=2):
    # TODO(synk): external mask not supported; only the default causal path.
    assert mask is None, "only the default causal-mask path is implemented"

    B, S, D = x.shape
    Se = encoder_output.shape[1]

    # grid_blocks=2 keeps both v7x TensorCores busy; use 1 on single-TC
    # v5e/v6e to fold the whole batch into one grid step.
    G = grid_blocks if (grid_blocks >= 1 and B % grid_blocks == 0) else 1
    G = max(1, min(G, B))
    BB = B // G

    pe = sinusoidal_pe(S, D)
    row = jnp.arange(S, dtype=jnp.int32)[:, None]
    col = jnp.arange(S, dtype=jnp.int32)[None, :]
    causal = jnp.where(col > row, NEG_INF, 0.0).astype(jnp.float32)   # additive bias

    weights = [params[k] for k in _WEIGHT_KEYS]

    def _full(shape):
        return pl.BlockSpec(shape, lambda b, _n=len(shape): (0,) * _n)

    in_specs = ([pl.BlockSpec((BB, S, D), lambda b: (b, 0, 0)),
                 pl.BlockSpec((BB, Se, D), lambda b: (b, 0, 0)),
                 pl.BlockSpec((S, D), lambda b: (0, 0)),
                 pl.BlockSpec((S, S), lambda b: (0, 0))]
                + [_full(w.shape) for w in weights])

    return pl.pallas_call(
        _decoder_kernel,
        out_shape=jax.ShapeDtypeStruct((B, S, D), x.dtype),
        grid=(G,),
        in_specs=in_specs,
        out_specs=pl.BlockSpec((BB, S, D), lambda b: (b, 0, 0)),
        compiler_params=pltpu.CompilerParams(
            dimension_semantics=("parallel",)),   # batch blocks shard across TCs (v7x)
    )(x, encoder_output, pe, causal, *weights)


# ============================ parameter construction =========================

def init_params(key):
    def dense(k, fan_in, fan_out):
        kw, kb = jax.random.split(k)
        w = jax.random.normal(kw, (fan_in, fan_out), jnp.float32) * 0.02
        b = jax.random.normal(kb, (fan_out,), jnp.float32) * 0.02
        return w, b

    def head_major_w(w):          # (D, D) -> (H, D, hd)
        return w.reshape(D_MODEL, NUM_HEADS, HEAD_DIM).transpose(1, 0, 2)

    def head_major_b(b):          # (D,) -> (H, hd)
        return b.reshape(NUM_HEADS, HEAD_DIM)

    w_attn, b_attn, w_o = [], [], []
    w1s, b1s, w2s, rows = [], [], [], []

    for lk in jax.random.split(key, NUM_LAYERS):
        ks = jax.random.split(lk, 10)
        # self-attention
        wq, bq = dense(ks[0], D_MODEL, D_MODEL)
        wk, bk = dense(ks[1], D_MODEL, D_MODEL)
        wv, bv = dense(ks[2], D_MODEL, D_MODEL)
        wo, bo = dense(ks[3], D_MODEL, D_MODEL)
        # cross-attention
        wq2, bq2 = dense(ks[4], D_MODEL, D_MODEL)
        wk2, bk2 = dense(ks[5], D_MODEL, D_MODEL)
        wv2, bv2 = dense(ks[6], D_MODEL, D_MODEL)
        wo2, bo2 = dense(ks[7], D_MODEL, D_MODEL)
        # feed-forward
        w1, b1 = dense(ks[8], D_MODEL, D_FF)
        w2, b2 = dense(ks[9], D_FF, D_MODEL)

        w_attn += [head_major_w(w) for w in (wq, wk, wv, wq2, wk2, wv2)]
        b_attn += [head_major_b(b) for b in (bq, bk, bv, bq2, bk2, bv2)]
        w_o += [wo.reshape(NUM_HEADS, HEAD_DIM, D_MODEL),
                wo2.reshape(NUM_HEADS, HEAD_DIM, D_MODEL)]
        w1s.append(w1)
        b1s.append(b1[None, :])
        w2s.append(w2)

        ln_g = jnp.ones((3, D_MODEL), jnp.float32)
        ln_b = jnp.zeros((3, D_MODEL), jnp.float32)
        rows.append(jnp.concatenate(
            [ln_g, ln_b, bo[None, :], bo2[None, :], b2[None, :]], axis=0))  # (9, D)

    return dict(
        w_attn=jnp.stack(w_attn).astype(MXU_DTYPE),    # (L*6, H, D, hd)  bf16
        b_attn=jnp.stack(b_attn),                      # (L*6, H, hd)     f32
        w_o=jnp.stack(w_o).astype(MXU_DTYPE),          # (L*2, H, hd, D)  bf16
        w_ff1=jnp.stack(w1s).astype(MXU_DTYPE),        # (L, D, 4D)       bf16
        b_ff1=jnp.stack(b1s),                          # (L, 1, 4D)       f32
        w_ff2=jnp.stack(w2s).astype(MXU_DTYPE),        # (L, 4D, D)       bf16
        rows=jnp.stack(rows),                          # (L, 9, D)        f32
    )


# ===================================== main ==================================

if __name__ == "__main__":
    B, S, S_ENC = 2, 8, 8
    key = jax.random.PRNGKey(0)
    k_x, k_enc, k_p = jax.random.split(key, 3)

    x = jax.random.normal(k_x, (B, S, D_MODEL), jnp.float32)
    enc_out = jax.random.normal(k_enc, (B, S_ENC, D_MODEL), jnp.float32)
    params = init_params(k_p)

    fwd = jax.jit(lambda x_, e_, p_: decoder_forward(x_, e_, p_, mask=None))
    out = jax.block_until_ready(fwd(x, enc_out, params))

    assert out.shape == (B, S, D_MODEL)
    assert bool(jnp.all(jnp.isfinite(out)))
    print("KERNEL_OK")
</pallas_src>

<mosaic_0001>
module attributes {stable_mosaic.version = 11 : i64} {
  func.func @_decoder_kernel(%arg0: i32, %arg1: memref<1x8x32xf32, #tpu.memory_space<vmem>>, %arg2: memref<1x8x32xf32, #tpu.memory_space<vmem>>, %arg3: memref<8x32xf32, #tpu.memory_space<vmem>>, %arg4: memref<8x8xf32, #tpu.memory_space<vmem>>, %arg5: memref<12x4x32x8xbf16, #tpu.memory_space<vmem>>, %arg6: memref<12x4x8xf32, #tpu.memory_space<vmem>>, %arg7: memref<4x4x8x32xbf16, #tpu.memory_space<vmem>>, %arg8: memref<2x32x128xbf16, #tpu.memory_space<vmem>>, %arg9: memref<2x1x128xf32, #tpu.memory_space<vmem>>, %arg10: memref<2x128x32xbf16, #tpu.memory_space<vmem>>, %arg11: memref<2x9x32xf32, #tpu.memory_space<vmem>>, %arg12: memref<1x8x32xf32, #tpu.memory_space<vmem>>) attributes {dimension_semantics = [#tpu.dimension_semantics<parallel>], iteration_bounds = array<i64: 2>, scalar_prefetch = 0 : i64, scratch_operands = 0 : i64, tpu.core_type = #tpu.core_type<tc>, window_params = [{transform_indices = @transform_0, window_bounds = array<i64: 1, 8, 32>}, {transform_indices = @transform_1, window_bounds = array<i64: 1, 8, 32>}, {pipeline_mode = #tpu.pipeline_mode<synchronous>, transform_indices = @transform_2, window_bounds = array<i64: 8, 32>}, {pipeline_mode = #tpu.pipeline_mode<synchronous>, transform_indices = @transform_3, window_bounds = array<i64: 8, 8>}, {pipeline_mode = #tpu.pipeline_mode<synchronous>, transform_indices = @transform_4, window_bounds = array<i64: 12, 4, 32, 8>}, {pipeline_mode = #tpu.pipeline_mode<synchronous>, transform_indices = @transform_5, window_bounds = array<i64: 12, 4, 8>}, {pipeline_mode = #tpu.pipeline_mode<synchronous>, transform_indices = @transform_6, window_bounds = array<i64: 4, 4, 8, 32>}, {pipeline_mode = #tpu.pipeline_mode<synchronous>, transform_indices = @transform_7, window_bounds = array<i64: 2, 32, 128>}, {pipeline_mode = #tpu.pipeline_mode<synchronous>, transform_indices = @transform_8, window_bounds = array<i64: 2, 1, 128>}, {pipeline_mode = #tpu.pipeline_mode<synchronous>, transform_indices = @transform_9, window_bounds = array<i64: 2, 128, 32>}, {pipeline_mode = #tpu.pipeline_mode<synchronous>, transform_indices = @transform_10, window_bounds = array<i64: 2, 9, 32>}, {transform_indices = @transform_11, window_bounds = array<i64: 1, 8, 32>}]} {
    %c0 = arith.constant 0 : index
    %c0_0 = arith.constant 0 : index
    %c0_1 = arith.constant 0 : index
    %0 = vector.load %arg1[%c0, %c0_0, %c0_1] : memref<1x8x32xf32, #tpu.memory_space<vmem>>, vector<1x8x32xf32>
    %c0_2 = arith.constant 0 : index
    %c0_3 = arith.constant 0 : index
    %1 = vector.load %arg3[%c0_2, %c0_3] : memref<8x32xf32, #tpu.memory_space<vmem>>, vector<8x32xf32>
    %2 = vector.shape_cast %1 : vector<8x32xf32> to vector<1x8x32xf32>
    %3 = arith.addf %0, %2 : vector<1x8x32xf32>
    %4 = vector.shape_cast %3 : vector<1x8x32xf32> to vector<8x32xf32>
    %c0_4 = arith.constant 0 : index
    %c0_5 = arith.constant 0 : index
    %c0_6 = arith.constant 0 : index
    %5 = vector.load %arg2[%c0_4, %c0_5, %c0_6] : memref<1x8x32xf32, #tpu.memory_space<vmem>>, vector<1x8x32xf32>
    %6 = vector.shape_cast %5 : vector<1x8x32xf32> to vector<8x32xf32>
    %7 = arith.truncf %6 : vector<8x32xf32> to vector<8x32xbf16>
    %8 = vector.shape_cast %7 : vector<8x32xbf16> to vector<1x8x32xbf16>
    %9 = vector.shape_cast %8 : vector<1x8x32xbf16> to vector<1x8x32xbf16>
    %10 = vector.broadcast %9 : vector<1x8x32xbf16> to vector<4x8x32xbf16>
    %c0_7 = arith.constant 0 : index
    %c0_8 = arith.constant 0 : index
    %11 = vector.load %arg4[%c0_7, %c0_8] : memref<8x8xf32, #tpu.memory_space<vmem>>, vector<8x8xf32>
    %c0_9 = arith.constant 0 : index
    %c0_10 = arith.constant 0 : index
    %c0_11 = arith.constant 0 : index
    %12 = vector.load %arg11[%c0_9, %c0_10, %c0_11] : memref<2x9x32xf32, #tpu.memory_space<vmem>>, vector<1x9x32xf32>
    %13 = vector.shape_cast %12 : vector<1x9x32xf32> to vector<9x32xf32>
    %14 = arith.truncf %4 : vector<8x32xf32> to vector<8x32xbf16>
    %15 = vector.shape_cast %14 : vector<8x32xbf16> to vector<1x8x32xbf16>
    %16 = vector.shape_cast %15 : vector<1x8x32xbf16> to vector<1x8x32xbf16>
    %17 = vector.broadcast %16 : vector<1x8x32xbf16> to vector<4x8x32xbf16>
    %c0_12 = arith.constant 0 : index
    %c0_13 = arith.constant 0 : index
    %c0_14 = arith.constant 0 : index
    %c0_15 = arith.constant 0 : index
    %18 = vector.load %arg5[%c0_12, %c0_13, %c0_14, %c0_15] : memref<12x4x32x8xbf16, #tpu.memory_space<vmem>>, vector<1x4x32x8xbf16>
    %19 = vector.shape_cast %18 : vector<1x4x32x8xbf16> to vector<4x32x8xbf16>
    %c0_16 = arith.constant 0 : index
    %c0_17 = arith.constant 0 : index
    %c0_18 = arith.constant 0 : index
    %20 = vector.load %arg6[%c0_16, %c0_17, %c0_18] : memref<12x4x8xf32, #tpu.memory_space<vmem>>, vector<1x4x8xf32>
    %21 = vector.shape_cast %20 : vector<1x4x8xf32> to vector<4x8xf32>
    %cst = arith.constant dense<0.000000e+00> : vector<4x8x8xf32>
    %22 = tpu.matmul %17, %19, %cst {dimension_numbers = #tpu.dot_dimension_numbers<[2], [1], [1], [2], [0, 0, 0, 1, 1, 2], [0], [0]>} : vector<4x8x32xbf16>, vector<4x32x8xbf16>, vector<4x8x8xf32> -> vector<4x8x8xf32>
    %23 = vector.shape_cast %21 : vector<4x8xf32> to vector<4x1x8xf32>
    %24 = vector.broadcast %23 : vector<4x1x8xf32> to vector<4x8x8xf32>
    %25 = arith.addf %22, %24 : vector<4x8x8xf32>
    %c1 = arith.constant 1 : index
    %c0_19 = arith.constant 0 : index
    %c0_20 = arith.constant 0 : index
    %c0_21 = arith.constant 0 : index
    %26 = vector.load %arg5[%c1, %c0_19, %c0_20, %c0_21] : memref<12x4x32x8xbf16, #tpu.memory_space<vmem>>, vector<1x4x32x8xbf16>
    %27 = vector.shape_cast %26 : vector<1x4x32x8xbf16> to vector<4x32x8xbf16>
    %c1_22 = arith.constant 1 : index
    %c0_23 = arith.constant 0 : index
    %c0_24 = arith.constant 0 : index
    %28 = vector.load %arg6[%c1_22, %c0_23, %c0_24] : memref<12x4x8xf32, #tpu.memory_space<vmem>>, vector<1x4x8xf32>
    %29 = vector.shape_cast %28 : vector<1x4x8xf32> to vector<4x8xf32>
    %cst_25 = arith.constant dense<0.000000e+00> : vector<4x8x8xf32>
    %30 = tpu.matmul %17, %27, %cst_25 {dimension_numbers = #tpu.dot_dimension_numbers<[2], [1], [1], [2], [0, 0, 0, 1, 1, 2], [0], [0]>} : vector<4x8x32xbf16>, vector<4x32x8xbf16>, vector<4x8x8xf32> -> vector<4x8x8xf32>
    %31 = vector.shape_cast %29 : vector<4x8xf32> to vector<4x1x8xf32>
    %32 = vector.broadcast %31 : vector<4x1x8xf32> to vector<4x8x8xf32>
    %33 = arith.addf %30, %32 : vector<4x8x8xf32>
    %c2 = arith.constant 2 : index
    %c0_26 = arith.constant 0 : index
    %c0_27 = arith.constant 0 : index
    %c0_28 = arith.constant 0 : index
    %34 = vector.load %arg5[%c2, %c0_26, %c0_27, %c0_28] : memref<12x4x32x8xbf16, #tpu.memory_space<vmem>>, vector<1x4x32x8xbf16>
    %35 = vector.shape_cast %34 : vector<1x4x32x8xbf16> to vector<4x32x8xbf16>
    %c2_29 = arith.constant 2 : index
    %c0_30 = arith.constant 0 : index
    %c0_31 = arith.constant 0 : index
    %36 = vector.load %arg6[%c2_29, %c0_30, %c0_31] : memref<12x4x8xf32, #tpu.memory_space<vmem>>, vector<1x4x8xf32>
    %37 = vector.shape_cast %36 : vector<1x4x8xf32> to vector<4x8xf32>
    %cst_32 = arith.constant dense<0.000000e+00> : vector<4x8x8xf32>
    %38 = tpu.matmul %17, %35, %cst_32 {dimension_numbers = #tpu.dot_dimension_numbers<[2], [1], [1], [2], [0, 0, 0, 1, 1, 2], [0], [0]>} : vector<4x8x32xbf16>, vector<4x32x8xbf16>, vector<4x8x8xf32> -> vector<4x8x8xf32>
    %39 = vector.shape_cast %37 : vector<4x8xf32> to vector<4x1x8xf32>
    %40 = vector.broadcast %39 : vector<4x1x8xf32> to vector<4x8x8xf32>
    %41 = arith.addf %38, %40 : vector<4x8x8xf32>
    %42 = arith.truncf %25 : vector<4x8x8xf32> to vector<4x8x8xbf16>
    %43 = arith.truncf %33 : vector<4x8x8xf32> to vector<4x8x8xbf16>
    %44 = arith.truncf %41 : vector<4x8x8xf32> to vector<4x8x8xbf16>
    %cst_33 = arith.constant dense<0.000000e+00> : vector<4x8x8xf32>
    %45 = tpu.matmul %42, %43, %cst_33 {dimension_numbers = #tpu.dot_dimension_numbers<[2], [2], [1], [1], [0, 0, 0, 1, 1, 1], [0], [0]>} : vector<4x8x8xbf16>, vector<4x8x8xbf16>, vector<4x8x8xf32> -> vector<4x8x8xf32>
    %cst_34 = arith.constant 0.353553385 : f32
    %46 = vector.broadcast %cst_34 : f32 to vector<4x8x8xf32>
    %47 = arith.mulf %45, %46 : vector<4x8x8xf32>
    %48 = vector.shape_cast %11 : vector<8x8xf32> to vector<1x8x8xf32>
    %49 = vector.broadcast %48 : vector<1x8x8xf32> to vector<4x8x8xf32>
    %50 = arith.addf %47, %49 : vector<4x8x8xf32>
    %cst_35 = arith.constant dense<0xFF800000> : vector<4x8xf32>
    %51 = vector.multi_reduction <maximumf>, %50, %cst_35 [2] : vector<4x8x8xf32> to vector<4x8xf32>
    %52 = vector.shape_cast %51 : vector<4x8xf32> to vector<4x8x1xf32>
    %53 = vector.broadcast %52 : vector<4x8x1xf32> to vector<4x8x8xf32>
    %54 = arith.subf %50, %53 : vector<4x8x8xf32>
    %55 = math.exp %54 : vector<4x8x8xf32>
    %cst_36 = arith.constant dense<0.000000e+00> : vector<4x8xf32>
    %56 = vector.multi_reduction <add>, %55, %cst_36 [2] : vector<4x8x8xf32> to vector<4x8xf32>
    %57 = vector.shape_cast %56 : vector<4x8xf32> to vector<4x8x1xf32>
    %58 = vector.broadcast %57 : vector<4x8x1xf32> to vector<4x8x8xf32>
    %59 = arith.divf %55, %58 : vector<4x8x8xf32>
    %60 = arith.truncf %59 : vector<4x8x8xf32> to vector<4x8x8xbf16>
    %cst_37 = arith.constant dense<0.000000e+00> : vector<4x8x8xf32>
    %61 = tpu.matmul %60, %44, %cst_37 {dimension_numbers = #tpu.dot_dimension_numbers<[2], [1], [1], [2], [0, 0, 0, 1, 1, 2], [0], [0]>} : vector<4x8x8xbf16>, vector<4x8x8xbf16>, vector<4x8x8xf32> -> vector<4x8x8xf32>
    %c0_38 = arith.constant 0 : index
    %c0_39 = arith.constant 0 : index
    %c0_40 = arith.constant 0 : index
    %c0_41 = arith.constant 0 : index
    %62 = vector.load %arg7[%c0_38, %c0_39, %c0_40, %c0_41] : memref<4x4x8x32xbf16, #tpu.memory_space<vmem>>, vector<1x4x8x32xbf16>
    %63 = vector.shape_cast %62 : vector<1x4x8x32xbf16> to vector<4x8x32xbf16>
    %64 = vector.extract_strided_slice %13 {offsets = [6, 0], sizes = [1, 32], strides = [1, 1]} : vector<9x32xf32> to vector<1x32xf32>
    %65 = arith.truncf %61 : vector<4x8x8xf32> to vector<4x8x8xbf16>
    %cst_42 = arith.constant dense<0.000000e+00> : vector<4x8x32xf32>
    %66 = tpu.matmul %65, %63, %cst_42 {dimension_numbers = #tpu.dot_dimension_numbers<[2], [1], [1], [2], [0, 0, 0, 1, 1, 2], [0], [0]>} : vector<4x8x8xbf16>, vector<4x8x32xbf16>, vector<4x8x32xf32> -> vector<4x8x32xf32>
    %cst_43 = arith.constant dense<0.000000e+00> : vector<8x32xf32>
    %67 = vector.multi_reduction <add>, %66, %cst_43 [0] : vector<4x8x32xf32> to vector<8x32xf32>
    %68 = vector.broadcast %64 : vector<1x32xf32> to vector<8x32xf32>
    %69 = arith.addf %67, %68 : vector<8x32xf32>
    %70 = arith.addf %4, %69 : vector<8x32xf32>
    %71 = vector.extract_strided_slice %13 {offsets = [0, 0], sizes = [1, 32], strides = [1, 1]} : vector<9x32xf32> to vector<1x32xf32>
    %72 = vector.extract_strided_slice %13 {offsets = [3, 0], sizes = [1, 32], strides = [1, 1]} : vector<9x32xf32> to vector<1x32xf32>
    %cst_44 = arith.constant dense<0.000000e+00> : vector<8xf32>
    %73 = vector.multi_reduction <add>, %70, %cst_44 [1] : vector<8x32xf32> to vector<8xf32>
    %74 = vector.shape_cast %73 : vector<8xf32> to vector<8x1xf32>
    %cst_45 = arith.constant 3.200000e+01 : f32
    %75 = vector.broadcast %cst_45 : f32 to vector<8x1xf32>
    %76 = arith.divf %74, %75 : vector<8x1xf32>
    %77 = vector.broadcast %76 : vector<8x1xf32> to vector<8x32xf32>
    %78 = arith.subf %70, %77 : vector<8x32xf32>
    %79 = arith.mulf %78, %78 : vector<8x32xf32>
    %cst_46 = arith.constant dense<0.000000e+00> : vector<8xf32>
    %80 = vector.multi_reduction <add>, %79, %cst_46 [1] : vector<8x32xf32> to vector<8xf32>
    %81 = vector.shape_cast %80 : vector<8xf32> to vector<8x1xf32>
    %cst_47 = arith.constant 3.200000e+01 : f32
    %82 = vector.broadcast %cst_47 : f32 to vector<8x1xf32>
    %83 = arith.divf %81, %82 : vector<8x1xf32>
    %84 = vector.broadcast %76 : vector<8x1xf32> to vector<8x32xf32>
    %85 = arith.subf %70, %84 : vector<8x32xf32>
    %cst_48 = arith.constant 9.99999974E-6 : f32
    %86 = vector.broadcast %cst_48 : f32 to vector<8x1xf32>
    %87 = arith.addf %83, %86 : vector<8x1xf32>
    %88 = math.rsqrt %87 : vector<8x1xf32>
    %89 = vector.broadcast %88 : vector<8x1xf32> to vector<8x32xf32>
    %90 = arith.mulf %85, %89 : vector<8x32xf32>
    %91 = vector.broadcast %71 : vector<1x32xf32> to vector<8x32xf32>
    %92 = arith.mulf %90, %91 : vector<8x32xf32>
    %93 = vector.broadcast %72 : vector<1x32xf32> to vector<8x32xf32>
    %94 = arith.addf %92, %93 : vector<8x32xf32>
    %95 = arith.truncf %94 : vector<8x32xf32> to vector<8x32xbf16>
    %96 = vector.shape_cast %95 : vector<8x32xbf16> to vector<1x8x32xbf16>
    %97 = vector.shape_cast %96 : vector<1x8x32xbf16> to vector<1x8x32xbf16>
    %98 = vector.broadcast %97 : vector<1x8x32xbf16> to vector<4x8x32xbf16>
    %c3 = arith.constant 3 : index
    %c0_49 = arith.constant 0 : index
    %c0_50 = arith.constant 0 : index
    %c0_51 = arith.constant 0 : index
    %99 = vector.load %arg5[%c3, %c0_49, %c0_50, %c0_51] : memref<12x4x32x8xbf16, #tpu.memory_space<vmem>>, vector<1x4x32x8xbf16>
    %100 = vector.shape_cast %99 : vector<1x4x32x8xbf16> to vector<4x32x8xbf16>
    %c3_52 = arith.constant 3 : index
    %c0_53 = arith.constant 0 : index
    %c0_54 = arith.constant 0 : index
    %101 = vector.load %arg6[%c3_52, %c0_53, %c0_54] : memref<12x4x8xf32, #tpu.memory_space<vmem>>, vector<1x4x8xf32>
    %102 = vector.shape_cast %101 : vector<1x4x8xf32> to vector<4x8xf32>
    %cst_55 = arith.constant dense<0.000000e+00> : vector<4x8x8xf32>
    %103 = tpu.matmul %98, %100, %cst_55 {dimension_numbers = #tpu.dot_dimension_numbers<[2], [1], [1], [2], [0, 0, 0, 1, 1, 2], [0], [0]>} : vector<4x8x32xbf16>, vector<4x32x8xbf16>, vector<4x8x8xf32> -> vector<4x8x8xf32>
    %104 = vector.shape_cast %102 : vector<4x8xf32> to vector<4x1x8xf32>
    %105 = vector.broadcast %104 : vector<4x1x8xf32> to vector<4x8x8xf32>
    %106 = arith.addf %103, %105 : vector<4x8x8xf32>
    %c4 = arith.constant 4 : index
    %c0_56 = arith.constant 0 : index
    %c0_57 = arith.constant 0 : index
    %c0_58 = arith.constant 0 : index
    %107 = vector.load %arg5[%c4, %c0_56, %c0_57, %c0_58] : memref<12x4x32x8xbf16, #tpu.memory_space<vmem>>, vector<1x4x32x8xbf16>
    %108 = vector.shape_cast %107 : vector<1x4x32x8xbf16> to vector<4x32x8xbf16>
    %c4_59 = arith.constant 4 : index
    %c0_60 = arith.constant 0 : index
    %c0_61 = arith.constant 0 : index
    %109 = vector.load %arg6[%c4_59, %c0_60, %c0_61] : memref<12x4x8xf32, #tpu.memory_space<vmem>>, vector<1x4x8xf32>
    %110 = vector.shape_cast %109 : vector<1x4x8xf32> to vector<4x8xf32>
    %cst_62 = arith.constant dense<0.000000e+00> : vector<4x8x8xf32>
    %111 = tpu.matmul %10, %108, %cst_62 {dimension_numbers = #tpu.dot_dimension_numbers<[2], [1], [1], [2], [0, 0, 0, 1, 1, 2], [0], [0]>} : vector<4x8x32xbf16>, vector<4x32x8xbf16>, vector<4x8x8xf32> -> vector<4x8x8xf32>
    %112 = vector.shape_cast %110 : vector<4x8xf32> to vector<4x1x8xf32>
    %113 = vector.broadcast %112 : vector<4x1x8xf32> to vector<4x8x8xf32>
    %114 = arith.addf %111, %113 : vector<4x8x8xf32>
    %c5 = arith.constant 5 : index
    %c0_63 = arith.constant 0 : index
    %c0_64 = arith.constant 0 : index
    %c0_65 = arith.constant 0 : index
    %115 = vector.load %arg5[%c5, %c0_63, %c0_64, %c0_65] : memref<12x4x32x8xbf16, #tpu.memory_space<vmem>>, vector<1x4x32x8xbf16>
    %116 = vector.shape_cast %115 : vector<1x4x32x8xbf16> to vector<4x32x8xbf16>
    %c5_66 = arith.constant 5 : index
    %c0_67 = arith.constant 0 : index
    %c0_68 = arith.constant 0 : index
    %117 = vector.load %arg6[%c5_66, %c0_67, %c0_68] : memref<12x4x8xf32, #tpu.memory_space<vmem>>, vector<1x4x8xf32>
    %118 = vector.shape_cast %117 : vector<1x4x8xf32> to vector<4x8xf32>
    %cst_69 = arith.constant dense<0.000000e+00> : vector<4x8x8xf32>
    %119 = tpu.matmul %10, %116, %cst_69 {dimension_numbers = #tpu.dot_dimension_numbers<[2], [1], [1], [2], [0, 0, 0, 1, 1, 2], [0], [0]>} : vector<4x8x32xbf16>, vector<4x32x8xbf16>, vector<4x8x8xf32> -> vector<4x8x8xf32>
    %120 = vector.shape_cast %118 : vector<4x8xf32> to vector<4x1x8xf32>
    %121 = vector.broadcast %120 : vector<4x1x8xf32> to vector<4x8x8xf32>
    %122 = arith.addf %119, %121 : vector<4x8x8xf32>
    %123 = arith.truncf %106 : vector<4x8x8xf32> to vector<4x8x8xbf16>
    %124 = arith.truncf %114 : vector<4x8x8xf32> to vector<4x8x8xbf16>
    %125 = arith.truncf %122 : vector<4x8x8xf32> to vector<4x8x8xbf16>
    %cst_70 = arith.constant dense<0.000000e+00> : vector<4x8x8xf32>
    %126 = tpu.matmul %123, %124, %cst_70 {dimension_numbers = #tpu.dot_dimension_numbers<[2], [2], [1], [1], [0, 0, 0, 1, 1, 1], [0], [0]>} : vector<4x8x8xbf16>, vector<4x8x8xbf16>, vector<4x8x8xf32> -> vector<4x8x8xf32>
    %cst_71 = arith.constant 0.353553385 : f32
    %127 = vector.broadcast %cst_71 : f32 to vector<4x8x8xf32>
    %128 = arith.mulf %126, %127 : vector<4x8x8xf32>
    %cst_72 = arith.constant dense<0xFF800000> : vector<4x8xf32>
    %129 = vector.multi_reduction <maximumf>, %128, %cst_72 [2] : vector<4x8x8xf32> to vector<4x8xf32>
    %130 = vector.shape_cast %129 : vector<4x8xf32> to vector<4x8x1xf32>
    %131 = vector.broadcast %130 : vector<4x8x1xf32> to vector<4x8x8xf32>
    %132 = arith.subf %128, %131 : vector<4x8x8xf32>
    %133 = math.exp %132 : vector<4x8x8xf32>
    %cst_73 = arith.constant dense<0.000000e+00> : vector<4x8xf32>
    %134 = vector.multi_reduction <add>, %133, %cst_73 [2] : vector<4x8x8xf32> to vector<4x8xf32>
    %135 = vector.shape_cast %134 : vector<4x8xf32> to vector<4x8x1xf32>
    %136 = vector.broadcast %135 : vector<4x8x1xf32> to vector<4x8x8xf32>
    %137 = arith.divf %133, %136 : vector<4x8x8xf32>
    %138 = arith.truncf %137 : vector<4x8x8xf32> to vector<4x8x8xbf16>
    %cst_74 = arith.constant dense<0.000000e+00> : vector<4x8x8xf32>
    %139 = tpu.matmul %138, %125, %cst_74 {dimension_numbers = #tpu.dot_dimension_numbers<[2], [1], [1], [2], [0, 0, 0, 1, 1, 2], [0], [0]>} : vector<4x8x8xbf16>, vector<4x8x8xbf16>, vector<4x8x8xf32> -> vector<4x8x8xf32>
    %c1_75 = arith.constant 1 : index
    %c0_76 = arith.constant 0 : index
    %c0_77 = arith.constant 0 : index
    %c0_78 = arith.constant 0 : index
    %140 = vector.load %arg7[%c1_75, %c0_76, %c0_77, %c0_78] : memref<4x4x8x32xbf16, #tpu.memory_space<vmem>>, vector<1x4x8x32xbf16>
    %141 = vector.shape_cast %140 : vector<1x4x8x32xbf16> to vector<4x8x32xbf16>
    %142 = vector.extract_strided_slice %13 {offsets = [7, 0], sizes = [1, 32], strides = [1, 1]} : vector<9x32xf32> to vector<1x32xf32>
    %143 = arith.truncf %139 : vector<4x8x8xf32> to vector<4x8x8xbf16>
    %cst_79 = arith.constant dense<0.000000e+00> : vector<4x8x32xf32>
    %144 = tpu.matmul %143, %141, %cst_79 {dimension_numbers = #tpu.dot_dimension_numbers<[2], [1], [1], [2], [0, 0, 0, 1, 1, 2], [0], [0]>} : vector<4x8x8xbf16>, vector<4x8x32xbf16>, vector<4x8x32xf32> -> vector<4x8x32xf32>
    %cst_80 = arith.constant dense<0.000000e+00> : vector<8x32xf32>
    %145 = vector.multi_reduction <add>, %144, %cst_80 [0] : vector<4x8x32xf32> to vector<8x32xf32>
    %146 = vector.broadcast %142 : vector<1x32xf32> to vector<8x32xf32>
    %147 = arith.addf %145, %146 : vector<8x32xf32>
    %148 = arith.addf %94, %147 : vector<8x32xf32>
    %149 = vector.extract_strided_slice %13 {offsets = [1, 0], sizes = [1, 32], strides = [1, 1]} : vector<9x32xf32> to vector<1x32xf32>
    %150 = vector.extract_strided_slice %13 {offsets = [4, 0], sizes = [1, 32], strides = [1, 1]} : vector<9x32xf32> to vector<1x32xf32>
    %cst_81 = arith.constant dense<0.000000e+00> : vector<8xf32>
    %151 = vector.multi_reduction <add>, %148, %cst_81 [1] : vector<8x32xf32> to vector<8xf32>
    %152 = vector.shape_cast %151 : vector<8xf32> to vector<8x1xf32>
    %cst_82 = arith.constant 3.200000e+01 : f32
    %153 = vector.broadcast %cst_82 : f32 to vector<8x1xf32>
    %154 = arith.divf %152, %153 : vector<8x1xf32>
    %155 = vector.broadcast %154 : vector<8x1xf32> to vector<8x32xf32>
    %156 = arith.subf %148, %155 : vector<8x32xf32>
    %157 = arith.mulf %156, %156 : vector<8x32xf32>
    %cst_83 = arith.constant dense<0.000000e+00> : vector<8xf32>
    %158 = vector.multi_reduction <add>, %157, %cst_83 [1] : vector<8x32xf32> to vector<8xf32>
    %159 = vector.shape_cast %158 : vector<8xf32> to vector<8x1xf32>
    %cst_84 = arith.constant 3.200000e+01 : f32
    %160 = vector.broadcast %cst_84 : f32 to vector<8x1xf32>
    %161 = arith.divf %159, %160 : vector<8x1xf32>
    %162 = vector.broadcast %154 : vector<8x1xf32> to vector<8x32xf32>
    %163 = arith.subf %148, %162 : vector<8x32xf32>
    %cst_85 = arith.constant 9.99999974E-6 : f32
    %164 = vector.broadcast %cst_85 : f32 to vector<8x1xf32>
    %165 = arith.addf %161, %164 : vector<8x1xf32>
    %166 = math.rsqrt %165 : vector<8x1xf32>
    %167 = vector.broadcast %166 : vector<8x1xf32> to vector<8x32xf32>
    %168 = arith.mulf %163, %167 : vector<8x32xf32>
    %169 = vector.broadcast %149 : vector<1x32xf32> to vector<8x32xf32>
    %170 = arith.mulf %168, %169 : vector<8x32xf32>
    %171 = vector.broadcast %150 : vector<1x32xf32> to vector<8x32xf32>
    %172 = arith.addf %170, %171 : vector<8x32xf32>
    %173 = arith.truncf %172 : vector<8x32xf32> to vector<8x32xbf16>
    %c0_86 = arith.constant 0 : index
    %c0_87 = arith.constant 0 : index
    %c0_88 = arith.constant 0 : index
    %174 = vector.load %arg8[%c0_86, %c0_87, %c0_88] : memref<2x32x128xbf16, #tpu.memory_space<vmem>>, vector<1x32x128xbf16>
    %175 = vector.shape_cast %174 : vector<1x32x128xbf16> to vector<32x128xbf16>
    %cst_89 = arith.constant dense<0.000000e+00> : vector<8x128xf32>
    %176 = tpu.matmul %173, %175, %cst_89 {dimension_numbers = #tpu.dot_dimension_numbers<[1], [0], [0], [1], [0, 0, 1, 1], [], []>} : vector<8x32xbf16>, vector<32x128xbf16>, vector<8x128xf32> -> vector<8x128xf32>
    %c0_90 = arith.constant 0 : index
    %c0_91 = arith.constant 0 : index
    %c0_92 = arith.constant 0 : index
    %177 = vector.load %arg9[%c0_90, %c0_91, %c0_92] : memref<2x1x128xf32, #tpu.memory_space<vmem>>, vector<1x1x128xf32>
    %178 = vector.shape_cast %177 : vector<1x1x128xf32> to vector<1x128xf32>
    %179 = vector.broadcast %178 : vector<1x128xf32> to vector<8x128xf32>
    %180 = arith.addf %176, %179 : vector<8x128xf32>
    %cst_93 = arith.constant 0.000000e+00 : f32
    %181 = vector.broadcast %cst_93 : f32 to vector<8x128xf32>
    %182 = arith.maximumf %180, %181 : vector<8x128xf32>
    %183 = arith.truncf %182 : vector<8x128xf32> to vector<8x128xbf16>
    %c0_94 = arith.constant 0 : index
    %c0_95 = arith.constant 0 : index
    %c0_96 = arith.constant 0 : index
    %184 = vector.load %arg10[%c0_94, %c0_95, %c0_96] : memref<2x128x32xbf16, #tpu.memory_space<vmem>>, vector<1x128x32xbf16>
    %185 = vector.shape_cast %184 : vector<1x128x32xbf16> to vector<128x32xbf16>
    %cst_97 = arith.constant dense<0.000000e+00> : vector<8x32xf32>
    %186 = tpu.matmul %183, %185, %cst_97 {dimension_numbers = #tpu.dot_dimension_numbers<[1], [0], [0], [1], [0, 0, 1, 1], [], []>} : vector<8x128xbf16>, vector<128x32xbf16>, vector<8x32xf32> -> vector<8x32xf32>
    %187 = vector.extract_strided_slice %13 {offsets = [8, 0], sizes = [1, 32], strides = [1, 1]} : vector<9x32xf32> to vector<1x32xf32>
    %188 = vector.broadcast %187 : vector<1x32xf32> to vector<8x32xf32>
    %189 = arith.addf %186, %188 : vector<8x32xf32>
    %190 = arith.addf %172, %189 : vector<8x32xf32>
    %191 = vector.extract_strided_slice %13 {offsets = [2, 0], sizes = [1, 32], strides = [1, 1]} : vector<9x32xf32> to vector<1x32xf32>
    %192 = vector.extract_strided_slice %13 {offsets = [5, 0], sizes = [1, 32], strides = [1, 1]} : vector<9x32xf32> to vector<1x32xf32>
    %cst_98 = arith.constant dense<0.000000e+00> : vector<8xf32>
    %193 = vector.multi_reduction <add>, %190, %cst_98 [1] : vector<8x32xf32> to vector<8xf32>
    %194 = vector.shape_cast %193 : vector<8xf32> to vector<8x1xf32>
    %cst_99 = arith.constant 3.200000e+01 : f32
    %195 = vector.broadcast %cst_99 : f32 to vector<8x1xf32>
    %196 = arith.divf %194, %195 : vector<8x1xf32>
    %197 = vector.broadcast %196 : vector<8x1xf32> to vector<8x32xf32>
    %198 = arith.subf %190, %197 : vector<8x32xf32>
    %199 = arith.mulf %198, %198 : vector<8x32xf32>
    %cst_100 = arith.constant dense<0.000000e+00> : vector<8xf32>
    %200 = vector.multi_reduction <add>, %199, %cst_100 [1] : vector<8x32xf32> to vector<8xf32>
    %201 = vector.shape_cast %200 : vector<8xf32> to vector<8x1xf32>
    %cst_101 = arith.constant 3.200000e+01 : f32
    %202 = vector.broadcast %cst_101 : f32 to vector<8x1xf32>
    %203 = arith.divf %201, %202 : vector<8x1xf32>
    %204 = vector.broadcast %196 : vector<8x1xf32> to vector<8x32xf32>
    %205 = arith.subf %190, %204 : vector<8x32xf32>
    %cst_102 = arith.constant 9.99999974E-6 : f32
    %206 = vector.broadcast %cst_102 : f32 to vector<8x1xf32>
    %207 = arith.addf %203, %206 : vector<8x1xf32>
    %208 = math.rsqrt %207 : vector<8x1xf32>
    %209 = vector.broadcast %208 : vector<8x1xf32> to vector<8x32xf32>
    %210 = arith.mulf %205, %209 : vector<8x32xf32>
    %211 = vector.broadcast %191 : vector<1x32xf32> to vector<8x32xf32>
    %212 = arith.mulf %210, %211 : vector<8x32xf32>
    %213 = vector.broadcast %192 : vector<1x32xf32> to vector<8x32xf32>
    %214 = arith.addf %212, %213 : vector<8x32xf32>
    %c1_103 = arith.constant 1 : index
    %c0_104 = arith.constant 0 : index
    %c0_105 = arith.constant 0 : index
    %215 = vector.load %arg11[%c1_103, %c0_104, %c0_105] : memref<2x9x32xf32, #tpu.memory_space<vmem>>, vector<1x9x32xf32>
    %216 = vector.shape_cast %215 : vector<1x9x32xf32> to vector<9x32xf32>
    %217 = arith.truncf %214 : vector<8x32xf32> to vector<8x32xbf16>
    %218 = vector.shape_cast %217 : vector<8x32xbf16> to vector<1x8x32xbf16>
    %219 = vector.shape_cast %218 : vector<1x8x32xbf16> to vector<1x8x32xbf16>
    %220 = vector.broadcast %219 : vector<1x8x32xbf16> to vector<4x8x32xbf16>
    %c6 = arith.constant 6 : index
    %c0_106 = arith.constant 0 : index
    %c0_107 = arith.constant 0 : index
    %c0_108 = arith.constant 0 : index
    %221 = vector.load %arg5[%c6, %c0_106, %c0_107, %c0_108] : memref<12x4x32x8xbf16, #tpu.memory_space<vmem>>, vector<1x4x32x8xbf16>
    %222 = vector.shape_cast %221 : vector<1x4x32x8xbf16> to vector<4x32x8xbf16>
    %c6_109 = arith.constant 6 : index
    %c0_110 = arith.constant 0 : index
    %c0_111 = arith.constant 0 : index
    %223 = vector.load %arg6[%c6_109, %c0_110, %c0_111] : memref<12x4x8xf32, #tpu.memory_space<vmem>>, vector<1x4x8xf32>
    %224 = vector.shape_cast %223 : vector<1x4x8xf32> to vector<4x8xf32>
    %cst_112 = arith.constant dense<0.000000e+00> : vector<4x8x8xf32>
    %225 = tpu.matmul %220, %222, %cst_112 {dimension_numbers = #tpu.dot_dimension_numbers<[2], [1], [1], [2], [0, 0, 0, 1, 1, 2], [0], [0]>} : vector<4x8x32xbf16>, vector<4x32x8xbf16>, vector<4x8x8xf32> -> vector<4x8x8xf32>
    %226 = vector.shape_cast %224 : vector<4x8xf32> to vector<4x1x8xf32>
    %227 = vector.broadcast %226 : vector<4x1x8xf32> to vector<4x8x8xf32>
    %228 = arith.addf %225, %227 : vector<4x8x8xf32>
    %c7 = arith.constant 7 : index
    %c0_113 = arith.constant 0 : index
    %c0_114 = arith.constant 0 : index
    %c0_115 = arith.constant 0 : index
    %229 = vector.load %arg5[%c7, %c0_113, %c0_114, %c0_115] : memref<12x4x32x8xbf16, #tpu.memory_space<vmem>>, vector<1x4x32x8xbf16>
    %230 = vector.shape_cast %229 : vector<1x4x32x8xbf16> to vector<4x32x8xbf16>
    %c7_116 = arith.constant 7 : index
    %c0_117 = arith.constant 0 : index
    %c0_118 = arith.constant 0 : index
    %231 = vector.load %arg6[%c7_116, %c0_117, %c0_118] : memref<12x4x8xf32, #tpu.memory_space<vmem>>, vector<1x4x8xf32>
    %232 = vector.shape_cast %231 : vector<1x4x8xf32> to vector<4x8xf32>
    %cst_119 = arith.constant dense<0.000000e+00> : vector<4x8x8xf32>
    %233 = tpu.matmul %220, %230, %cst_119 {dimension_numbers = #tpu.dot_dimension_numbers<[2], [1], [1], [2], [0, 0, 0, 1, 1, 2], [0], [0]>} : vector<4x8x32xbf16>, vector<4x32x8xbf16>, vector<4x8x8xf32> -> vector<4x8x8xf32>
    %234 = vector.shape_cast %232 : vector<4x8xf32> to vector<4x1x8xf32>
    %235 = vector.broadcast %234 : vector<4x1x8xf32> to vector<4x8x8xf32>
    %236 = arith.addf %233, %235 : vector<4x8x8xf32>
    %c8 = arith.constant 8 : index
    %c0_120 = arith.constant 0 : index
    %c0_121 = arith.constant 0 : index
    %c0_122 = arith.constant 0 : index
    %237 = vector.load %arg5[%c8, %c0_120, %c0_121, %c0_122] : memref<12x4x32x8xbf16, #tpu.memory_space<vmem>>, vector<1x4x32x8xbf16>
    %238 = vector.shape_cast %237 : vector<1x4x32x8xbf16> to vector<4x32x8xbf16>
    %c8_123 = arith.constant 8 : index
    %c0_124 = arith.constant 0 : index
    %c0_125 = arith.constant 0 : index
    %239 = vector.load %arg6[%c8_123, %c0_124, %c0_125] : memref<12x4x8xf32, #tpu.memory_space<vmem>>, vector<1x4x8xf32>
    %240 = vector.shape_cast %239 : vector<1x4x8xf32> to vector<4x8xf32>
    %cst_126 = arith.constant dense<0.000000e+00> : vector<4x8x8xf32>
    %241 = tpu.matmul %220, %238, %cst_126 {dimension_numbers = #tpu.dot_dimension_numbers<[2], [1], [1], [2], [0, 0, 0, 1, 1, 2], [0], [0]>} : vector<4x8x32xbf16>, vector<4x32x8xbf16>, vector<4x8x8xf32> -> vector<4x8x8xf32>
    %242 = vector.shape_cast %240 : vector<4x8xf32> to vector<4x1x8xf32>
    %243 = vector.broadcast %242 : vector<4x1x8xf32> to vector<4x8x8xf32>
    %244 = arith.addf %241, %243 : vector<4x8x8xf32>
    %245 = arith.truncf %228 : vector<4x8x8xf32> to vector<4x8x8xbf16>
    %246 = arith.truncf %236 : vector<4x8x8xf32> to vector<4x8x8xbf16>
    %247 = arith.truncf %244 : vector<4x8x8xf32> to vector<4x8x8xbf16>
    %cst_127 = arith.constant dense<0.000000e+00> : vector<4x8x8xf32>
    %248 = tpu.matmul %245, %246, %cst_127 {dimension_numbers = #tpu.dot_dimension_numbers<[2], [2], [1], [1], [0, 0, 0, 1, 1, 1], [0], [0]>} : vector<4x8x8xbf16>, vector<4x8x8xbf16>, vector<4x8x8xf32> -> vector<4x8x8xf32>
    %cst_128 = arith.constant 0.353553385 : f32
    %249 = vector.broadcast %cst_128 : f32 to vector<4x8x8xf32>
    %250 = arith.mulf %248, %249 : vector<4x8x8xf32>
    %251 = vector.shape_cast %11 : vector<8x8xf32> to vector<1x8x8xf32>
    %252 = vector.broadcast %251 : vector<1x8x8xf32> to vector<4x8x8xf32>
    %253 = arith.addf %250, %252 : vector<4x8x8xf32>
    %cst_129 = arith.constant dense<0xFF800000> : vector<4x8xf32>
    %254 = vector.multi_reduction <maximumf>, %253, %cst_129 [2] : vector<4x8x8xf32> to vector<4x8xf32>
    %255 = vector.shape_cast %254 : vector<4x8xf32> to vector<4x8x1xf32>
    %256 = vector.broadcast %255 : vector<4x8x1xf32> to vector<4x8x8xf32>
    %257 = arith.subf %253, %256 : vector<4x8x8xf32>
    %258 = math.exp %257 : vector<4x8x8xf32>
    %cst_130 = arith.constant dense<0.000000e+00> : vector<4x8xf32>
    %259 = vector.multi_reduction <add>, %258, %cst_130 [2] : vector<4x8x8xf32> to vector<4x8xf32>
    %260 = vector.shape_cast %259 : vector<4x8xf32> to vector<4x8x1xf32>
    %261 = vector.broadcast %260 : vector<4x8x1xf32> to vector<4x8x8xf32>
    %262 = arith.divf %258, %261 : vector<4x8x8xf32>
    %263 = arith.truncf %262 : vector<4x8x8xf32> to vector<4x8x8xbf16>
    %cst_131 = arith.constant dense<0.000000e+00> : vector<4x8x8xf32>
    %264 = tpu.matmul %263, %247, %cst_131 {dimension_numbers = #tpu.dot_dimension_numbers<[2], [1], [1], [2], [0, 0, 0, 1, 1, 2], [0], [0]>} : vector<4x8x8xbf16>, vector<4x8x8xbf16>, vector<4x8x8xf32> -> vector<4x8x8xf32>
    %c2_132 = arith.constant 2 : index
    %c0_133 = arith.constant 0 : index
    %c0_134 = arith.constant 0 : index
    %c0_135 = arith.constant 0 : index
    %265 = vector.load %arg7[%c2_132, %c0_133, %c0_134, %c0_135] : memref<4x4x8x32xbf16, #tpu.memory_space<vmem>>, vector<1x4x8x32xbf16>
    %266 = vector.shape_cast %265 : vector<1x4x8x32xbf16> to vector<4x8x32xbf16>
    %267 = vector.extract_strided_slice %216 {offsets = [6, 0], sizes = [1, 32], strides = [1, 1]} : vector<9x32xf32> to vector<1x32xf32>
    %268 = arith.truncf %264 : vector<4x8x8xf32> to vector<4x8x8xbf16>
    %cst_136 = arith.constant dense<0.000000e+00> : vector<4x8x32xf32>
    %269 = tpu.matmul %268, %266, %cst_136 {dimension_numbers = #tpu.dot_dimension_numbers<[2], [1], [1], [2], [0, 0, 0, 1, 1, 2], [0], [0]>} : vector<4x8x8xbf16>, vector<4x8x32xbf16>, vector<4x8x32xf32> -> vector<4x8x32xf32>
    %cst_137 = arith.constant dense<0.000000e+00> : vector<8x32xf32>
    %270 = vector.multi_reduction <add>, %269, %cst_137 [0] : vector<4x8x32xf32> to vector<8x32xf32>
    %271 = vector.broadcast %267 : vector<1x32xf32> to vector<8x32xf32>
    %272 = arith.addf %270, %271 : vector<8x32xf32>
    %273 = arith.addf %214, %272 : vector<8x32xf32>
    %274 = vector.extract_strided_slice %216 {offsets = [0, 0], sizes = [1, 32], strides = [1, 1]} : vector<9x32xf32> to vector<1x32xf32>
    %275 = vector.extract_strided_slice %216 {offsets = [3, 0], sizes = [1, 32], strides = [1, 1]} : vector<9x32xf32> to vector<1x32xf32>
    %cst_138 = arith.constant dense<0.000000e+00> : vector<8xf32>
    %276 = vector.multi_reduction <add>, %273, %cst_138 [1] : vector<8x32xf32> to vector<8xf32>
    %277 = vector.shape_cast %276 : vector<8xf32> to vector<8x1xf32>
    %cst_139 = arith.constant 3.200000e+01 : f32
    %278 = vector.broadcast %cst_139 : f32 to vector<8x1xf32>
    %279 = arith.divf %277, %278 : vector<8x1xf32>
    %280 = vector.broadcast %279 : vector<8x1xf32> to vector<8x32xf32>
    %281 = arith.subf %273, %280 : vector<8x32xf32>
    %282 = arith.mulf %281, %281 : vector<8x32xf32>
    %cst_140 = arith.constant dense<0.000000e+00> : vector<8xf32>
    %283 = vector.multi_reduction <add>, %282, %cst_140 [1] : vector<8x32xf32> to vector<8xf32>
    %284 = vector.shape_cast %283 : vector<8xf32> to vector<8x1xf32>
    %cst_141 = arith.constant 3.200000e+01 : f32
    %285 = vector.broadcast %cst_141 : f32 to vector<8x1xf32>
    %286 = arith.divf %284, %285 : vector<8x1xf32>
    %287 = vector.broadcast %279 : vector<8x1xf32> to vector<8x32xf32>
    %288 = arith.subf %273, %287 : vector<8x32xf32>
    %cst_142 = arith.constant 9.99999974E-6 : f32
    %289 = vector.broadcast %cst_142 : f32 to vector<8x1xf32>
    %290 = arith.addf %286, %289 : vector<8x1xf32>
    %291 = math.rsqrt %290 : vector<8x1xf32>
    %292 = vector.broadcast %291 : vector<8x1xf32> to vector<8x32xf32>
    %293 = arith.mulf %288, %292 : vector<8x32xf32>
    %294 = vector.broadcast %274 : vector<1x32xf32> to vector<8x32xf32>
    %295 = arith.mulf %293, %294 : vector<8x32xf32>
    %296 = vector.broadcast %275 : vector<1x32xf32> to vector<8x32xf32>
    %297 = arith.addf %295, %296 : vector<8x32xf32>
    %298 = arith.truncf %297 : vector<8x32xf32> to vector<8x32xbf16>
    %299 = vector.shape_cast %298 : vector<8x32xbf16> to vector<1x8x32xbf16>
    %300 = vector.shape_cast %299 : vector<1x8x32xbf16> to vector<1x8x32xbf16>
    %301 = vector.broadcast %300 : vector<1x8x32xbf16> to vector<4x8x32xbf16>
    %c9 = arith.constant 9 : index
    %c0_143 = arith.constant 0 : index
    %c0_144 = arith.constant 0 : index
    %c0_145 = arith.constant 0 : index
    %302 = vector.load %arg5[%c9, %c0_143, %c0_144, %c0_145] : memref<12x4x32x8xbf16, #tpu.memory_space<vmem>>, vector<1x4x32x8xbf16>
    %303 = vector.shape_cast %302 : vector<1x4x32x8xbf16> to vector<4x32x8xbf16>
    %c9_146 = arith.constant 9 : index
    %c0_147 = arith.constant 0 : index
    %c0_148 = arith.constant 0 : index
    %304 = vector.load %arg6[%c9_146, %c0_147, %c0_148] : memref<12x4x8xf32, #tpu.memory_space<vmem>>, vector<1x4x8xf32>
    %305 = vector.shape_cast %304 : vector<1x4x8xf32> to vector<4x8xf32>
    %cst_149 = arith.constant dense<0.000000e+00> : vector<4x8x8xf32>
    %306 = tpu.matmul %301, %303, %cst_149 {dimension_numbers = #tpu.dot_dimension_numbers<[2], [1], [1], [2], [0, 0, 0, 1, 1, 2], [0], [0]>} : vector<4x8x32xbf16>, vector<4x32x8xbf16>, vector<4x8x8xf32> -> vector<4x8x8xf32>
    %307 = vector.shape_cast %305 : vector<4x8xf32> to vector<4x1x8xf32>
    %308 = vector.broadcast %307 : vector<4x1x8xf32> to vector<4x8x8xf32>
    %309 = arith.addf %306, %308 : vector<4x8x8xf32>
    %c10 = arith.constant 10 : index
    %c0_150 = arith.constant 0 : index
    %c0_151 = arith.constant 0 : index
    %c0_152 = arith.constant 0 : index
    %310 = vector.load %arg5[%c10, %c0_150, %c0_151, %c0_152] : memref<12x4x32x8xbf16, #tpu.memory_space<vmem>>, vector<1x4x32x8xbf16>
    %311 = vector.shape_cast %310 : vector<1x4x32x8xbf16> to vector<4x32x8xbf16>
    %c10_153 = arith.constant 10 : index
    %c0_154 = arith.constant 0 : index
    %c0_155 = arith.constant 0 : index
    %312 = vector.load %arg6[%c10_153, %c0_154, %c0_155] : memref<12x4x8xf32, #tpu.memory_space<vmem>>, vector<1x4x8xf32>
    %313 = vector.shape_cast %312 : vector<1x4x8xf32> to vector<4x8xf32>
    %cst_156 = arith.constant dense<0.000000e+00> : vector<4x8x8xf32>
    %314 = tpu.matmul %10, %311, %cst_156 {dimension_numbers = #tpu.dot_dimension_numbers<[2], [1], [1], [2], [0, 0, 0, 1, 1, 2], [0], [0]>} : vector<4x8x32xbf16>, vector<4x32x8xbf16>, vector<4x8x8xf32> -> vector<4x8x8xf32>
    %315 = vector.shape_cast %313 : vector<4x8xf32> to vector<4x1x8xf32>
    %316 = vector.broadcast %315 : vector<4x1x8xf32> to vector<4x8x8xf32>
    %317 = arith.addf %314, %316 : vector<4x8x8xf32>
    %c11 = arith.constant 11 : index
    %c0_157 = arith.constant 0 : index
    %c0_158 = arith.constant 0 : index
    %c0_159 = arith.constant 0 : index
    %318 = vector.load %arg5[%c11, %c0_157, %c0_158, %c0_159] : memref<12x4x32x8xbf16, #tpu.memory_space<vmem>>, vector<1x4x32x8xbf16>
    %319 = vector.shape_cast %318 : vector<1x4x32x8xbf16> to vector<4x32x8xbf16>
    %c11_160 = arith.constant 11 : index
    %c0_161 = arith.constant 0 : index
    %c0_162 = arith.constant 0 : index
    %320 = vector.load %arg6[%c11_160, %c0_161, %c0_162] : memref<12x4x8xf32, #tpu.memory_space<vmem>>, vector<1x4x8xf32>
    %321 = vector.shape_cast %320 : vector<1x4x8xf32> to vector<4x8xf32>
    %cst_163 = arith.constant dense<0.000000e+00> : vector<4x8x8xf32>
    %322 = tpu.matmul %10, %319, %cst_163 {dimension_numbers = #tpu.dot_dimension_numbers<[2], [1], [1], [2], [0, 0, 0, 1, 1, 2], [0], [0]>} : vector<4x8x32xbf16>, vector<4x32x8xbf16>, vector<4x8x8xf32> -> vector<4x8x8xf32>
    %323 = vector.shape_cast %321 : vector<4x8xf32> to vector<4x1x8xf32>
    %324 = vector.broadcast %323 : vector<4x1x8xf32> to vector<4x8x8xf32>
    %325 = arith.addf %322, %324 : vector<4x8x8xf32>
    %326 = arith.truncf %309 : vector<4x8x8xf32> to vector<4x8x8xbf16>
    %327 = arith.truncf %317 : vector<4x8x8xf32> to vector<4x8x8xbf16>
    %328 = arith.truncf %325 : vector<4x8x8xf32> to vector<4x8x8xbf16>
    %cst_164 = arith.constant dense<0.000000e+00> : vector<4x8x8xf32>
    %329 = tpu.matmul %326, %327, %cst_164 {dimension_numbers = #tpu.dot_dimension_numbers<[2], [2], [1], [1], [0, 0, 0, 1, 1, 1], [0], [0]>} : vector<4x8x8xbf16>, vector<4x8x8xbf16>, vector<4x8x8xf32> -> vector<4x8x8xf32>
    %cst_165 = arith.constant 0.353553385 : f32
    %330 = vector.broadcast %cst_165 : f32 to vector<4x8x8xf32>
    %331 = arith.mulf %329, %330 : vector<4x8x8xf32>
    %cst_166 = arith.constant dense<0xFF800000> : vector<4x8xf32>
    %332 = vector.multi_reduction <maximumf>, %331, %cst_166 [2] : vector<4x8x8xf32> to vector<4x8xf32>
    %333 = vector.shape_cast %332 : vector<4x8xf32> to vector<4x8x1xf32>
    %334 = vector.broadcast %333 : vector<4x8x1xf32> to vector<4x8x8xf32>
    %335 = arith.subf %331, %334 : vector<4x8x8xf32>
    %336 = math.exp %335 : vector<4x8x8xf32>
    %cst_167 = arith.constant dense<0.000000e+00> : vector<4x8xf32>
    %337 = vector.multi_reduction <add>, %336, %cst_167 [2] : vector<4x8x8xf32> to vector<4x8xf32>
    %338 = vector.shape_cast %337 : vector<4x8xf32> to vector<4x8x1xf32>
    %339 = vector.broadcast %338 : vector<4x8x1xf32> to vector<4x8x8xf32>
    %340 = arith.divf %336, %339 : vector<4x8x8xf32>
    %341 = arith.truncf %340 : vector<4x8x8xf32> to vector<4x8x8xbf16>
    %cst_168 = arith.constant dense<0.000000e+00> : vector<4x8x8xf32>
    %342 = tpu.matmul %341, %328, %cst_168 {dimension_numbers = #tpu.dot_dimension_numbers<[2], [1], [1], [2], [0, 0, 0, 1, 1, 2], [0], [0]>} : vector<4x8x8xbf16>, vector<4x8x8xbf16>, vector<4x8x8xf32> -> vector<4x8x8xf32>
    %c3_169 = arith.constant 3 : index
    %c0_170 = arith.constant 0 : index
    %c0_171 = arith.constant 0 : index
    %c0_172 = arith.constant 0 : index
    %343 = vector.load %arg7[%c3_169, %c0_170, %c0_171, %c0_172] : memref<4x4x8x32xbf16, #tpu.memory_space<vmem>>, vector<1x4x8x32xbf16>
    %344 = vector.shape_cast %343 : vector<1x4x8x32xbf16> to vector<4x8x32xbf16>
    %345 = vector.extract_strided_slice %216 {offsets = [7, 0], sizes = [1, 32], strides = [1, 1]} : vector<9x32xf32> to vector<1x32xf32>
    %346 = arith.truncf %342 : vector<4x8x8xf32> to vector<4x8x8xbf16>
    %cst_173 = arith.constant dense<0.000000e+00> : vector<4x8x32xf32>
    %347 = tpu.matmul %346, %344, %cst_173 {dimension_numbers = #tpu.dot_dimension_numbers<[2], [1], [1], [2], [0, 0, 0, 1, 1, 2], [0], [0]>} : vector<4x8x8xbf16>, vector<4x8x32xbf16>, vector<4x8x32xf32> -> vector<4x8x32xf32>
    %cst_174 = arith.constant dense<0.000000e+00> : vector<8x32xf32>
    %348 = vector.multi_reduction <add>, %347, %cst_174 [0] : vector<4x8x32xf32> to vector<8x32xf32>
    %349 = vector.broadcast %345 : vector<1x32xf32> to vector<8x32xf32>
    %350 = arith.addf %348, %349 : vector<8x32xf32>
    %351 = arith.addf %297, %350 : vector<8x32xf32>
    %352 = vector.extract_strided_slice %216 {offsets = [1, 0], sizes = [1, 32], strides = [1, 1]} : vector<9x32xf32> to vector<1x32xf32>
    %353 = vector.extract_strided_slice %216 {offsets = [4, 0], sizes = [1, 32], strides = [1, 1]} : vector<9x32xf32> to vector<1x32xf32>
    %cst_175 = arith.constant dense<0.000000e+00> : vector<8xf32>
    %354 = vector.multi_reduction <add>, %351, %cst_175 [1] : vector<8x32xf32> to vector<8xf32>
    %355 = vector.shape_cast %354 : vector<8xf32> to vector<8x1xf32>
    %cst_176 = arith.constant 3.200000e+01 : f32
    %356 = vector.broadcast %cst_176 : f32 to vector<8x1xf32>
    %357 = arith.divf %355, %356 : vector<8x1xf32>
    %358 = vector.broadcast %357 : vector<8x1xf32> to vector<8x32xf32>
    %359 = arith.subf %351, %358 : vector<8x32xf32>
    %360 = arith.mulf %359, %359 : vector<8x32xf32>
    %cst_177 = arith.constant dense<0.000000e+00> : vector<8xf32>
    %361 = vector.multi_reduction <add>, %360, %cst_177 [1] : vector<8x32xf32> to vector<8xf32>
    %362 = vector.shape_cast %361 : vector<8xf32> to vector<8x1xf32>
    %cst_178 = arith.constant 3.200000e+01 : f32
    %363 = vector.broadcast %cst_178 : f32 to vector<8x1xf32>
    %364 = arith.divf %362, %363 : vector<8x1xf32>
    %365 = vector.broadcast %357 : vector<8x1xf32> to vector<8x32xf32>
    %366 = arith.subf %351, %365 : vector<8x32xf32>
    %cst_179 = arith.constant 9.99999974E-6 : f32
    %367 = vector.broadcast %cst_179 : f32 to vector<8x1xf32>
    %368 = arith.addf %364, %367 : vector<8x1xf32>
    %369 = math.rsqrt %368 : vector<8x1xf32>
    %370 = vector.broadcast %369 : vector<8x1xf32> to vector<8x32xf32>
    %371 = arith.mulf %366, %370 : vector<8x32xf32>
    %372 = vector.broadcast %352 : vector<1x32xf32> to vector<8x32xf32>
    %373 = arith.mulf %371, %372 : vector<8x32xf32>
    %374 = vector.broadcast %353 : vector<1x32xf32> to vector<8x32xf32>
    %375 = arith.addf %373, %374 : vector<8x32xf32>
    %376 = arith.truncf %375 : vector<8x32xf32> to vector<8x32xbf16>
    %c1_180 = arith.constant 1 : index
    %c0_181 = arith.constant 0 : index
    %c0_182 = arith.constant 0 : index
    %377 = vector.load %arg8[%c1_180, %c0_181, %c0_182] : memref<2x32x128xbf16, #tpu.memory_space<vmem>>, vector<1x32x128xbf16>
    %378 = vector.shape_cast %377 : vector<1x32x128xbf16> to vector<32x128xbf16>
    %cst_183 = arith.constant dense<0.000000e+00> : vector<8x128xf32>
    %379 = tpu.matmul %376, %378, %cst_183 {dimension_numbers = #tpu.dot_dimension_numbers<[1], [0], [0], [1], [0, 0, 1, 1], [], []>} : vector<8x32xbf16>, vector<32x128xbf16>, vector<8x128xf32> -> vector<8x128xf32>
    %c1_184 = arith.constant 1 : index
    %c0_185 = arith.constant 0 : index
    %c0_186 = arith.constant 0 : index
    %380 = vector.load %arg9[%c1_184, %c0_185, %c0_186] : memref<2x1x128xf32, #tpu.memory_space<vmem>>, vector<1x1x128xf32>
    %381 = vector.shape_cast %380 : vector<1x1x128xf32> to vector<1x128xf32>
    %382 = vector.broadcast %381 : vector<1x128xf32> to vector<8x128xf32>
    %383 = arith.addf %379, %382 : vector<8x128xf32>
    %cst_187 = arith.constant 0.000000e+00 : f32
    %384 = vector.broadcast %cst_187 : f32 to vector<8x128xf32>
    %385 = arith.maximumf %383, %384 : vector<8x128xf32>
    %386 = arith.truncf %385 : vector<8x128xf32> to vector<8x128xbf16>
    %c1_188 = arith.constant 1 : index
    %c0_189 = arith.constant 0 : index
    %c0_190 = arith.constant 0 : index
    %387 = vector.load %arg10[%c1_188, %c0_189, %c0_190] : memref<2x128x32xbf16, #tpu.memory_space<vmem>>, vector<1x128x32xbf16>
    %388 = vector.shape_cast %387 : vector<1x128x32xbf16> to vector<128x32xbf16>
    %cst_191 = arith.constant dense<0.000000e+00> : vector<8x32xf32>
    %389 = tpu.matmul %386, %388, %cst_191 {dimension_numbers = #tpu.dot_dimension_numbers<[1], [0], [0], [1], [0, 0, 1, 1], [], []>} : vector<8x128xbf16>, vector<128x32xbf16>, vector<8x32xf32> -> vector<8x32xf32>
    %390 = vector.extract_strided_slice %216 {offsets = [8, 0], sizes = [1, 32], strides = [1, 1]} : vector<9x32xf32> to vector<1x32xf32>
    %391 = vector.broadcast %390 : vector<1x32xf32> to vector<8x32xf32>
    %392 = arith.addf %389, %391 : vector<8x32xf32>
    %393 = arith.addf %375, %392 : vector<8x32xf32>
    %394 = vector.extract_strided_slice %216 {offsets = [2, 0], sizes = [1, 32], strides = [1, 1]} : vector<9x32xf32> to vector<1x32xf32>
    %395 = vector.extract_strided_slice %216 {offsets = [5, 0], sizes = [1, 32], strides = [1, 1]} : vector<9x32xf32> to vector<1x32xf32>
    %cst_192 = arith.constant dense<0.000000e+00> : vector<8xf32>
    %396 = vector.multi_reduction <add>, %393, %cst_192 [1] : vector<8x32xf32> to vector<8xf32>
    %397 = vector.shape_cast %396 : vector<8xf32> to vector<8x1xf32>
    %cst_193 = arith.constant 3.200000e+01 : f32
    %398 = vector.broadcast %cst_193 : f32 to vector<8x1xf32>
    %399 = arith.divf %397, %398 : vector<8x1xf32>
    %400 = vector.broadcast %399 : vector<8x1xf32> to vector<8x32xf32>
    %401 = arith.subf %393, %400 : vector<8x32xf32>
    %402 = arith.mulf %401, %401 : vector<8x32xf32>
    %cst_194 = arith.constant dense<0.000000e+00> : vector<8xf32>
    %403 = vector.multi_reduction <add>, %402, %cst_194 [1] : vector<8x32xf32> to vector<8xf32>
    %404 = vector.shape_cast %403 : vector<8xf32> to vector<8x1xf32>
    %cst_195 = arith.constant 3.200000e+01 : f32
    %405 = vector.broadcast %cst_195 : f32 to vector<8x1xf32>
    %406 = arith.divf %404, %405 : vector<8x1xf32>
    %407 = vector.broadcast %399 : vector<8x1xf32> to vector<8x32xf32>
    %408 = arith.subf %393, %407 : vector<8x32xf32>
    %cst_196 = arith.constant 9.99999974E-6 : f32
    %409 = vector.broadcast %cst_196 : f32 to vector<8x1xf32>
    %410 = arith.addf %406, %409 : vector<8x1xf32>
    %411 = math.rsqrt %410 : vector<8x1xf32>
    %412 = vector.broadcast %411 : vector<8x1xf32> to vector<8x32xf32>
    %413 = arith.mulf %408, %412 : vector<8x32xf32>
    %414 = vector.broadcast %394 : vector<1x32xf32> to vector<8x32xf32>
    %415 = arith.mulf %413, %414 : vector<8x32xf32>
    %416 = vector.broadcast %395 : vector<1x32xf32> to vector<8x32xf32>
    %417 = arith.addf %415, %416 : vector<8x32xf32>
    %418 = vector.shape_cast %417 : vector<8x32xf32> to vector<1x8x32xf32>
    %c0_197 = arith.constant 0 : index
    %c0_198 = arith.constant 0 : index
    %c0_199 = arith.constant 0 : index
    %419 = vector.load %arg12[%c0_197, %c0_198, %c0_199] : memref<1x8x32xf32, #tpu.memory_space<vmem>>, vector<1x8x32xf32>
    tpu.vector_store %arg12[%c0_197, %c0_198, %c0_199], %418 {strides = array<i32>} : memref<1x8x32xf32, #tpu.memory_space<vmem>>, vector<1x8x32xf32>,
    return
  }
  func.func @transform_0(%arg0: i32) -> (i32, i32, i32) {
    %c0_i32 = arith.constant 0 : i32
    %c0_i32_0 = arith.constant 0 : i32
    %c0_i32_1 = arith.constant 0 : i32
    return %arg0, %c0_i32, %c0_i32_0 : i32, i32, i32
  }
  func.func @transform_1(%arg0: i32) -> (i32, i32, i32) {
    %c0_i32 = arith.constant 0 : i32
    %c0_i32_0 = arith.constant 0 : i32
    %c0_i32_1 = arith.constant 0 : i32
    return %arg0, %c0_i32, %c0_i32_0 : i32, i32, i32
  }
  func.func @transform_2(%arg0: i32) -> (i32, i32) {
    %c0_i32 = arith.constant 0 : i32
    %c0_i32_0 = arith.constant 0 : i32
    %c0_i32_1 = arith.constant 0 : i32
    return %c0_i32, %c0_i32_0 : i32, i32
  }
  func.func @transform_3(%arg0: i32) -> (i32, i32) {
    %c0_i32 = arith.constant 0 : i32
    %c0_i32_0 = arith.constant 0 : i32
    %c0_i32_1 = arith.constant 0 : i32
    return %c0_i32, %c0_i32_0 : i32, i32
  }
  func.func @transform_4(%arg0: i32) -> (i32, i32, i32, i32) {
    %c0_i32 = arith.constant 0 : i32
    %c0_i32_0 = arith.constant 0 : i32
    %c0_i32_1 = arith.constant 0 : i32
    %c0_i32_2 = arith.constant 0 : i32
    %c0_i32_3 = arith.constant 0 : i32
    return %c0_i32, %c0_i32_0, %c0_i32_1, %c0_i32_2 : i32, i32, i32, i32
  }
  func.func @transform_5(%arg0: i32) -> (i32, i32, i32) {
    %c0_i32 = arith.constant 0 : i32
    %c0_i32_0 = arith.constant 0 : i32
    %c0_i32_1 = arith.constant 0 : i32
    %c0_i32_2 = arith.constant 0 : i32
    return %c0_i32, %c0_i32_0, %c0_i32_1 : i32, i32, i32
  }
  func.func @transform_6(%arg0: i32) -> (i32, i32, i32, i32) {
    %c0_i32 = arith.constant 0 : i32
    %c0_i32_0 = arith.constant 0 : i32
    %c0_i32_1 = arith.constant 0 : i32
    %c0_i32_2 = arith.constant 0 : i32
    %c0_i32_3 = arith.constant 0 : i32
    return %c0_i32, %c0_i32_0, %c0_i32_1, %c0_i32_2 : i32, i32, i32, i32
  }
  func.func @transform_7(%arg0: i32) -> (i32, i32, i32) {
    %c0_i32 = arith.constant 0 : i32
    %c0_i32_0 = arith.constant 0 : i32
    %c0_i32_1 = arith.constant 0 : i32
    %c0_i32_2 = arith.constant 0 : i32
    return %c0_i32, %c0_i32_0, %c0_i32_1 : i32, i32, i32
  }
  func.func @transform_8(%arg0: i32) -> (i32, i32, i32) {
    %c0_i32 = arith.constant 0 : i32
    %c0_i32_0 = arith.constant 0 : i32
    %c0_i32_1 = arith.constant 0 : i32
    %c0_i32_2 = arith.constant 0 : i32
    return %c0_i32, %c0_i32_0, %c0_i32_1 : i32, i32, i32
  }
  func.func @transform_9(%arg0: i32) -> (i32, i32, i32) {
    %c0_i32 = arith.constant 0 : i32
    %c0_i32_0 = arith.constant 0 : i32
    %c0_i32_1 = arith.constant 0 : i32
    %c0_i32_2 = arith.constant 0 : i32
    return %c0_i32, %c0_i32_0, %c0_i32_1 : i32, i32, i32
  }
  func.func @transform_10(%arg0: i32) -> (i32, i32, i32) {
    %c0_i32 = arith.constant 0 : i32
    %c0_i32_0 = arith.constant 0 : i32
    %c0_i32_1 = arith.constant 0 : i32
    %c0_i32_2 = arith.constant 0 : i32
    return %c0_i32, %c0_i32_0, %c0_i32_1 : i32, i32, i32
  }
  func.func @transform_11(%arg0: i32) -> (i32, i32, i32) {
    %c0_i32 = arith.constant 0 : i32
    %c0_i32_0 = arith.constant 0 : i32
    %c0_i32_1 = arith.constant 0 : i32
    return %arg0, %c0_i32, %c0_i32_0 : i32, i32, i32
  }
}

</mosaic_0001>

<llo_original>
// kernel: _lambda_.1
$region0: #{_lambda_.1}
  #allocation0 [shape = 'u32[]', space=smem, size = 0x4, offset = 0x4, fixed_abs, tag = 'smem constant byte address 0x4 - core index']
  #allocation1 [shape = 'u32[72,128]{1,0:T(1,128)}', space=vmem, size = 0x9000, scoped, tag = 'internal scratch']
  %s0 = inlined_call_operand.vmem [shape: f32[2,8,32], index: 0, kind: input, shape index: {}]
  %s1 = inlined_call_operand.vmem [shape: f32[2,8,32], index: 1, kind: input, shape index: {}]
  %s2 = inlined_call_operand.vmem [shape: f32[8,32], index: 2, kind: input, shape index: {}]
  %s3 = inlined_call_operand.vmem [shape: f32[8,8], index: 3, kind: input, shape index: {}]
  %s4 = inlined_call_operand.vmem [shape: bf16[12,4,32,8], index: 4, kind: input, shape index: {}]
  %s5 = inlined_call_operand.vmem [shape: f32[12,4,8], index: 5, kind: input, shape index: {}]
  %s6 = inlined_call_operand.vmem [shape: bf16[4,4,8,32], index: 6, kind: input, shape index: {}]
  %s7 = inlined_call_operand.vmem [shape: bf16[2,32,128], index: 7, kind: input, shape index: {}]
  %s8 = inlined_call_operand.vmem [shape: f32[2,1,128], index: 8, kind: input, shape index: {}]
  %s9 = inlined_call_operand.vmem [shape: bf16[2,128,32], index: 9, kind: input, shape index: {}]
  %s10 = inlined_call_operand.vmem [shape: f32[2,9,32], index: 10, kind: input, shape index: {}]
  %s11 = inlined_call_operand.hbm [shape: f32[2,8,32], index: 11, kind: output, shape index: {}]
  %s12 = sld [smem:[#allocation0]]
  $region77: #{_lambda_.1} parent=0
    _
  %s14 = ssub.s32 1, %s12
  %s15 = scalar_select 0, %s14, %s12
  $region1: #{_lambda_.1} parent=0
    #allocation2 [shape = 'u8[8192]{0}', space=vmem, size = 0x2000, scoped, tag = 'output window, operand 0']
    #allocation3 [shape = 's32[2]{0}', space=sflag, size = 0x8, scoped, tag = 'scoped memory for _lambda_.1']
    %16 = vsyncpa [#allocation3], 0
    %s17 = scalar_lea.sflag [#allocation3], 1
    %18 = vsyncpa %s17, 0
    loop: start=0, step=1, limit=4
    $region2: #{_lambda_.1} parent=1 // loop_pre_header
      _
    $region3: #{_lambda_.1} parent=1 // loop_header
      %s20 = sphi 0, %s24
      %p21 = scmp.ge.s32.totalorder %s20, 4
      %s30 = sphi 0, %s32
      %s33 = sphi 0, %s30
      %s34 = sphi 0, %s33
      %s50 = sphi 0, %s34
      %s56 = sphi 0, %s58
      %s59 = sphi 0, %s56
      %s60 = sphi 0, %s59
      %s76 = sphi 0, %s60
      %s80 = sphi 0, %s80
      %s82 = sphi 0, %s80
      %s83 = sphi 0, %s82
      %s97 = sphi 0, %s83
      %s101 = sphi 0, %s101
      %s103 = sphi 0, %s101
      %s104 = sphi 0, %s103
      %s118 = sphi 0, %s104
      %s122 = sphi 0, %s122
      %s124 = sphi 0, %s122
      %s125 = sphi 0, %s124
      %s139 = sphi 0, %s125
      %s143 = sphi 0, %s143
      %s145 = sphi 0, %s143
      %s146 = sphi 0, %s145
      %s160 = sphi 0, %s146
      %s164 = sphi 0, %s164
      %s166 = sphi 0, %s164
      %s167 = sphi 0, %s166
      %s181 = sphi 0, %s167
      %s185 = sphi 0, %s185
      %s187 = sphi 0, %s185
      %s188 = sphi 0, %s187
      %s202 = sphi 0, %s188
      %s206 = sphi 0, %s206
      %s208 = sphi 0, %s206
      %s209 = sphi 0, %s208
      %s223 = sphi 0, %s209
      %s227 = sphi 0, %s227
      %s229 = sphi 0, %s227
      %s230 = sphi 0, %s229
      %s244 = sphi 0, %s230
      %s248 = sphi 0, %s248
      %s250 = sphi 0, %s248
      %s251 = sphi 0, %s250
      %s265 = sphi 0, %s251
      %s271 = sphi 0, %s273
      %s274 = sphi 0, %s271
      %s275 = sphi 0, %s274
      %s291 = sphi 0, %s275
    $region4: #{_lambda_.1} parent=1 // loop_header_branch
      %23 = sbr.rel (%p21) target = $region8
    $region5: #{_lambda_.1} parent=1 // loop_body
      %s25 = ssub.s32 %s20, 1
      %s26 = ssub.s32 %s20, 2
      %s27 = sadd.s32 %s20, 1
      %s28 = ssub.s32 %s20, %s27
      %p29 = scmp.eq.s32.totalorder %s28, 0
      %s31 = sadd.s32 %s30, 1
      %s32 = scalar_select %p29, %s30, %s31
      %p35 = pneg %p29
      %p36 = scmp.eq.s32.totalorder %s20, 1
      %p37 = por %p35, %p36
      %p38 = scmp.ne.s32.totalorder %s30, %s33
      %p39 = scmp.eq.s32.totalorder %s20, 0
      %p40 = por %p38, %p39
      %p41 = scmp.ne.s32.totalorder %s30, %s33
      %p42 = scmp.eq.s32.totalorder %s25, 1
      %p43 = por %p41, %p42
      %p44 = scmp.ne.s32.totalorder %s33, %s34
      %p45 = scmp.eq.s32.totalorder %s25, 0
      %p46 = por %p44, %p45
      %p47 = scmp.ne.s32.totalorder %s33, %s34
      %p48 = scmp.eq.s32.totalorder %s26, 1
      %p49 = por %p47, %p48
      %p51 = scmp.ne.s32.totalorder %s34, %s50
      %p52 = scmp.eq.s32.totalorder %s26, 0
      %p53 = por %p51, %p52
      %s54 = ssub.s32 %s20, %s27
      %p55 = scmp.eq.s32.totalorder %s54, 0
      %s57 = sadd.s32 %s56, 1
      %s58 = scalar_select %p55, %s56, %s57
      %p61 = pneg %p55
      %p62 = scmp.eq.s32.totalorder %s20, 1
      %p63 = por %p61, %p62
      %p64 = scmp.ne.s32.totalorder %s56, %s59
      %p65 = scmp.eq.s32.totalorder %s20, 0
      %p66 = por %p64, %p65
      %p67 = scmp.ne.s32.totalorder %s56, %s59
      %p68 = scmp.eq.s32.totalorder %s25, 1
      %p69 = por %p67, %p68
      %p70 = scmp.ne.s32.totalorder %s59, %s60
      %p71 = scmp.eq.s32.totalorder %s25, 0
      %p72 = por %p70, %p71
      %p73 = scmp.ne.s32.totalorder %s59, %s60
      %p74 = scmp.eq.s32.totalorder %s26, 1
      %p75 = por %p73, %p74
      %p77 = scmp.ne.s32.totalorder %s60, %s76
      %p78 = scmp.eq.s32.totalorder %s26, 0
      %p79 = por %p77, %p78
      %s81 = sadd.s32 %s80, 1
      %p84 = scmp.eq.s32.totalorder %s20, 1
      %p85 = scmp.ne.s32.totalorder %s80, %s82
      %p86 = scmp.eq.s32.totalorder %s20, 0
      %p87 = por %p85, %p86
      %p88 = scmp.ne.s32.totalorder %s80, %s82
      %p89 = scmp.eq.s32.totalorder %s25, 1
      %p90 = por %p88, %p89
      %p91 = scmp.ne.s32.totalorder %s82, %s83
      %p92 = scmp.eq.s32.totalorder %s25, 0
      %p93 = por %p91, %p92
      %p94 = scmp.ne.s32.totalorder %s82, %s83
      %p95 = scmp.eq.s32.totalorder %s26, 1
      %p96 = por %p94, %p95
      %p98 = scmp.ne.s32.totalorder %s83, %s97
      %p99 = scmp.eq.s32.totalorder %s26, 0
      %p100 = por %p98, %p99
      %s102 = sadd.s32 %s101, 1
      %p105 = scmp.eq.s32.totalorder %s20, 1
      %p106 = scmp.ne.s32.totalorder %s101, %s103
      %p107 = scmp.eq.s32.totalorder %s20, 0
      %p108 = por %p106, %p107
      %p109 = scmp.ne.s32.totalorder %s101, %s103
      %p110 = scmp.eq.s32.totalorder %s25, 1
      %p111 = por %p109, %p110
      %p112 = scmp.ne.s32.totalorder %s103, %s104
      %p113 = scmp.eq.s32.totalorder %s25, 0
      %p114 = por %p112, %p113
      %p115 = scmp.ne.s32.totalorder %s103, %s104
      %p116 = scmp.eq.s32.totalorder %s26, 1
      %p117 = por %p115, %p116
      %p119 = scmp.ne.s32.totalorder %s104, %s118
      %p120 = scmp.eq.s32.totalorder %s26, 0
      %p121 = por %p119, %p120
      %s123 = sadd.s32 %s122, 1
      %p126 = scmp.eq.s32.totalorder %s20, 1
      %p127 = scmp.ne.s32.totalorder %s122, %s124
      %p128 = scmp.eq.s32.totalorder %s20, 0
      %p129 = por %p127, %p128
      %p130 = scmp.ne.s32.totalorder %s122, %s124
      %p131 = scmp.eq.s32.totalorder %s25, 1
      %p132 = por %p130, %p131
      %p133 = scmp.ne.s32.totalorder %s124, %s125
      %p134 = scmp.eq.s32.totalorder %s25, 0
      %p135 = por %p133, %p134
      %p136 = scmp.ne.s32.totalorder %s124, %s125
      %p137 = scmp.eq.s32.totalorder %s26, 1
      %p138 = por %p136, %p137
      %p140 = scmp.ne.s32.totalorder %s125, %s139
      %p141 = scmp.eq.s32.totalorder %s26, 0
      %p142 = por %p140, %p141
      %s144 = sadd.s32 %s143, 1
      %p147 = scmp.eq.s32.totalorder %s20, 1
      %p148 = scmp.ne.s32.totalorder %s143, %s145
      %p149 = scmp.eq.s32.totalorder %s20, 0
      %p150 = por %p148, %p149
      %p151 = scmp.ne.s32.totalorder %s143, %s145
      %p152 = scmp.eq.s32.totalorder %s25, 1
      %p153 = por %p151, %p152
      %p154 = scmp.ne.s32.totalorder %s145, %s146
      %p155 = scmp.eq.s32.totalorder %s25, 0
      %p156 = por %p154, %p155
      %p157 = scmp.ne.s32.totalorder %s145, %s146
      %p158 = scmp.eq.s32.totalorder %s26, 1
      %p159 = por %p157, %p158
      %p161 = scmp.ne.s32.totalorder %s146, %s160
      %p162 = scmp.eq.s32.totalorder %s26, 0
      %p163 = por %p161, %p162
      %s165 = sadd.s32 %s164, 1
      %p168 = scmp.eq.s32.totalorder %s20, 1
      %p169 = scmp.ne.s32.totalorder %s164, %s166
      %p170 = scmp.eq.s32.totalorder %s20, 0
      %p171 = por %p169, %p170
      %p172 = scmp.ne.s32.totalorder %s164, %s166
      %p173 = scmp.eq.s32.totalorder %s25, 1
      %p174 = por %p172, %p173
      %p175 = scmp.ne.s32.totalorder %s166, %s167
      %p176 = scmp.eq.s32.totalorder %s25, 0
      %p177 = por %p175, %p176
      %p178 = scmp.ne.s32.totalorder %s166, %s167
      %p179 = scmp.eq.s32.totalorder %s26, 1
      %p180 = por %p178, %p179
      %p182 = scmp.ne.s32.totalorder %s167, %s181
      %p183 = scmp.eq.s32.totalorder %s26, 0
      %p184 = por %p182, %p183
      %s186 = sadd.s32 %s185, 1
      %p189 = scmp.eq.s32.totalorder %s20, 1
      %p190 = scmp.ne.s32.totalorder %s185, %s187
      %p191 = scmp.eq.s32.totalorder %s20, 0
      %p192 = por %p190, %p191
      %p193 = scmp.ne.s32.totalorder %s185, %s187
      %p194 = scmp.eq.s32.totalorder %s25, 1
      %p195 = por %p193, %p194
      %p196 = scmp.ne.s32.totalorder %s187, %s188
      %p197 = scmp.eq.s32.totalorder %s25, 0
      %p198 = por %p196, %p197
      %p199 = scmp.ne.s32.totalorder %s187, %s188
      %p200 = scmp.eq.s32.totalorder %s26, 1
      %p201 = por %p199, %p200
      %p203 = scmp.ne.s32.totalorder %s188, %s202
      %p204 = scmp.eq.s32.totalorder %s26, 0
      %p205 = por %p203, %p204
      %s207 = sadd.s32 %s206, 1
      %p210 = scmp.eq.s32.totalorder %s20, 1
      %p211 = scmp.ne.s32.totalorder %s206, %s208
      %p212 = scmp.eq.s32.totalorder %s20, 0
      %p213 = por %p211, %p212
      %p214 = scmp.ne.s32.totalorder %s206, %s208
      %p215 = scmp.eq.s32.totalorder %s25, 1
      %p216 = por %p214, %p215
      %p217 = scmp.ne.s32.totalorder %s208, %s209
      %p218 = scmp.eq.s32.totalorder %s25, 0
      %p219 = por %p217, %p218
      %p220 = scmp.ne.s32.totalorder %s208, %s209
      %p221 = scmp.eq.s32.totalorder %s26, 1
      %p222 = por %p220, %p221
      %p224 = scmp.ne.s32.totalorder %s209, %s223
      %p225 = scmp.eq.s32.totalorder %s26, 0
      %p226 = por %p224, %p225
      %s228 = sadd.s32 %s227, 1
      %p231 = scmp.eq.s32.totalorder %s20, 1
      %p232 = scmp.ne.s32.totalorder %s227, %s229
      %p233 = scmp.eq.s32.totalorder %s20, 0
      %p234 = por %p232, %p233
      %p235 = scmp.ne.s32.totalorder %s227, %s229
      %p236 = scmp.eq.s32.totalorder %s25, 1
      %p237 = por %p235, %p236
      %p238 = scmp.ne.s32.totalorder %s229, %s230
      %p239 = scmp.eq.s32.totalorder %s25, 0
      %p240 = por %p238, %p239
      %p241 = scmp.ne.s32.totalorder %s229, %s230
      %p242 = scmp.eq.s32.totalorder %s26, 1
      %p243 = por %p241, %p242
      %p245 = scmp.ne.s32.totalorder %s230, %s244
      %p246 = scmp.eq.s32.totalorder %s26, 0
      %p247 = por %p245, %p246
      %s249 = sadd.s32 %s248, 1
      %p252 = scmp.eq.s32.totalorder %s20, 1
      %p253 = scmp.ne.s32.totalorder %s248, %s250
      %p254 = scmp.eq.s32.totalorder %s20, 0
      %p255 = por %p253, %p254
      %p256 = scmp.ne.s32.totalorder %s248, %s250
      %p257 = scmp.eq.s32.totalorder %s25, 1
      %p258 = por %p256, %p257
      %p259 = scmp.ne.s32.totalorder %s250, %s251
      %p260 = scmp.eq.s32.totalorder %s25, 0
      %p261 = por %p259, %p260
      %p262 = scmp.ne.s32.totalorder %s250, %s251
      %p263 = scmp.eq.s32.totalorder %s26, 1
      %p264 = por %p262, %p263
      %p266 = scmp.ne.s32.totalorder %s251, %s265
      %p267 = scmp.eq.s32.totalorder %s26, 0
      %p268 = por %p266, %p267
      %s269 = ssub.s32 %s20, %s27
      %p270 = scmp.eq.s32.totalorder %s269, 0
      %s272 = sadd.s32 %s271, 1
      %s273 = scalar_select %p270, %s271, %s272
      %p276 = pneg %p270
      %p277 = scmp.eq.s32.totalorder %s20, 1
      %p278 = por %p276, %p277
      %p279 = scmp.ne.s32.totalorder %s271, %s274
      %p280 = scmp.eq.s32.totalorder %s20, 0
      %p281 = por %p279, %p280
      %p282 = scmp.ne.s32.totalorder %s271, %s274
      %p283 = scmp.eq.s32.totalorder %s25, 1
      %p284 = por %p282, %p283
      %p285 = scmp.ne.s32.totalorder %s274, %s275
      %p286 = scmp.eq.s32.totalorder %s25, 0
      %p287 = por %p285, %p286
      %p288 = scmp.ne.s32.totalorder %s274, %s275
      %p289 = scmp.eq.s32.totalorder %s26, 1
      %p290 = por %p288, %p289
      %p292 = scmp.ne.s32.totalorder %s275, %s291
      %p293 = scmp.eq.s32.totalorder %s26, 0
      %p294 = por %p292, %p293
      %p295 = scmp.le.s32.totalorder 1, %s20
      %p296 = scmp.lt.s32.totalorder %s20, 3
      %p297 = pnand %p295, %p296
      %p298 = pneg %p297
      // Predicated region
      $region9: #{_lambda_.1} parent=5 // pred_check
        _
      $region10: #{_lambda_.1} parent=5 // pred_check_branch
        %300 = sbr.rel (%p297) target = $region12
      $region11: #{_lambda_.1} parent=5 // pred_region
        %s301 = ssub.s32 %s20, 1
        // Predicated region
        $region13: #{_lambda_.1} parent=11 // pred_check
          %p302 = pneg %p93
        $region14: #{_lambda_.1} parent=11 // pred_check_branch
          %304 = sbr.rel (%p302) target = $region16
        $region15: #{_lambda_.1} parent=11 // pred_region
          _
        $region16: #{_lambda_.1} parent=11 // pred_fallthru
          _
        // Predicated region
        $region17: #{_lambda_.1} parent=11 // pred_check
          %p305 = pneg %p114
        $region18: #{_lambda_.1} parent=11 // pred_check_branch
          %307 = sbr.rel (%p305) target = $region20
        $region19: #{_lambda_.1} parent=11 // pred_region
          _
        $region20: #{_lambda_.1} parent=11 // pred_fallthru
          _
        // Predicated region
        $region21: #{_lambda_.1} parent=11 // pred_check
          %p308 = pneg %p135
        $region22: #{_lambda_.1} parent=11 // pred_check_branch
          %310 = sbr.rel (%p308) target = $region24
        $region23: #{_lambda_.1} parent=11 // pred_region
          _
        $region24: #{_lambda_.1} parent=11 // pred_fallthru
          _
        // Predicated region
        $region25: #{_lambda_.1} parent=11 // pred_check
          %p311 = pneg %p156
        $region26: #{_lambda_.1} parent=11 // pred_check_branch
          %313 = sbr.rel (%p311) target = $region28
        $region27: #{_lambda_.1} parent=11 // pred_region
          _
        $region28: #{_lambda_.1} parent=11 // pred_fallthru
          _
        // Predicated region
        $region29: #{_lambda_.1} parent=11 // pred_check
          %p314 = pneg %p177
        $region30: #{_lambda_.1} parent=11 // pred_check_branch
          %316 = sbr.rel (%p314) target = $region32
        $region31: #{_lambda_.1} parent=11 // pred_region
          _
        $region32: #{_lambda_.1} parent=11 // pred_fallthru
          _
        // Predicated region
        $region33: #{_lambda_.1} parent=11 // pred_check
          %p317 = pneg %p198
        $region34: #{_lambda_.1} parent=11 // pred_check_branch
          %319 = sbr.rel (%p317) target = $region36
        $region35: #{_lambda_.1} parent=11 // pred_region
          _
        $region36: #{_lambda_.1} parent=11 // pred_fallthru
          _
        // Predicated region
        $region37: #{_lambda_.1} parent=11 // pred_check
          %p320 = pneg %p219
        $region38: #{_lambda_.1} parent=11 // pred_check_branch
          %322 = sbr.rel (%p320) target = $region40
        $region39: #{_lambda_.1} parent=11 // pred_region
          _
        $region40: #{_lambda_.1} parent=11 // pred_fallthru
          _
        // Predicated region
        $region41: #{_lambda_.1} parent=11 // pred_check
          %p323 = pneg %p240
        $region42: #{_lambda_.1} parent=11 // pred_check_branch
          %325 = sbr.rel (%p323) target = $region44
        $region43: #{_lambda_.1} parent=11 // pred_region
          _
        $region44: #{_lambda_.1} parent=11 // pred_fallthru
          _
        // Predicated region
        $region45: #{_lambda_.1} parent=11 // pred_check
          %p326 = pneg %p261
        $region46: #{_lambda_.1} parent=11 // pred_check_branch
          %328 = sbr.rel (%p326) target = $region48
        $region47: #{_lambda_.1} parent=11 // pred_region
          _
        $region48: #{_lambda_.1} parent=11 // pred_fallthru
          _
      $region12: #{_lambda_.1} parent=5 // pred_fallthru
        _
      %p329 = scmp.lt.s32.totalorder %s20, 2
      // Predicated region
      $region49: #{_lambda_.1} parent=5 // pred_check
        %p330 = pneg %p329
      $region50: #{_lambda_.1} parent=5 // pred_check_branch
        %332 = sbr.rel (%p330) target = $region52
      $region51: #{_lambda_.1} parent=5 // pred_region
        // Predicated region
        $region53: #{_lambda_.1} parent=51 // pred_check
          %p333 = pneg %p40
        $region54: #{_lambda_.1} parent=51 // pred_check_branch
          %335 = sbr.rel (%p333) target = $region56
        $region55: #{_lambda_.1} parent=51 // pred_region
          %p336 = scmp.lt.s32.totalorder %s20, 1
          %s337 = scalar_select %p336, %s20, 1
          %s338 = smul.addr %s337, 8
          %s339 = scalar_lea.vmem %s0, %s338
        $region56: #{_lambda_.1} parent=51 // pred_fallthru
          _
        // Predicated region
        $region57: #{_lambda_.1} parent=51 // pred_check
          %p340 = pneg %p66
        $region58: #{_lambda_.1} parent=51 // pred_check_branch
          %342 = sbr.rel (%p340) target = $region60
        $region59: #{_lambda_.1} parent=51 // pred_region
          %p343 = scmp.lt.s32.totalorder %s20, 1
          %s344 = scalar_select %p343, %s20, 1
          %s345 = smul.addr %s344, 8
          %s346 = scalar_lea.vmem %s1, %s345
        $region60: #{_lambda_.1} parent=51 // pred_fallthru
          _
      $region52: #{_lambda_.1} parent=5 // pred_fallthru
        _
      %p347 = scmp.le.s32.totalorder 1, %s20
      %p348 = scmp.lt.s32.totalorder %s20, 3
      %p349 = pnand %p347, %p348
      %p350 = pneg %p349
      // Predicated region
      $region61: #{_lambda_.1} parent=5 // pred_check
        _
      $region62: #{_lambda_.1} parent=5 // pred_check_branch
        %352 = sbr.rel (%p349) target = $region64
      $region63: #{_lambda_.1} parent=5 // pred_region
        %s353 = ssub.s32 %s20, 1
        %p354 = scmp.lt.s32.totalorder %s25, 1
        %s355 = scalar_select %p354, %s25, 1
        %s356 = smul.addr %s355, 8
        %s357 = scalar_lea.vmem %s0, %s356
        %p358 = pneg %p46
        %p359 = pneg %p43
        %p360 = scmp.lt.s32.totalorder %s25, 1
        %s361 = scalar_select %p360, %s25, 1
        %s362 = smul.addr %s361, 8
        %s363 = scalar_lea.vmem %s1, %s362
        %p364 = pneg %p72
        %p365 = pneg %p69
        %p366 = pneg %p93
        %p367 = pneg %p90
        %p368 = pneg %p114
        %p369 = pneg %p111
        %p370 = pneg %p135
        %p371 = pneg %p132
        %p372 = pneg %p156
        %p373 = pneg %p153
        %p374 = pneg %p177
        %p375 = pneg %p174
        %p376 = pneg %p198
        %p377 = pneg %p195
        %p378 = pneg %p219
        %p379 = pneg %p216
        %p380 = pneg %p240
        %p381 = pneg %p237
        %p382 = pneg %p261
        %p383 = pneg %p258
        %p384 = pneg %p287
        %p385 = pneg %p284
        %s386 = sand.u32 %s274, 1
        %s387 = scalar_lea.sflag [#allocation3], %s386
        %s388 = sand.u32 %s274, 1
        %s389 = smul.addr %s388, 8
        %s390 = scalar_lea.vmem [#allocation2], %s389
        %p391 = scmp.lt.s32.totalorder %s25, 1
        %s392 = scalar_select %p391, %s25, 1
        %s393 = smul.addr %s392, 8
        %s394 = scalar_lea.vmem %s0, %s393
        %p395 = scmp.lt.s32.totalorder %s25, 1
        %s396 = scalar_select %p395, %s25, 1
        %s397 = smul.addr %s396, 8
        %s398 = scalar_lea.vmem %s1, %s397
        %v400 = vld [vmem:[%s394] sm:$0xff]
        %v401 = vld [vmem:[%s2] sm:$0xff]
        %v402 = vadd.f32 %v400, %v401
        %v403 = vld [vmem:[%s398] sm:$0xff]
        %v404 = vpack.c.bf16 %v403, %v403
        %v405 = vld [vmem:[%s3] sm:$0xff]
        %v406 = vld [vmem:[%s10] sm:$0xff]
        %v407 = vld [vmem:[%s10 + $0x8] sm:$0x1]
        %v408 = vpack.c.bf16 %v402, %v402
        %v409 = vld [vmem:[%s4] sm:$0xf]
        %v410 = vld [vmem:[%s4 + $0x4] sm:$0xf]
        %v411 = vld [vmem:[%s4 + $0x8] sm:$0xf]
        %v412 = vld [vmem:[%s4 + $0xc] sm:$0xf]
        %v413 = vld [vmem:[%s4 + $0x10] sm:$0xf]
        %v414 = vld [vmem:[%s4 + $0x14] sm:$0xf]
        %v415 = vld [vmem:[%s4 + $0x18] sm:$0xf]
        %v416 = vld [vmem:[%s4 + $0x1c] sm:$0xf]
        %v417 = vld [vmem:[%s4 + $0x20] sm:$0xf]
        %v418 = vld [vmem:[%s4 + $0x24] sm:$0xf]
        %v419 = vld [vmem:[%s4 + $0x28] sm:$0xf]
        %v420 = vld [vmem:[%s4 + $0x2c] sm:$0xf]
        %v421 = vld [vmem:[%s4 + $0x30] sm:$0xf]
        %v422 = vld [vmem:[%s4 + $0x34] sm:$0xf]
        %v423 = vld [vmem:[%s4 + $0x38] sm:$0xf]
        %v424 = vld [vmem:[%s4 + $0x3c] sm:$0xf]
        %v425 = vld [vmem:[%s5] sm:$0xf]
        %v427 = vrot.slane %v425, 1
        %v428 = vrot.slane %v425, 2
        %v429 = vrot.slane %v425, 3
        %v430 = vperm.slane %v425, 0
        %v431 = vperm.slane %v427, 0
        %v432 = vperm.slane %v428, 0
        %v433 = vperm.slane %v429, 0
        %v442 = vunpack.c.l.b16 %v409
        %v443 = vunpack.c.l.b16 %v410
        %v444 = vunpack.c.l.b16 %v411
        %v445 = vunpack.c.l.b16 %v412
        %v446 = vpack.c.b16 %v443, %v442
        %v447 = vpack.c.b16 %v445, %v444
        %vm450 = vcmask 261120
        %v452 = vsel %vm450, %v408, 0
        %454 = vmatpush.bf16.msra.mxu0 0
        %455 = vmatpush.bf16.msra.mxu0 0
        %456 = vmatpush.bf16.msra.mxu0 0
        %457 = vmatpush.bf16.msra.mxu0 0
        %458 = vmatpush.bf16.msra.mxu0 0
        %459 = vmatpush.bf16.msra.mxu0 0
        %460 = vmatpush.bf16.msra.mxu0 %v447
        %461 = vmatpush.bf16.msra.mxu0 %v446
        %462 = vmatmul.bf16.gmra.mxu0 %v452
        %v463 = vpop.f32.mrf.mxu0
        %v464 = vadd.f32 %v430, %v463
        %v465 = vpop.f32.mrf.mxu0
        %466 = vdwg.mxu0
        %v471 = vunpack.c.l.b16 %v413
        %v472 = vunpack.c.l.b16 %v414
        %v473 = vunpack.c.l.b16 %v415
        %v474 = vunpack.c.l.b16 %v416
        %v475 = vpack.c.b16 %v472, %v471
        %v476 = vpack.c.b16 %v474, %v473
        %479 = vmatpush.bf16.msra.mxu0 0
        %480 = vmatpush.bf16.msra.mxu0 0
        %481 = vmatpush.bf16.msra.mxu0 0
        %482 = vmatpush.bf16.msra.mxu0 0
        %483 = vmatpush.bf16.msra.mxu0 0
        %484 = vmatpush.bf16.msra.mxu0 0
        %485 = vmatpush.bf16.msra.mxu0 %v476
        %486 = vmatpush.bf16.msra.mxu0 %v475
        %487 = vmatmul.bf16.gmra.mxu0 %v452
        %v488 = vpop.f32.mrf.mxu0
        %v489 = vadd.f32 %v431, %v488
        %v490 = vpop.f32.mrf.mxu0
        %491 = vdwg.mxu0
        %v496 = vunpack.c.l.b16 %v417
        %v497 = vunpack.c.l.b16 %v418
        %v498 = vunpack.c.l.b16 %v419
        %v499 = vunpack.c.l.b16 %v420
        %v500 = vpack.c.b16 %v497, %v496
        %v501 = vpack.c.b16 %v499, %v498
        %504 = vmatpush.bf16.msra.mxu0 0
        %505 = vmatpush.bf16.msra.mxu0 0
        %506 = vmatpush.bf16.msra.mxu0 0
        %507 = vmatpush.bf16.msra.mxu0 0
        %508 = vmatpush.bf16.msra.mxu0 0
        %509 = vmatpush.bf16.msra.mxu0 0
        %510 = vmatpush.bf16.msra.mxu0 %v501
        %511 = vmatpush.bf16.msra.mxu0 %v500
        %512 = vmatmul.bf16.gmra.mxu0 %v452
        %v513 = vpop.f32.mrf.mxu0
        %v514 = vadd.f32 %v432, %v513
        %v515 = vpop.f32.mrf.mxu0
        %516 = vdwg.mxu0
        %v521 = vunpack.c.l.b16 %v421
        %v522 = vunpack.c.l.b16 %v422
        %v523 = vunpack.c.l.b16 %v423
        %v524 = vunpack.c.l.b16 %v424
        %v525 = vpack.c.b16 %v522, %v521
        %v526 = vpack.c.b16 %v524, %v523
        %529 = vmatpush.bf16.msra.mxu0 0
        %530 = vmatpush.bf16.msra.mxu0 0
        %531 = vmatpush.bf16.msra.mxu0 0
        %532 = vmatpush.bf16.msra.mxu0 0
        %533 = vmatpush.bf16.msra.mxu0 0
        %534 = vmatpush.bf16.msra.mxu0 0
        %535 = vmatpush.bf16.msra.mxu0 %v526
        %536 = vmatpush.bf16.msra.mxu0 %v525
        %537 = vmatmul.bf16.gmra.mxu0 %v452
        %v538 = vpop.f32.mrf.mxu0
        %v539 = vadd.f32 %v433, %v538
        %v540 = vpop.f32.mrf.mxu0
        %541 = vdwg.mxu0
        %s542 = scalar_lea.vmem %s4, 64
        %v543 = vld [vmem:[%s542] sm:$0xf]
        %v544 = vld [vmem:[%s542 + $0x4] sm:$0xf]
        %v545 = vld [vmem:[%s542 + $0x8] sm:$0xf]
        %v546 = vld [vmem:[%s542 + $0xc] sm:$0xf]
        %v547 = vld [vmem:[%s542 + $0x10] sm:$0xf]
        %v548 = vld [vmem:[%s542 + $0x14] sm:$0xf]
        %v549 = vld [vmem:[%s542 + $0x18] sm:$0xf]
        %v550 = vld [vmem:[%s542 + $0x1c] sm:$0xf]
        %v551 = vld [vmem:[%s542 + $0x20] sm:$0xf]
        %v552 = vld [vmem:[%s542 + $0x24] sm:$0xf]
        %v553 = vld [vmem:[%s542 + $0x28] sm:$0xf]
        %v554 = vld [vmem:[%s542 + $0x2c] sm:$0xf]
        %v555 = vld [vmem:[%s542 + $0x30] sm:$0xf]
        %v556 = vld [vmem:[%s542 + $0x34] sm:$0xf]
        %v557 = vld [vmem:[%s542 + $0x38] sm:$0xf]
        %v558 = vld [vmem:[%s542 + $0x3c] sm:$0xf]
        %s559 = scalar_lea.vmem %s5, 4
        %v560 = vld [vmem:[%s559] sm:$0xf]
        %v562 = vrot.slane %v560, 1
        %v563 = vrot.slane %v560, 2
        %v564 = vrot.slane %v560, 3
        %v565 = vperm.slane %v560, 0
        %v566 = vperm.slane %v562, 0
        %v567 = vperm.slane %v563, 0
        %v568 = vperm.slane %v564, 0
        %v577 = vunpack.c.l.b16 %v543
        %v578 = vunpack.c.l.b16 %v544
        %v579 = vunpack.c.l.b16 %v545
        %v580 = vunpack.c.l.b16 %v546
        %v581 = vpack.c.b16 %v578, %v577
        %v582 = vpack.c.b16 %v580, %v579
        %585 = vmatpush.bf16.msra.mxu0 0
        %586 = vmatpush.bf16.msra.mxu0 0
        %587 = vmatpush.bf16.msra.mxu0 0
        %588 = vmatpush.bf16.msra.mxu0 0
        %589 = vmatpush.bf16.msra.mxu0 0
        %590 = vmatpush.bf16.msra.mxu0 0
        %591 = vmatpush.bf16.msra.mxu0 %v582
        %592 = vmatpush.bf16.msra.mxu0 %v581
        %593 = vmatmul.bf16.gmra.mxu0 %v452
        %v594 = vpop.f32.mrf.mxu0
        %v595 = vadd.f32 %v565, %v594
        %v596 = vpop.f32.mrf.mxu0
        %597 = vdwg.mxu0
        %v602 = vunpack.c.l.b16 %v547
        %v603 = vunpack.c.l.b16 %v548
        %v604 = vunpack.c.l.b16 %v549
        %v605 = vunpack.c.l.b16 %v550
        %v606 = vpack.c.b16 %v603, %v602
        %v607 = vpack.c.b16 %v605, %v604
        %610 = vmatpush.bf16.msra.mxu0 0
        %611 = vmatpush.bf16.msra.mxu0 0
        %612 = vmatpush.bf16.msra.mxu0 0
        %613 = vmatpush.bf16.msra.mxu0 0
        %614 = vmatpush.bf16.msra.mxu0 0
        %615 = vmatpush.bf16.msra.mxu0 0
        %616 = vmatpush.bf16.msra.mxu0 %v607
        %617 = vmatpush.bf16.msra.mxu0 %v606
        %618 = vmatmul.bf16.gmra.mxu0 %v452
        %v619 = vpop.f32.mrf.mxu0
        %v620 = vadd.f32 %v566, %v619
        %v621 = vpop.f32.mrf.mxu0
        %622 = vdwg.mxu0
        %v627 = vunpack.c.l.b16 %v551
        %v628 = vunpack.c.l.b16 %v552
        %v629 = vunpack.c.l.b16 %v553
        %v630 = vunpack.c.l.b16 %v554
        %v631 = vpack.c.b16 %v628, %v627
        %v632 = vpack.c.b16 %v630, %v629
        %635 = vmatpush.bf16.msra.mxu0 0
        %636 = vmatpush.bf16.msra.mxu0 0
        %637 = vmatpush.bf16.msra.mxu0 0
        %638 = vmatpush.bf16.msra.mxu0 0
        %639 = vmatpush.bf16.msra.mxu0 0
        %640 = vmatpush.bf16.msra.mxu0 0
        %641 = vmatpush.bf16.msra.mxu0 %v632
        %642 = vmatpush.bf16.msra.mxu0 %v631
        %643 = vmatmul.bf16.gmra.mxu0 %v452
        %v644 = vpop.f32.mrf.mxu0
        %v645 = vadd.f32 %v567, %v644
        %v646 = vpop.f32.mrf.mxu0
        %647 = vdwg.mxu0
        %v652 = vunpack.c.l.b16 %v555
        %v653 = vunpack.c.l.b16 %v556
        %v654 = vunpack.c.l.b16 %v557
        %v655 = vunpack.c.l.b16 %v558
        %v656 = vpack.c.b16 %v653, %v652
        %v657 = vpack.c.b16 %v655, %v654
        %660 = vmatpush.bf16.msra.mxu0 0
        %661 = vmatpush.bf16.msra.mxu0 0
        %662 = vmatpush.bf16.msra.mxu0 0
        %663 = vmatpush.bf16.msra.mxu0 0
        %664 = vmatpush.bf16.msra.mxu0 0
        %665 = vmatpush.bf16.msra.mxu0 0
        %666 = vmatpush.bf16.msra.mxu0 %v657
        %667 = vmatpush.bf16.msra.mxu0 %v656
        %668 = vmatmul.bf16.gmra.mxu0 %v452
        %v669 = vpop.f32.mrf.mxu0
        %v670 = vadd.f32 %v568, %v669
        %v671 = vpop.f32.mrf.mxu0
        %672 = vdwg.mxu0
        %s673 = scalar_lea.vmem %s4, 128
        %v674 = vld [vmem:[%s673] sm:$0xf]
        %v675 = vld [vmem:[%s673 + $0x4] sm:$0xf]
        %v676 = vld [vmem:[%s673 + $0x8] sm:$0xf]
        %v677 = vld [vmem:[%s673 + $0xc] sm:$0xf]
        %v678 = vld [vmem:[%s673 + $0x10] sm:$0xf]
        %v679 = vld [vmem:[%s673 + $0x14] sm:$0xf]
        %v680 = vld [vmem:[%s673 + $0x18] sm:$0xf]
        %v681 = vld [vmem:[%s673 + $0x1c] sm:$0xf]
        %v682 = vld [vmem:[%s673 + $0x20] sm:$0xf]
        %v683 = vld [vmem:[%s673 + $0x24] sm:$0xf]
        %v684 = vld [vmem:[%s673 + $0x28] sm:$0xf]
        %v685 = vld [vmem:[%s673 + $0x2c] sm:$0xf]
        %v686 = vld [vmem:[%s673 + $0x30] sm:$0xf]
        %v687 = vld [vmem:[%s673 + $0x34] sm:$0xf]
        %v688 = vld [vmem:[%s673 + $0x38] sm:$0xf]
        %v689 = vld [vmem:[%s673 + $0x3c] sm:$0xf]
        %s690 = scalar_lea.vmem %s5, 8
        %v691 = vld [vmem:[%s690] sm:$0xf]
        %v693 = vrot.slane %v691, 1
        %v694 = vrot.slane %v691, 2
        %v695 = vrot.slane %v691, 3
        %v696 = vperm.slane %v691, 0
        %v697 = vperm.slane %v693, 0
        %v698 = vperm.slane %v694, 0
        %v699 = vperm.slane %v695, 0
        %v708 = vunpack.c.l.b16 %v674
        %v709 = vunpack.c.l.b16 %v675
        %v710 = vunpack.c.l.b16 %v676
        %v711 = vunpack.c.l.b16 %v677
        %v712 = vpack.c.b16 %v709, %v708
        %v713 = vpack.c.b16 %v711, %v710
        %716 = vmatpush.bf16.msra.mxu0 0
        %717 = vmatpush.bf16.msra.mxu0 0
        %718 = vmatpush.bf16.msra.mxu0 0
        %719 = vmatpush.bf16.msra.mxu0 0
        %720 = vmatpush.bf16.msra.mxu0 0
        %721 = vmatpush.bf16.msra.mxu0 0
        %722 = vmatpush.bf16.msra.mxu0 %v713
        %723 = vmatpush.bf16.msra.mxu0 %v712
        %724 = vmatmul.bf16.gmra.mxu0 %v452
        %v725 = vpop.f32.mrf.mxu0
        %v726 = vadd.f32 %v696, %v725
        %v727 = vpop.f32.mrf.mxu0
        %728 = vdwg.mxu0
        %v733 = vunpack.c.l.b16 %v678
        %v734 = vunpack.c.l.b16 %v679
        %v735 = vunpack.c.l.b16 %v680
        %v736 = vunpack.c.l.b16 %v681
        %v737 = vpack.c.b16 %v734, %v733
        %v738 = vpack.c.b16 %v736, %v735
        %741 = vmatpush.bf16.msra.mxu0 0
        %742 = vmatpush.bf16.msra.mxu0 0
        %743 = vmatpush.bf16.msra.mxu0 0
        %744 = vmatpush.bf16.msra.mxu0 0
        %745 = vmatpush.bf16.msra.mxu0 0
        %746 = vmatpush.bf16.msra.mxu0 0
        %747 = vmatpush.bf16.msra.mxu0 %v738
        %748 = vmatpush.bf16.msra.mxu0 %v737
        %749 = vmatmul.bf16.gmra.mxu0 %v452
        %v750 = vpop.f32.mrf.mxu0
        %v751 = vadd.f32 %v697, %v750
        %v752 = vpop.f32.mrf.mxu0
        %753 = vdwg.mxu0
        %v758 = vunpack.c.l.b16 %v682
        %v759 = vunpack.c.l.b16 %v683
        %v760 = vunpack.c.l.b16 %v684
        %v761 = vunpack.c.l.b16 %v685
        %v762 = vpack.c.b16 %v759, %v758
        %v763 = vpack.c.b16 %v761, %v760
        %766 = vmatpush.bf16.msra.mxu0 0
        %767 = vmatpush.bf16.msra.mxu0 0
        %768 = vmatpush.bf16.msra.mxu0 0
        %769 = vmatpush.bf16.msra.mxu0 0
        %770 = vmatpush.bf16.msra.mxu0 0
        %771 = vmatpush.bf16.msra.mxu0 0
        %772 = vmatpush.bf16.msra.mxu0 %v763
        %773 = vmatpush.bf16.msra.mxu0 %v762
        %774 = vmatmul.bf16.gmra.mxu0 %v452
        %v775 = vpop.f32.mrf.mxu0
        %v776 = vadd.f32 %v698, %v775
        %v777 = vpop.f32.mrf.mxu0
        %778 = vdwg.mxu0
        %v783 = vunpack.c.l.b16 %v686
        %v784 = vunpack.c.l.b16 %v687
        %v785 = vunpack.c.l.b16 %v688
        %v786 = vunpack.c.l.b16 %v689
        %v787 = vpack.c.b16 %v784, %v783
        %v788 = vpack.c.b16 %v786, %v785
        %791 = vmatpush.bf16.msra.mxu0 0
        %792 = vmatpush.bf16.msra.mxu0 0
        %793 = vmatpush.bf16.msra.mxu0 0
        %794 = vmatpush.bf16.msra.mxu0 0
        %795 = vmatpush.bf16.msra.mxu0 0
        %796 = vmatpush.bf16.msra.mxu0 0
        %797 = vmatpush.bf16.msra.mxu0 %v788
        %798 = vmatpush.bf16.msra.mxu0 %v787
        %799 = vmatmul.bf16.gmra.mxu0 %v452
        %v800 = vpop.f32.mrf.mxu0
        %v801 = vadd.f32 %v699, %v800
        %v802 = vpop.f32.mrf.mxu0
        %803 = vdwg.mxu0
        %v804 = vpack.c.bf16 %v464, %v464
        %v805 = vpack.c.bf16 %v489, %v489
        %v806 = vpack.c.bf16 %v514, %v514
        %v807 = vpack.c.bf16 %v539, %v539
        %v808 = vpack.c.bf16 %v595, %v595
        %v809 = vpack.c.bf16 %v620, %v620
        %v810 = vpack.c.bf16 %v645, %v645
        %v811 = vpack.c.bf16 %v670, %v670
        %v812 = vpack.c.bf16 %v726, %v726
        %v813 = vpack.c.bf16 %v751, %v751
        %v814 = vpack.c.bf16 %v776, %v776
        %v815 = vpack.c.bf16 %v801, %v801
        %vm816 = vcmask 64512
        %v818 = vsel %vm816, %v804, 0
        %v821 = vsel %vm816, %v808, 0
        %823 = vmatpush.bf16.xpose.msra.mxu0 0
        %824 = vmatpush.bf16.xpose.msra.mxu0 0
        %825 = vmatpush.bf16.xpose.msra.mxu0 0
        %826 = vmatpush.bf16.xpose.msra.mxu0 0
        %827 = vmatpush.bf16.xpose.msra.mxu0 0
        %828 = vmatpush.bf16.xpose.msra.mxu0 0
        %829 = vmatpush.bf16.xpose.msra.mxu0 0
        %830 = vmatpush.bf16.xpose.msra.mxu0 %v821
        %831 = vmatmul.bf16.gmra.mxu0 %v818
        %v832 = vpop.f32.mrf.mxu0
        %v833 = vadd.f32 0.0, %v832
        %v834 = vpop.f32.mrf.mxu0
        %835 = vdwg.mxu0
        %v837 = vsel %vm816, %v805, 0
        %v840 = vsel %vm816, %v809, 0
        %842 = vmatpush.bf16.xpose.msra.mxu0 0
        %843 = vmatpush.bf16.xpose.msra.mxu0 0
        %844 = vmatpush.bf16.xpose.msra.mxu0 0
        %845 = vmatpush.bf16.xpose.msra.mxu0 0
        %846 = vmatpush.bf16.xpose.msra.mxu0 0
        %847 = vmatpush.bf16.xpose.msra.mxu0 0
        %848 = vmatpush.bf16.xpose.msra.mxu0 0
        %849 = vmatpush.bf16.xpose.msra.mxu0 %v840
        %850 = vmatmul.bf16.gmra.mxu0 %v837
        %v851 = vpop.f32.mrf.mxu0
        %v852 = vadd.f32 0.0, %v851
        %v853 = vpop.f32.mrf.mxu0
        %854 = vdwg.mxu0
        %v856 = vsel %vm816, %v806, 0
        %v859 = vsel %vm816, %v810, 0
        %861 = vmatpush.bf16.xpose.msra.mxu0 0
        %862 = vmatpush.bf16.xpose.msra.mxu0 0
        %863 = vmatpush.bf16.xpose.msra.mxu0 0
        %864 = vmatpush.bf16.xpose.msra.mxu0 0
        %865 = vmatpush.bf16.xpose.msra.mxu0 0
        %866 = vmatpush.bf16.xpose.msra.mxu0 0
        %867 = vmatpush.bf16.xpose.msra.mxu0 0
        %868 = vmatpush.bf16.xpose.msra.mxu0 %v859
        %869 = vmatmul.bf16.gmra.mxu0 %v856
        %v870 = vpop.f32.mrf.mxu0
        %v871 = vadd.f32 0.0, %v870
        %v872 = vpop.f32.mrf.mxu0
        %873 = vdwg.mxu0
        %v875 = vsel %vm816, %v807, 0
        %v878 = vsel %vm816, %v811, 0
        %880 = vmatpush.bf16.xpose.msra.mxu0 0
        %881 = vmatpush.bf16.xpose.msra.mxu0 0
        %882 = vmatpush.bf16.xpose.msra.mxu0 0
        %883 = vmatpush.bf16.xpose.msra.mxu0 0
        %884 = vmatpush.bf16.xpose.msra.mxu0 0
        %885 = vmatpush.bf16.xpose.msra.mxu0 0
        %886 = vmatpush.bf16.xpose.msra.mxu0 0
        %887 = vmatpush.bf16.xpose.msra.mxu0 %v878
        %888 = vmatmul.bf16.gmra.mxu0 %v875
        %v889 = vpop.f32.mrf.mxu0
        %v890 = vadd.f32 0.0, %v889
        %v891 = vpop.f32.mrf.mxu0
        %892 = vdwg.mxu0
        %v893 = vmul.f32 %v833, 0.35355338
        %v894 = vmul.f32 %v852, 0.35355338
        %v895 = vmul.f32 %v871, 0.35355338
        %v896 = vmul.f32 %v890, 0.35355338
        %v897 = vadd.f32 %v893, %v405
        %v898 = vadd.f32 %v894, %v405
        %v899 = vadd.f32 %v895, %v405
        %v900 = vadd.f32 %v896, %v405
        %v901 = vsel %vm816, %v897, -inf
        %902 = vmax.xlane.f32.xlu0 %v901
        %v903 = vpop.xlane.xlu0 %902
        %v904 = vsel %vm816, %v898, -inf
        %905 = vmax.xlane.f32.xlu0 %v904
        %v906 = vpop.xlane.xlu0 %905
        %v907 = vsel %vm816, %v899, -inf
        %908 = vmax.xlane.f32.xlu0 %v907
        %v909 = vpop.xlane.xlu0 %908
        %v910 = vsel %vm816, %v900, -inf
        %911 = vmax.xlane.f32.xlu0 %v910
        %v912 = vpop.xlane.xlu0 %911
        %v913 = vsub.f32 %v897, %v903
        %v914 = vsub.f32 %v898, %v906
        %v915 = vsub.f32 %v899, %v909
        %v916 = vsub.f32 %v900, %v912
        %v917 = vmul.f32 %v913, 1.442695
        %v918 = vpow.pop %v917
        %v919 = vmul.f32 %v914, 1.442695
        %v920 = vpow.pop %v919
        %v921 = vmul.f32 %v915, 1.442695
        %v922 = vpow.pop %v921
        %v923 = vmul.f32 %v916, 1.442695
        %v924 = vpow.pop %v923
        %v925 = vsel %vm816, %v918, 0.0
        %926 = vadd.xlane.f32.xlu0 %v925
        %v927 = vpop.xlane.xlu0 %926
        %v928 = vsel %vm816, %v920, 0.0
        %929 = vadd.xlane.f32.xlu0 %v928
        %v930 = vpop.xlane.xlu0 %929
        %v931 = vsel %vm816, %v922, 0.0
        %932 = vadd.xlane.f32.xlu0 %v931
        %v933 = vpop.xlane.xlu0 %932
        %v934 = vsel %vm816, %v924, 0.0
        %935 = vadd.xlane.f32.xlu0 %v934
        %v936 = vpop.xlane.xlu0 %935
        %v937 = vrcp.pop %v927
        %v938 = vmul.f32 %v927, %v937
        %v939 = vsub.f32 1.0, %v938
        %v940 = vmul.f32 %v937, %v939
        %v941 = vadd.f32 %v937, %v940
        %vm942 = vweird.f32 %v927
        %vm943 = vweird.f32 %v937
        %vm944 = vmor %vm942, %vm943
        %v945 = vsel %vm944, %v937, %v941
        %v946 = vand.u32 2147483647, %v927
        %vm947 = vcmp.eq.f32.partialorder %v946, 8.507059e+37
        %v948 = vand.u32 %v927, 2147483648
        %v949 = vor.u32 1.1754944e-38, %v948
        %v950 = vsel %vm947, %v949, %v945
        %v951 = vmul.f32 %v918, %v950
        %v952 = vrcp.pop %v930
        %v953 = vmul.f32 %v930, %v952
        %v954 = vsub.f32 1.0, %v953
        %v955 = vmul.f32 %v952, %v954
        %v956 = vadd.f32 %v952, %v955
        %vm957 = vweird.f32 %v930
        %vm958 = vweird.f32 %v952
        %vm959 = vmor %vm957, %vm958
        %v960 = vsel %vm959, %v952, %v956
        %v961 = vand.u32 2147483647, %v930
        %vm962 = vcmp.eq.f32.partialorder %v961, 8.507059e+37
        %v963 = vand.u32 %v930, 2147483648
        %v964 = vor.u32 1.1754944e-38, %v963
        %v965 = vsel %vm962, %v964, %v960
        %v966 = vmul.f32 %v920, %v965
        %v967 = vrcp.pop %v933
        %v968 = vmul.f32 %v933, %v967
        %v969 = vsub.f32 1.0, %v968
        %v970 = vmul.f32 %v967, %v969
        %v971 = vadd.f32 %v967, %v970
        %vm972 = vweird.f32 %v933
        %vm973 = vweird.f32 %v967
        %vm974 = vmor %vm972, %vm973
        %v975 = vsel %vm974, %v967, %v971
        %v976 = vand.u32 2147483647, %v933
        %vm977 = vcmp.eq.f32.partialorder %v976, 8.507059e+37
        %v978 = vand.u32 %v933, 2147483648
        %v979 = vor.u32 1.1754944e-38, %v978
        %v980 = vsel %vm977, %v979, %v975
        %v981 = vmul.f32 %v922, %v980
        %v982 = vrcp.pop %v936
        %v983 = vmul.f32 %v936, %v982
        %v984 = vsub.f32 1.0, %v983
        %v985 = vmul.f32 %v982, %v984
        %v986 = vadd.f32 %v982, %v985
        %vm987 = vweird.f32 %v936
        %vm988 = vweird.f32 %v982
        %vm989 = vmor %vm987, %vm988
        %v990 = vsel %vm989, %v982, %v986
        %v991 = vand.u32 2147483647, %v936
        %vm992 = vcmp.eq.f32.partialorder %v991, 8.507059e+37
        %v993 = vand.u32 %v936, 2147483648
        %v994 = vor.u32 1.1754944e-38, %v993
        %v995 = vsel %vm992, %v994, %v990
        %v996 = vmul.f32 %v924, %v995
        %v997 = vpack.c.bf16 %v951, %v951
        %v998 = vpack.c.bf16 %v966, %v966
        %v999 = vpack.c.bf16 %v981, %v981
        %v1000 = vpack.c.bf16 %v996, %v996
        %v1002 = vsel %vm816, %v997, 0
        %vm1004 = vcmask 1043456
        %v1006 = vsel %vm1004, %v812, 0
        %1008 = vmatpush.bf16.msra.mxu0 0
        %1009 = vmatpush.bf16.msra.mxu0 0
        %1010 = vmatpush.bf16.msra.mxu0 0
        %1011 = vmatpush.bf16.msra.mxu0 0
        %1012 = vmatpush.bf16.msra.mxu0 0
        %1013 = vmatpush.bf16.msra.mxu0 0
        %1014 = vmatpush.bf16.msra.mxu0 0
        %1015 = vmatpush.bf16.msra.mxu0 %v1006
        %1016 = vmatmul.bf16.gmra.mxu0 %v1002
        %v1017 = vpop.f32.mrf.mxu0
        %v1018 = vadd.f32 0.0, %v1017
        %v1019 = vpop.f32.mrf.mxu0
        %1020 = vdwg.mxu0
        %v1022 = vsel %vm816, %v998, 0
        %v1025 = vsel %vm1004, %v813, 0
        %1027 = vmatpush.bf16.msra.mxu0 0
        %1028 = vmatpush.bf16.msra.mxu0 0
        %1029 = vmatpush.bf16.msra.mxu0 0
        %1030 = vmatpush.bf16.msra.mxu0 0
        %1031 = vmatpush.bf16.msra.mxu0 0
        %1032 = vmatpush.bf16.msra.mxu0 0
        %1033 = vmatpush.bf16.msra.mxu0 0
        %1034 = vmatpush.bf16.msra.mxu0 %v1025
        %1035 = vmatmul.bf16.gmra.mxu0 %v1022
        %v1036 = vpop.f32.mrf.mxu0
        %v1037 = vadd.f32 0.0, %v1036
        %v1038 = vpop.f32.mrf.mxu0
        %1039 = vdwg.mxu0
        %v1041 = vsel %vm816, %v999, 0
        %v1044 = vsel %vm1004, %v814, 0
        %1046 = vmatpush.bf16.msra.mxu0 0
        %1047 = vmatpush.bf16.msra.mxu0 0
        %1048 = vmatpush.bf16.msra.mxu0 0
        %1049 = vmatpush.bf16.msra.mxu0 0
        %1050 = vmatpush.bf16.msra.mxu0 0
        %1051 = vmatpush.bf16.msra.mxu0 0
        %1052 = vmatpush.bf16.msra.mxu0 0
        %1053 = vmatpush.bf16.msra.mxu0 %v1044
        %1054 = vmatmul.bf16.gmra.mxu0 %v1041
        %v1055 = vpop.f32.mrf.mxu0
        %v1056 = vadd.f32 0.0, %v1055
        %v1057 = vpop.f32.mrf.mxu0
        %1058 = vdwg.mxu0
        %v1060 = vsel %vm816, %v1000, 0
        %v1063 = vsel %vm1004, %v815, 0
        %1065 = vmatpush.bf16.msra.mxu0 0
        %1066 = vmatpush.bf16.msra.mxu0 0
        %1067 = vmatpush.bf16.msra.mxu0 0
        %1068 = vmatpush.bf16.msra.mxu0 0
        %1069 = vmatpush.bf16.msra.mxu0 0
        %1070 = vmatpush.bf16.msra.mxu0 0
        %1071 = vmatpush.bf16.msra.mxu0 0
        %1072 = vmatpush.bf16.msra.mxu0 %v1063
        %1073 = vmatmul.bf16.gmra.mxu0 %v1060
        %v1074 = vpop.f32.mrf.mxu0
        %v1075 = vadd.f32 0.0, %v1074
        %v1076 = vpop.f32.mrf.mxu0
        %1077 = vdwg.mxu0
        %v1078 = vld [vmem:[%s6] sm:$0xf]
        %v1079 = vld [vmem:[%s6 + $0x4] sm:$0xf]
        %v1080 = vld [vmem:[%s6 + $0x8] sm:$0xf]
        %v1081 = vld [vmem:[%s6 + $0xc] sm:$0xf]
        %v1082 = vpack.c.bf16 %v1018, %v1018
        %v1083 = vpack.c.bf16 %v1037, %v1037
        %v1084 = vpack.c.bf16 %v1056, %v1056
        %v1085 = vpack.c.bf16 %v1075, %v1075
        %v1087 = vsel %vm816, %v1082, 0
        %v1090 = vsel %vm1004, %v1078, 0
        %1092 = vmatpush.bf16.msra.mxu0 0
        %1093 = vmatpush.bf16.msra.mxu0 0
        %1094 = vmatpush.bf16.msra.mxu0 0
        %1095 = vmatpush.bf16.msra.mxu0 0
        %1096 = vmatpush.bf16.msra.mxu0 0
        %1097 = vmatpush.bf16.msra.mxu0 0
        %1098 = vmatpush.bf16.msra.mxu0 0
        %1099 = vmatpush.bf16.msra.mxu0 %v1090
        %1100 = vmatmul.bf16.gmra.mxu0 %v1087
        %v1101 = vpop.f32.mrf.mxu0
        %v1102 = vadd.f32 0.0, %v1101
        %v1103 = vpop.f32.mrf.mxu0
        %1104 = vdwg.mxu0
        %v1106 = vsel %vm816, %v1083, 0
        %v1109 = vsel %vm1004, %v1079, 0
        %1111 = vmatpush.bf16.msra.mxu0 0
        %1112 = vmatpush.bf16.msra.mxu0 0
        %1113 = vmatpush.bf16.msra.mxu0 0
        %1114 = vmatpush.bf16.msra.mxu0 0
        %1115 = vmatpush.bf16.msra.mxu0 0
        %1116 = vmatpush.bf16.msra.mxu0 0
        %1117 = vmatpush.bf16.msra.mxu0 0
        %1118 = vmatpush.bf16.msra.mxu0 %v1109
        %1119 = vmatmul.bf16.gmra.mxu0 %v1106
        %v1120 = vpop.f32.mrf.mxu0
        %v1121 = vadd.f32 0.0, %v1120
        %v1122 = vpop.f32.mrf.mxu0
        %1123 = vdwg.mxu0
        %v1125 = vsel %vm816, %v1084, 0
        %v1128 = vsel %vm1004, %v1080, 0
        %1130 = vmatpush.bf16.msra.mxu0 0
        %1131 = vmatpush.bf16.msra.mxu0 0
        %1132 = vmatpush.bf16.msra.mxu0 0
        %1133 = vmatpush.bf16.msra.mxu0 0
        %1134 = vmatpush.bf16.msra.mxu0 0
        %1135 = vmatpush.bf16.msra.mxu0 0
        %1136 = vmatpush.bf16.msra.mxu0 0
        %1137 = vmatpush.bf16.msra.mxu0 %v1128
        %1138 = vmatmul.bf16.gmra.mxu0 %v1125
        %v1139 = vpop.f32.mrf.mxu0
        %v1140 = vadd.f32 0.0, %v1139
        %v1141 = vpop.f32.mrf.mxu0
        %1142 = vdwg.mxu0
        %v1144 = vsel %vm816, %v1085, 0
        %v1147 = vsel %vm1004, %v1081, 0
        %1149 = vmatpush.bf16.msra.mxu0 0
        %1150 = vmatpush.bf16.msra.mxu0 0
        %1151 = vmatpush.bf16.msra.mxu0 0
        %1152 = vmatpush.bf16.msra.mxu0 0
        %1153 = vmatpush.bf16.msra.mxu0 0
        %1154 = vmatpush.bf16.msra.mxu0 0
        %1155 = vmatpush.bf16.msra.mxu0 0
        %1156 = vmatpush.bf16.msra.mxu0 %v1147
        %1157 = vmatmul.bf16.gmra.mxu0 %v1144
        %v1158 = vpop.f32.mrf.mxu0
        %v1159 = vadd.f32 0.0, %v1158
        %v1160 = vpop.f32.mrf.mxu0
        %1161 = vdwg.mxu0
        %v1162 = vsel %vm450, %v1102, 0.0
        %v1163 = vsel %vm450, %v1121, 0.0
        %v1164 = vadd.f32 %v1162, %v1163
        %v1165 = vsel %vm450, %v1140, 0.0
        %v1166 = vadd.f32 %v1164, %v1165
        %v1167 = vsel %vm450, %v1159, 0.0
        %v1168 = vadd.f32 %v1166, %v1167
        %v1169 = vperm.slane %v406, 6
        %v1170 = vadd.f32 %v1168, %v1169
        %v1171 = vadd.f32 %v402, %v1170
        %v1172 = vsel %vm450, %v1171, 0.0
        %1173 = vadd.xlane.f32.xlu0 %v1172
        %v1174 = vpop.xlane.xlu0 %1173
        %v1175 = vrcp.pop 32.0
        %v1176 = vmul.f32 32.0, %v1175
        %v1177 = vsub.f32 1.0, %v1176
        %v1178 = vmul.f32 %v1175, %v1177
        %v1179 = vadd.f32 %v1175, %v1178
        %vm1180 = vweird.f32 %v1175
        %v1181 = vsel %vm1180, %v1175, %v1179
        %v1182 = vmul.f32 %v1174, %v1181
        %v1183 = vsub.f32 %v1171, %v1182
        %v1184 = vmul.f32 %v1183, %v1183
        %v1185 = vsel %vm450, %v1184, 0.0
        %1186 = vadd.xlane.f32.xlu0 %v1185
        %v1187 = vpop.xlane.xlu0 %1186
        %v1188 = vmul.f32 %v1187, %v1181
        %v1189 = vadd.f32 %v1188, 1e-05
        %v1190 = vrsqrt.pop %v1189
        %v1191 = vmul.f32 %v1190, %v1189
        %v1192 = vmul.f32 %v1191, %v1190
        %v1193 = vmul.f32 0.5, %v1192
        %v1194 = vsub.f32 1.5, %v1193
        %v1195 = vmul.f32 %v1190, %v1194
        %vm1196 = vweird.f32 %v1189
        %vm1197 = vweird.f32 %v1190
        %vm1198 = vmor %vm1196, %vm1197
        %v1199 = vsel %vm1198, %v1190, %v1195
        %v1200 = vmul.f32 %v1183, %v1199
        %v1201 = vperm.slane %v406, 0
        %v1202 = vmul.f32 %v1200, %v1201
        %v1203 = vperm.slane %v406, 3
        %v1204 = vadd.f32 %v1202, %v1203
        %v1205 = vpack.c.bf16 %v1204, %v1204
        %s1206 = scalar_lea.vmem %s4, 192
        %v1207 = vld [vmem:[%s1206] sm:$0xf]
        %v1208 = vld [vmem:[%s1206 + $0x4] sm:$0xf]
        %v1209 = vld [vmem:[%s1206 + $0x8] sm:$0xf]
        %v1210 = vld [vmem:[%s1206 + $0xc] sm:$0xf]
        %v1211 = vld [vmem:[%s1206 + $0x10] sm:$0xf]
        %v1212 = vld [vmem:[%s1206 + $0x14] sm:$0xf]
        %v1213 = vld [vmem:[%s1206 + $0x18] sm:$0xf]
        %v1214 = vld [vmem:[%s1206 + $0x1c] sm:$0xf]
        %v1215 = vld [vmem:[%s1206 + $0x20] sm:$0xf]
        %v1216 = vld [vmem:[%s1206 + $0x24] sm:$0xf]
        %v1217 = vld [vmem:[%s1206 + $0x28] sm:$0xf]
        %v1218 = vld [vmem:[%s1206 + $0x2c] sm:$0xf]
        %v1219 = vld [vmem:[%s1206 + $0x30] sm:$0xf]
        %v1220 = vld [vmem:[%s1206 + $0x34] sm:$0xf]
        %v1221 = vld [vmem:[%s1206 + $0x38] sm:$0xf]
        %v1222 = vld [vmem:[%s1206 + $0x3c] sm:$0xf]
        %s1223 = scalar_lea.vmem %s5, 12
        %v1224 = vld [vmem:[%s1223] sm:$0xf]
        %v1226 = vrot.slane %v1224, 1
        %v1227 = vrot.slane %v1224, 2
        %v1228 = vrot.slane %v1224, 3
        %v1229 = vperm.slane %v1224, 0
        %v1230 = vperm.slane %v1226, 0
        %v1231 = vperm.slane %v1227, 0
        %v1232 = vperm.slane %v1228, 0
        %v1241 = vunpack.c.l.b16 %v1207
        %v1242 = vunpack.c.l.b16 %v1208
        %v1243 = vunpack.c.l.b16 %v1209
        %v1244 = vunpack.c.l.b16 %v1210
        %v1245 = vpack.c.b16 %v1242, %v1241
        %v1246 = vpack.c.b16 %v1244, %v1243
        %v1250 = vsel %vm450, %v1205, 0
        %1252 = vmatpush.bf16.msra.mxu0 0
        %1253 = vmatpush.bf16.msra.mxu0 0
        %1254 = vmatpush.bf16.msra.mxu0 0
        %1255 = vmatpush.bf16.msra.mxu0 0
        %1256 = vmatpush.bf16.msra.mxu0 0
        %1257 = vmatpush.bf16.msra.mxu0 0
        %1258 = vmatpush.bf16.msra.mxu0 %v1246
        %1259 = vmatpush.bf16.msra.mxu0 %v1245
        %1260 = vmatmul.bf16.gmra.mxu0 %v1250
        %v1261 = vpop.f32.mrf.mxu0
        %v1262 = vadd.f32 %v1229, %v1261
        %v1263 = vpop.f32.mrf.mxu0
        %1264 = vdwg.mxu0
        %v1269 = vunpack.c.l.b16 %v1211
        %v1270 = vunpack.c.l.b16 %v1212
        %v1271 = vunpack.c.l.b16 %v1213
        %v1272 = vunpack.c.l.b16 %v1214
        %v1273 = vpack.c.b16 %v1270, %v1269
        %v1274 = vpack.c.b16 %v1272, %v1271
        %1277 = vmatpush.bf16.msra.mxu0 0
        %1278 = vmatpush.bf16.msra.mxu0 0
        %1279 = vmatpush.bf16.msra.mxu0 0
        %1280 = vmatpush.bf16.msra.mxu0 0
        %1281 = vmatpush.bf16.msra.mxu0 0
        %1282 = vmatpush.bf16.msra.mxu0 0
        %1283 = vmatpush.bf16.msra.mxu0 %v1274
        %1284 = vmatpush.bf16.msra.mxu0 %v1273
        %1285 = vmatmul.bf16.gmra.mxu0 %v1250
        %v1286 = vpop.f32.mrf.mxu0
        %v1287 = vadd.f32 %v1230, %v1286
        %v1288 = vpop.f32.mrf.mxu0
        %1289 = vdwg.mxu0
        %v1294 = vunpack.c.l.b16 %v1215
        %v1295 = vunpack.c.l.b16 %v1216
        %v1296 = vunpack.c.l.b16 %v1217
        %v1297 = vunpack.c.l.b16 %v1218
        %v1298 = vpack.c.b16 %v1295, %v1294
        %v1299 = vpack.c.b16 %v1297, %v1296
        %1302 = vmatpush.bf16.msra.mxu0 0
        %1303 = vmatpush.bf16.msra.mxu0 0
        %1304 = vmatpush.bf16.msra.mxu0 0
        %1305 = vmatpush.bf16.msra.mxu0 0
        %1306 = vmatpush.bf16.msra.mxu0 0
        %1307 = vmatpush.bf16.msra.mxu0 0
        %1308 = vmatpush.bf16.msra.mxu0 %v1299
        %1309 = vmatpush.bf16.msra.mxu0 %v1298
        %1310 = vmatmul.bf16.gmra.mxu0 %v1250
        %v1311 = vpop.f32.mrf.mxu0
        %v1312 = vadd.f32 %v1231, %v1311
        %v1313 = vpop.f32.mrf.mxu0
        %1314 = vdwg.mxu0
        %v1319 = vunpack.c.l.b16 %v1219
        %v1320 = vunpack.c.l.b16 %v1220
        %v1321 = vunpack.c.l.b16 %v1221
        %v1322 = vunpack.c.l.b16 %v1222
        %v1323 = vpack.c.b16 %v1320, %v1319
        %v1324 = vpack.c.b16 %v1322, %v1321
        %1327 = vmatpush.bf16.msra.mxu0 0
        %1328 = vmatpush.bf16.msra.mxu0 0
        %1329 = vmatpush.bf16.msra.mxu0 0
        %1330 = vmatpush.bf16.msra.mxu0 0
        %1331 = vmatpush.bf16.msra.mxu0 0
        %1332 = vmatpush.bf16.msra.mxu0 0
        %1333 = vmatpush.bf16.msra.mxu0 %v1324
        %1334 = vmatpush.bf16.msra.mxu0 %v1323
        %1335 = vmatmul.bf16.gmra.mxu0 %v1250
        %v1336 = vpop.f32.mrf.mxu0
        %v1337 = vadd.f32 %v1232, %v1336
        %v1338 = vpop.f32.mrf.mxu0
        %1339 = vdwg.mxu0
        %s1340 = scalar_lea.vmem %s4, 256
        %v1341 = vld [vmem:[%s1340] sm:$0xf]
        %v1342 = vld [vmem:[%s1340 + $0x4] sm:$0xf]
        %v1343 = vld [vmem:[%s1340 + $0x8] sm:$0xf]
        %v1344 = vld [vmem:[%s1340 + $0xc] sm:$0xf]
        %v1345 = vld [vmem:[%s1340 + $0x10] sm:$0xf]
        %v1346 = vld [vmem:[%s1340 + $0x14] sm:$0xf]
        %v1347 = vld [vmem:[%s1340 + $0x18] sm:$0xf]
        %v1348 = vld [vmem:[%s1340 + $0x1c] sm:$0xf]
        %v1349 = vld [vmem:[%s1340 + $0x20] sm:$0xf]
        %v1350 = vld [vmem:[%s1340 + $0x24] sm:$0xf]
        %v1351 = vld [vmem:[%s1340 + $0x28] sm:$0xf]
        %v1352 = vld [vmem:[%s1340 + $0x2c] sm:$0xf]
        %v1353 = vld [vmem:[%s1340 + $0x30] sm:$0xf]
        %v1354 = vld [vmem:[%s1340 + $0x34] sm:$0xf]
        %v1355 = vld [vmem:[%s1340 + $0x38] sm:$0xf]
        %v1356 = vld [vmem:[%s1340 + $0x3c] sm:$0xf]
        %s1357 = scalar_lea.vmem %s5, 16
        %v1358 = vld [vmem:[%s1357] sm:$0xf]
        %v1360 = vrot.slane %v1358, 1
        %v1361 = vrot.slane %v1358, 2
        %v1362 = vrot.slane %v1358, 3
        %v1363 = vperm.slane %v1358, 0
        %v1364 = vperm.slane %v1360, 0
        %v1365 = vperm.slane %v1361, 0
        %v1366 = vperm.slane %v1362, 0
        %v1375 = vunpack.c.l.b16 %v1341
        %v1376 = vunpack.c.l.b16 %v1342
        %v1377 = vunpack.c.l.b16 %v1343
        %v1378 = vunpack.c.l.b16 %v1344
        %v1379 = vpack.c.b16 %v1376, %v1375
        %v1380 = vpack.c.b16 %v1378, %v1377
        %v1384 = vsel %vm450, %v404, 0
        %1386 = vmatpush.bf16.msra.mxu0 0
        %1387 = vmatpush.bf16.msra.mxu0 0
        %1388 = vmatpush.bf16.msra.mxu0 0
        %1389 = vmatpush.bf16.msra.mxu0 0
        %1390 = vmatpush.bf16.msra.mxu0 0
        %1391 = vmatpush.bf16.msra.mxu0 0
        %1392 = vmatpush.bf16.msra.mxu0 %v1380
        %1393 = vmatpush.bf16.msra.mxu0 %v1379
        %1394 = vmatmul.bf16.gmra.mxu0 %v1384
        %v1395 = vpop.f32.mrf.mxu0
        %v1396 = vadd.f32 %v1363, %v1395
        %v1397 = vpop.f32.mrf.mxu0
        %1398 = vdwg.mxu0
        %v1403 = vunpack.c.l.b16 %v1345
        %v1404 = vunpack.c.l.b16 %v1346
        %v1405 = vunpack.c.l.b16 %v1347
        %v1406 = vunpack.c.l.b16 %v1348
        %v1407 = vpack.c.b16 %v1404, %v1403
        %v1408 = vpack.c.b16 %v1406, %v1405
        %1411 = vmatpush.bf16.msra.mxu0 0
        %1412 = vmatpush.bf16.msra.mxu0 0
        %1413 = vmatpush.bf16.msra.mxu0 0
        %1414 = vmatpush.bf16.msra.mxu0 0
        %1415 = vmatpush.bf16.msra.mxu0 0
        %1416 = vmatpush.bf16.msra.mxu0 0
        %1417 = vmatpush.bf16.msra.mxu0 %v1408
        %1418 = vmatpush.bf16.msra.mxu0 %v1407
        %1419 = vmatmul.bf16.gmra.mxu0 %v1384
        %v1420 = vpop.f32.mrf.mxu0
        %v1421 = vadd.f32 %v1364, %v1420
        %v1422 = vpop.f32.mrf.mxu0
        %1423 = vdwg.mxu0
        %v1428 = vunpack.c.l.b16 %v1349
        %v1429 = vunpack.c.l.b16 %v1350
        %v1430 = vunpack.c.l.b16 %v1351
        %v1431 = vunpack.c.l.b16 %v1352
        %v1432 = vpack.c.b16 %v1429, %v1428
        %v1433 = vpack.c.b16 %v1431, %v1430
        %1436 = vmatpush.bf16.msra.mxu0 0
        %1437 = vmatpush.bf16.msra.mxu0 0
        %1438 = vmatpush.bf16.msra.mxu0 0
        %1439 = vmatpush.bf16.msra.mxu0 0
        %1440 = vmatpush.bf16.msra.mxu0 0
        %1441 = vmatpush.bf16.msra.mxu0 0
        %1442 = vmatpush.bf16.msra.mxu0 %v1433
        %1443 = vmatpush.bf16.msra.mxu0 %v1432
        %1444 = vmatmul.bf16.gmra.mxu0 %v1384
        %v1445 = vpop.f32.mrf.mxu0
        %v1446 = vadd.f32 %v1365, %v1445
        %v1447 = vpop.f32.mrf.mxu0
        %1448 = vdwg.mxu0
        %v1453 = vunpack.c.l.b16 %v1353
        %v1454 = vunpack.c.l.b16 %v1354
        %v1455 = vunpack.c.l.b16 %v1355
        %v1456 = vunpack.c.l.b16 %v1356
        %v1457 = vpack.c.b16 %v1454, %v1453
        %v1458 = vpack.c.b16 %v1456, %v1455
        %1461 = vmatpush.bf16.msra.mxu0 0
        %1462 = vmatpush.bf16.msra.mxu0 0
        %1463 = vmatpush.bf16.msra.mxu0 0
        %1464 = vmatpush.bf16.msra.mxu0 0
        %1465 = vmatpush.bf16.msra.mxu0 0
        %1466 = vmatpush.bf16.msra.mxu0 0
        %1467 = vmatpush.bf16.msra.mxu0 %v1458
        %1468 = vmatpush.bf16.msra.mxu0 %v1457
        %1469 = vmatmul.bf16.gmra.mxu0 %v1384
        %v1470 = vpop.f32.mrf.mxu0
        %v1471 = vadd.f32 %v1366, %v1470
        %v1472 = vpop.f32.mrf.mxu0
        %1473 = vdwg.mxu0
        %s1474 = scalar_lea.vmem %s4, 320
        %v1475 = vld [vmem:[%s1474] sm:$0xf]
        %v1476 = vld [vmem:[%s1474 + $0x4] sm:$0xf]
        %v1477 = vld [vmem:[%s1474 + $0x8] sm:$0xf]
        %v1478 = vld [vmem:[%s1474 + $0xc] sm:$0xf]
        %v1479 = vld [vmem:[%s1474 + $0x10] sm:$0xf]
        %v1480 = vld [vmem:[%s1474 + $0x14] sm:$0xf]
        %v1481 = vld [vmem:[%s1474 + $0x18] sm:$0xf]
        %v1482 = vld [vmem:[%s1474 + $0x1c] sm:$0xf]
        %v1483 = vld [vmem:[%s1474 + $0x20] sm:$0xf]
        %v1484 = vld [vmem:[%s1474 + $0x24] sm:$0xf]
        %v1485 = vld [vmem:[%s1474 + $0x28] sm:$0xf]
        %v1486 = vld [vmem:[%s1474 + $0x2c] sm:$0xf]
        %v1487 = vld [vmem:[%s1474 + $0x30] sm:$0xf]
        %v1488 = vld [vmem:[%s1474 + $0x34] sm:$0xf]
        %v1489 = vld [vmem:[%s1474 + $0x38] sm:$0xf]
        %v1490 = vld [vmem:[%s1474 + $0x3c] sm:$0xf]
        %s1491 = scalar_lea.vmem %s5, 20
        %v1492 = vld [vmem:[%s1491] sm:$0xf]
        %v1494 = vrot.slane %v1492, 1
        %v1495 = vrot.slane %v1492, 2
        %v1496 = vrot.slane %v1492, 3
        %v1497 = vperm.slane %v1492, 0
        %v1498 = vperm.slane %v1494, 0
        %v1499 = vperm.slane %v1495, 0
        %v1500 = vperm.slane %v1496, 0
        %v1509 = vunpack.c.l.b16 %v1475
        %v1510 = vunpack.c.l.b16 %v1476
        %v1511 = vunpack.c.l.b16 %v1477
        %v1512 = vunpack.c.l.b16 %v1478
        %v1513 = vpack.c.b16 %v1510, %v1509
        %v1514 = vpack.c.b16 %v1512, %v1511
        %1517 = vmatpush.bf16.msra.mxu0 0
        %1518 = vmatpush.bf16.msra.mxu0 0
        %1519 = vmatpush.bf16.msra.mxu0 0
        %1520 = vmatpush.bf16.msra.mxu0 0
        %1521 = vmatpush.bf16.msra.mxu0 0
        %1522 = vmatpush.bf16.msra.mxu0 0
        %1523 = vmatpush.bf16.msra.mxu0 %v1514
        %1524 = vmatpush.bf16.msra.mxu0 %v1513
        %1525 = vmatmul.bf16.gmra.mxu0 %v1384
        %v1526 = vpop.f32.mrf.mxu0
        %v1527 = vadd.f32 %v1497, %v1526
        %v1528 = vpop.f32.mrf.mxu0
        %1529 = vdwg.mxu0
        %v1534 = vunpack.c.l.b16 %v1479
        %v1535 = vunpack.c.l.b16 %v1480
        %v1536 = vunpack.c.l.b16 %v1481
        %v1537 = vunpack.c.l.b16 %v1482
        %v1538 = vpack.c.b16 %v1535, %v1534
        %v1539 = vpack.c.b16 %v1537, %v1536
        %1542 = vmatpush.bf16.msra.mxu0 0
        %1543 = vmatpush.bf16.msra.mxu0 0
        %1544 = vmatpush.bf16.msra.mxu0 0
        %1545 = vmatpush.bf16.msra.mxu0 0
        %1546 = vmatpush.bf16.msra.mxu0 0
        %1547 = vmatpush.bf16.msra.mxu0 0
        %1548 = vmatpush.bf16.msra.mxu0 %v1539
        %1549 = vmatpush.bf16.msra.mxu0 %v1538
        %1550 = vmatmul.bf16.gmra.mxu0 %v1384
        %v1551 = vpop.f32.mrf.mxu0
        %v1552 = vadd.f32 %v1498, %v1551
        %v1553 = vpop.f32.mrf.mxu0
        %1554 = vdwg.mxu0
        %v1559 = vunpack.c.l.b16 %v1483
        %v1560 = vunpack.c.l.b16 %v1484
        %v1561 = vunpack.c.l.b16 %v1485
        %v1562 = vunpack.c.l.b16 %v1486
        %v1563 = vpack.c.b16 %v1560, %v1559
        %v1564 = vpack.c.b16 %v1562, %v1561
        %1567 = vmatpush.bf16.msra.mxu0 0
        %1568 = vmatpush.bf16.msra.mxu0 0
        %1569 = vmatpush.bf16.msra.mxu0 0
        %1570 = vmatpush.bf16.msra.mxu0 0
        %1571 = vmatpush.bf16.msra.mxu0 0
        %1572 = vmatpush.bf16.msra.mxu0 0
        %1573 = vmatpush.bf16.msra.mxu0 %v1564
        %1574 = vmatpush.bf16.msra.mxu0 %v1563
        %1575 = vmatmul.bf16.gmra.mxu0 %v1384
        %v1576 = vpop.f32.mrf.mxu0
        %v1577 = vadd.f32 %v1499, %v1576
        %v1578 = vpop.f32.mrf.mxu0
        %1579 = vdwg.mxu0
        %v1584 = vunpack.c.l.b16 %v1487
        %v1585 = vunpack.c.l.b16 %v1488
        %v1586 = vunpack.c.l.b16 %v1489
        %v1587 = vunpack.c.l.b16 %v1490
        %v1588 = vpack.c.b16 %v1585, %v1584
        %v1589 = vpack.c.b16 %v1587, %v1586
        %1592 = vmatpush.bf16.msra.mxu0 0
        %1593 = vmatpush.bf16.msra.mxu0 0
        %1594 = vmatpush.bf16.msra.mxu0 0
        %1595 = vmatpush.bf16.msra.mxu0 0
        %1596 = vmatpush.bf16.msra.mxu0 0
        %1597 = vmatpush.bf16.msra.mxu0 0
        %1598 = vmatpush.bf16.msra.mxu0 %v1589
        %1599 = vmatpush.bf16.msra.mxu0 %v1588
        %1600 = vmatmul.bf16.gmra.mxu0 %v1384
        %v1601 = vpop.f32.mrf.mxu0
        %v1602 = vadd.f32 %v1500, %v1601
        %v1603 = vpop.f32.mrf.mxu0
        %1604 = vdwg.mxu0
        %v1605 = vpack.c.bf16 %v1262, %v1262
        %v1606 = vpack.c.bf16 %v1287, %v1287
        %v1607 = vpack.c.bf16 %v1312, %v1312
        %v1608 = vpack.c.bf16 %v1337, %v1337
        %v1609 = vpack.c.bf16 %v1396, %v1396
        %v1610 = vpack.c.bf16 %v1421, %v1421
        %v1611 = vpack.c.bf16 %v1446, %v1446
        %v1612 = vpack.c.bf16 %v1471, %v1471
        %v1613 = vpack.c.bf16 %v1527, %v1527
        %v1614 = vpack.c.bf16 %v1552, %v1552
        %v1615 = vpack.c.bf16 %v1577, %v1577
        %v1616 = vpack.c.bf16 %v1602, %v1602
        %v1618 = vsel %vm816, %v1605, 0
        %v1621 = vsel %vm816, %v1609, 0
        %1623 = vmatpush.bf16.xpose.msra.mxu0 0
        %1624 = vmatpush.bf16.xpose.msra.mxu0 0
        %1625 = vmatpush.bf16.xpose.msra.mxu0 0
        %1626 = vmatpush.bf16.xpose.msra.mxu0 0
        %1627 = vmatpush.bf16.xpose.msra.mxu0 0
        %1628 = vmatpush.bf16.xpose.msra.mxu0 0
        %1629 = vmatpush.bf16.xpose.msra.mxu0 0
        %1630 = vmatpush.bf16.xpose.msra.mxu0 %v1621
        %1631 = vmatmul.bf16.gmra.mxu0 %v1618
        %v1632 = vpop.f32.mrf.mxu0
        %v1633 = vadd.f32 0.0, %v1632
        %v1634 = vpop.f32.mrf.mxu0
        %1635 = vdwg.mxu0
        %v1637 = vsel %vm816, %v1606, 0
        %v1640 = vsel %vm816, %v1610, 0
        %1642 = vmatpush.bf16.xpose.msra.mxu0 0
        %1643 = vmatpush.bf16.xpose.msra.mxu0 0
        %1644 = vmatpush.bf16.xpose.msra.mxu0 0
        %1645 = vmatpush.bf16.xpose.msra.mxu0 0
        %1646 = vmatpush.bf16.xpose.msra.mxu0 0
        %1647 = vmatpush.bf16.xpose.msra.mxu0 0
        %1648 = vmatpush.bf16.xpose.msra.mxu0 0
        %1649 = vmatpush.bf16.xpose.msra.mxu0 %v1640
        %1650 = vmatmul.bf16.gmra.mxu0 %v1637
        %v1651 = vpop.f32.mrf.mxu0
        %v1652 = vadd.f32 0.0, %v1651
        %v1653 = vpop.f32.mrf.mxu0
        %1654 = vdwg.mxu0
        %v1656 = vsel %vm816, %v1607, 0
        %v1659 = vsel %vm816, %v1611, 0
        %1661 = vmatpush.bf16.xpose.msra.mxu0 0
        %1662 = vmatpush.bf16.xpose.msra.mxu0 0
        %1663 = vmatpush.bf16.xpose.msra.mxu0 0
        %1664 = vmatpush.bf16.xpose.msra.mxu0 0
        %1665 = vmatpush.bf16.xpose.msra.mxu0 0
        %1666 = vmatpush.bf16.xpose.msra.mxu0 0
        %1667 = vmatpush.bf16.xpose.msra.mxu0 0
        %1668 = vmatpush.bf16.xpose.msra.mxu0 %v1659
        %1669 = vmatmul.bf16.gmra.mxu0 %v1656
        %v1670 = vpop.f32.mrf.mxu0
        %v1671 = vadd.f32 0.0, %v1670
        %v1672 = vpop.f32.mrf.mxu0
        %1673 = vdwg.mxu0
        %v1675 = vsel %vm816, %v1608, 0
        %v1678 = vsel %vm816, %v1612, 0
        %1680 = vmatpush.bf16.xpose.msra.mxu0 0
        %1681 = vmatpush.bf16.xpose.msra.mxu0 0
        %1682 = vmatpush.bf16.xpose.msra.mxu0 0
        %1683 = vmatpush.bf16.xpose.msra.mxu0 0
        %1684 = vmatpush.bf16.xpose.msra.mxu0 0
        %1685 = vmatpush.bf16.xpose.msra.mxu0 0
        %1686 = vmatpush.bf16.xpose.msra.mxu0 0
        %1687 = vmatpush.bf16.xpose.msra.mxu0 %v1678
        %1688 = vmatmul.bf16.gmra.mxu0 %v1675
        %v1689 = vpop.f32.mrf.mxu0
        %v1690 = vadd.f32 0.0, %v1689
        %v1691 = vpop.f32.mrf.mxu0
        %1692 = vdwg.mxu0
        %v1693 = vmul.f32 %v1633, 0.35355338
        %v1694 = vmul.f32 %v1652, 0.35355338
        %v1695 = vmul.f32 %v1671, 0.35355338
        %v1696 = vmul.f32 %v1690, 0.35355338
        %v1697 = vsel %vm816, %v1693, -inf
        %1698 = vmax.xlane.f32.xlu0 %v1697
        %v1699 = vpop.xlane.xlu0 %1698
        %v1700 = vsel %vm816, %v1694, -inf
        %1701 = vmax.xlane.f32.xlu0 %v1700
        %v1702 = vpop.xlane.xlu0 %1701
        %v1703 = vsel %vm816, %v1695, -inf
        %1704 = vmax.xlane.f32.xlu0 %v1703
        %v1705 = vpop.xlane.xlu0 %1704
        %v1706 = vsel %vm816, %v1696, -inf
        %1707 = vmax.xlane.f32.xlu0 %v1706
        %v1708 = vpop.xlane.xlu0 %1707
        %v1709 = vsub.f32 %v1693, %v1699
        %v1710 = vsub.f32 %v1694, %v1702
        %v1711 = vsub.f32 %v1695, %v1705
        %v1712 = vsub.f32 %v1696, %v1708
        %v1713 = vmul.f32 %v1709, 1.442695
        %v1714 = vpow.pop %v1713
        %v1715 = vmul.f32 %v1710, 1.442695
        %v1716 = vpow.pop %v1715
        %v1717 = vmul.f32 %v1711, 1.442695
        %v1718 = vpow.pop %v1717
        %v1719 = vmul.f32 %v1712, 1.442695
        %v1720 = vpow.pop %v1719
        %v1721 = vsel %vm816, %v1714, 0.0
        %1722 = vadd.xlane.f32.xlu0 %v1721
        %v1723 = vpop.xlane.xlu0 %1722
        %v1724 = vsel %vm816, %v1716, 0.0
        %1725 = vadd.xlane.f32.xlu0 %v1724
        %v1726 = vpop.xlane.xlu0 %1725
        %v1727 = vsel %vm816, %v1718, 0.0
        %1728 = vadd.xlane.f32.xlu0 %v1727
        %v1729 = vpop.xlane.xlu0 %1728
        %v1730 = vsel %vm816, %v1720, 0.0
        %1731 = vadd.xlane.f32.xlu0 %v1730
        %v1732 = vpop.xlane.xlu0 %1731
        %v1733 = vrcp.pop %v1723
        %v1734 = vmul.f32 %v1723, %v1733
        %v1735 = vsub.f32 1.0, %v1734
        %v1736 = vmul.f32 %v1733, %v1735
        %v1737 = vadd.f32 %v1733, %v1736
        %vm1738 = vweird.f32 %v1723
        %vm1739 = vweird.f32 %v1733
        %vm1740 = vmor %vm1738, %vm1739
        %v1741 = vsel %vm1740, %v1733, %v1737
        %v1742 = vand.u32 2147483647, %v1723
        %vm1743 = vcmp.eq.f32.partialorder %v1742, 8.507059e+37
        %v1744 = vand.u32 %v1723, 2147483648
        %v1745 = vor.u32 1.1754944e-38, %v1744
        %v1746 = vsel %vm1743, %v1745, %v1741
        %v1747 = vmul.f32 %v1714, %v1746
        %v1748 = vrcp.pop %v1726
        %v1749 = vmul.f32 %v1726, %v1748
        %v1750 = vsub.f32 1.0, %v1749
        %v1751 = vmul.f32 %v1748, %v1750
        %v1752 = vadd.f32 %v1748, %v1751
        %vm1753 = vweird.f32 %v1726
        %vm1754 = vweird.f32 %v1748
        %vm1755 = vmor %vm1753, %vm1754
        %v1756 = vsel %vm1755, %v1748, %v1752
        %v1757 = vand.u32 2147483647, %v1726
        %vm1758 = vcmp.eq.f32.partialorder %v1757, 8.507059e+37
        %v1759 = vand.u32 %v1726, 2147483648
        %v1760 = vor.u32 1.1754944e-38, %v1759
        %v1761 = vsel %vm1758, %v1760, %v1756
        %v1762 = vmul.f32 %v1716, %v1761
        %v1763 = vrcp.pop %v1729
        %v1764 = vmul.f32 %v1729, %v1763
        %v1765 = vsub.f32 1.0, %v1764
        %v1766 = vmul.f32 %v1763, %v1765
        %v1767 = vadd.f32 %v1763, %v1766
        %vm1768 = vweird.f32 %v1729
        %vm1769 = vweird.f32 %v1763
        %vm1770 = vmor %vm1768, %vm1769
        %v1771 = vsel %vm1770, %v1763, %v1767
        %v1772 = vand.u32 2147483647, %v1729
        %vm1773 = vcmp.eq.f32.partialorder %v1772, 8.507059e+37
        %v1774 = vand.u32 %v1729, 2147483648
        %v1775 = vor.u32 1.1754944e-38, %v1774
        %v1776 = vsel %vm1773, %v1775, %v1771
        %v1777 = vmul.f32 %v1718, %v1776
        %v1778 = vrcp.pop %v1732
        %v1779 = vmul.f32 %v1732, %v1778
        %v1780 = vsub.f32 1.0, %v1779
        %v1781 = vmul.f32 %v1778, %v1780
        %v1782 = vadd.f32 %v1778, %v1781
        %vm1783 = vweird.f32 %v1732
        %vm1784 = vweird.f32 %v1778
        %vm1785 = vmor %vm1783, %vm1784
        %v1786 = vsel %vm1785, %v1778, %v1782
        %v1787 = vand.u32 2147483647, %v1732
        %vm1788 = vcmp.eq.f32.partialorder %v1787, 8.507059e+37
        %v1789 = vand.u32 %v1732, 2147483648
        %v1790 = vor.u32 1.1754944e-38, %v1789
        %v1791 = vsel %vm1788, %v1790, %v1786
        %v1792 = vmul.f32 %v1720, %v1791
        %v1793 = vpack.c.bf16 %v1747, %v1747
        %v1794 = vpack.c.bf16 %v1762, %v1762
        %v1795 = vpack.c.bf16 %v1777, %v1777
        %v1796 = vpack.c.bf16 %v1792, %v1792
        %v1798 = vsel %vm816, %v1793, 0
        %v1801 = vsel %vm1004, %v1613, 0
        %1803 = vmatpush.bf16.msra.mxu0 0
        %1804 = vmatpush.bf16.msra.mxu0 0
        %1805 = vmatpush.bf16.msra.mxu0 0
        %1806 = vmatpush.bf16.msra.mxu0 0
        %1807 = vmatpush.bf16.msra.mxu0 0
        %1808 = vmatpush.bf16.msra.mxu0 0
        %1809 = vmatpush.bf16.msra.mxu0 0
        %1810 = vmatpush.bf16.msra.mxu0 %v1801
        %1811 = vmatmul.bf16.gmra.mxu0 %v1798
        %v1812 = vpop.f32.mrf.mxu0
        %v1813 = vadd.f32 0.0, %v1812
        %v1814 = vpop.f32.mrf.mxu0
        %1815 = vdwg.mxu0
        %v1817 = vsel %vm816, %v1794, 0
        %v1820 = vsel %vm1004, %v1614, 0
        %1822 = vmatpush.bf16.msra.mxu0 0
        %1823 = vmatpush.bf16.msra.mxu0 0
        %1824 = vmatpush.bf16.msra.mxu0 0
        %1825 = vmatpush.bf16.msra.mxu0 0
        %1826 = vmatpush.bf16.msra.mxu0 0
        %1827 = vmatpush.bf16.msra.mxu0 0
        %1828 = vmatpush.bf16.msra.mxu0 0
        %1829 = vmatpush.bf16.msra.mxu0 %v1820
        %1830 = vmatmul.bf16.gmra.mxu0 %v1817
        %v1831 = vpop.f32.mrf.mxu0
        %v1832 = vadd.f32 0.0, %v1831
        %v1833 = vpop.f32.mrf.mxu0
        %1834 = vdwg.mxu0
        %v1836 = vsel %vm816, %v1795, 0
        %v1839 = vsel %vm1004, %v1615, 0
        %1841 = vmatpush.bf16.msra.mxu0 0
        %1842 = vmatpush.bf16.msra.mxu0 0
        %1843 = vmatpush.bf16.msra.mxu0 0
        %1844 = vmatpush.bf16.msra.mxu0 0
        %1845 = vmatpush.bf16.msra.mxu0 0
        %1846 = vmatpush.bf16.msra.mxu0 0
        %1847 = vmatpush.bf16.msra.mxu0 0
        %1848 = vmatpush.bf16.msra.mxu0 %v1839
        %1849 = vmatmul.bf16.gmra.mxu0 %v1836
        %v1850 = vpop.f32.mrf.mxu0
        %v1851 = vadd.f32 0.0, %v1850
        %v1852 = vpop.f32.mrf.mxu0
        %1853 = vdwg.mxu0
        %v1855 = vsel %vm816, %v1796, 0
        %v1858 = vsel %vm1004, %v1616, 0
        %1860 = vmatpush.bf16.msra.mxu0 0
        %1861 = vmatpush.bf16.msra.mxu0 0
        %1862 = vmatpush.bf16.msra.mxu0 0
        %1863 = vmatpush.bf16.msra.mxu0 0
        %1864 = vmatpush.bf16.msra.mxu0 0
        %1865 = vmatpush.bf16.msra.mxu0 0
        %1866 = vmatpush.bf16.msra.mxu0 0
        %1867 = vmatpush.bf16.msra.mxu0 %v1858
        %1868 = vmatmul.bf16.gmra.mxu0 %v1855
        %v1869 = vpop.f32.mrf.mxu0
        %v1870 = vadd.f32 0.0, %v1869
        %v1871 = vpop.f32.mrf.mxu0
        %1872 = vdwg.mxu0
        %s1873 = scalar_lea.vmem %s6, 16
        %v1874 = vld [vmem:[%s1873] sm:$0xf]
        %v1875 = vld [vmem:[%s1873 + $0x4] sm:$0xf]
        %v1876 = vld [vmem:[%s1873 + $0x8] sm:$0xf]
        %v1877 = vld [vmem:[%s1873 + $0xc] sm:$0xf]
        %v1878 = vpack.c.bf16 %v1813, %v1813
        %v1879 = vpack.c.bf16 %v1832, %v1832
        %v1880 = vpack.c.bf16 %v1851, %v1851
        %v1881 = vpack.c.bf16 %v1870, %v1870
        %v1883 = vsel %vm816, %v1878, 0
        %v1886 = vsel %vm1004, %v1874, 0
        %1888 = vmatpush.bf16.msra.mxu0 0
        %1889 = vmatpush.bf16.msra.mxu0 0
        %1890 = vmatpush.bf16.msra.mxu0 0
        %1891 = vmatpush.bf16.msra.mxu0 0
        %1892 = vmatpush.bf16.msra.mxu0 0
        %1893 = vmatpush.bf16.msra.mxu0 0
        %1894 = vmatpush.bf16.msra.mxu0 0
        %1895 = vmatpush.bf16.msra.mxu0 %v1886
        %1896 = vmatmul.bf16.gmra.mxu0 %v1883
        %v1897 = vpop.f32.mrf.mxu0
        %v1898 = vadd.f32 0.0, %v1897
        %v1899 = vpop.f32.mrf.mxu0
        %1900 = vdwg.mxu0
        %v1902 = vsel %vm816, %v1879, 0
        %v1905 = vsel %vm1004, %v1875, 0
        %1907 = vmatpush.bf16.msra.mxu0 0
        %1908 = vmatpush.bf16.msra.mxu0 0
        %1909 = vmatpush.bf16.msra.mxu0 0
        %1910 = vmatpush.bf16.msra.mxu0 0
        %1911 = vmatpush.bf16.msra.mxu0 0
        %1912 = vmatpush.bf16.msra.mxu0 0
        %1913 = vmatpush.bf16.msra.mxu0 0
        %1914 = vmatpush.bf16.msra.mxu0 %v1905
        %1915 = vmatmul.bf16.gmra.mxu0 %v1902
        %v1916 = vpop.f32.mrf.mxu0
        %v1917 = vadd.f32 0.0, %v1916
        %v1918 = vpop.f32.mrf.mxu0
        %1919 = vdwg.mxu0
        %v1921 = vsel %vm816, %v1880, 0
        %v1924 = vsel %vm1004, %v1876, 0
        %1926 = vmatpush.bf16.msra.mxu0 0
        %1927 = vmatpush.bf16.msra.mxu0 0
        %1928 = vmatpush.bf16.msra.mxu0 0
        %1929 = vmatpush.bf16.msra.mxu0 0
        %1930 = vmatpush.bf16.msra.mxu0 0
        %1931 = vmatpush.bf16.msra.mxu0 0
        %1932 = vmatpush.bf16.msra.mxu0 0
        %1933 = vmatpush.bf16.msra.mxu0 %v1924
        %1934 = vmatmul.bf16.gmra.mxu0 %v1921
        %v1935 = vpop.f32.mrf.mxu0
        %v1936 = vadd.f32 0.0, %v1935
        %v1937 = vpop.f32.mrf.mxu0
        %1938 = vdwg.mxu0
        %v1940 = vsel %vm816, %v1881, 0
        %v1943 = vsel %vm1004, %v1877, 0
        %1945 = vmatpush.bf16.msra.mxu0 0
        %1946 = vmatpush.bf16.msra.mxu0 0
        %1947 = vmatpush.bf16.msra.mxu0 0
        %1948 = vmatpush.bf16.msra.mxu0 0
        %1949 = vmatpush.bf16.msra.mxu0 0
        %1950 = vmatpush.bf16.msra.mxu0 0
        %1951 = vmatpush.bf16.msra.mxu0 0
        %1952 = vmatpush.bf16.msra.mxu0 %v1943
        %1953 = vmatmul.bf16.gmra.mxu0 %v1940
        %v1954 = vpop.f32.mrf.mxu0
        %v1955 = vadd.f32 0.0, %v1954
        %v1956 = vpop.f32.mrf.mxu0
        %1957 = vdwg.mxu0
        %v1958 = vsel %vm450, %v1898, 0.0
        %v1959 = vsel %vm450, %v1917, 0.0
        %v1960 = vadd.f32 %v1958, %v1959
        %v1961 = vsel %vm450, %v1936, 0.0
        %v1962 = vadd.f32 %v1960, %v1961
        %v1963 = vsel %vm450, %v1955, 0.0
        %v1964 = vadd.f32 %v1962, %v1963
        %v1965 = vperm.slane %v406, 7
        %v1966 = vadd.f32 %v1964, %v1965
        %v1967 = vadd.f32 %v1204, %v1966
        %v1968 = vsel %vm450, %v1967, 0.0
        %1969 = vadd.xlane.f32.xlu0 %v1968
        %v1970 = vpop.xlane.xlu0 %1969
        %v1971 = vmul.f32 %v1970, %v1181
        %v1972 = vsub.f32 %v1967, %v1971
        %v1973 = vmul.f32 %v1972, %v1972
        %v1974 = vsel %vm450, %v1973, 0.0
        %1975 = vadd.xlane.f32.xlu0 %v1974
        %v1976 = vpop.xlane.xlu0 %1975
        %v1977 = vmul.f32 %v1976, %v1181
        %v1978 = vadd.f32 %v1977, 1e-05
        %v1979 = vrsqrt.pop %v1978
        %v1980 = vmul.f32 %v1979, %v1978
        %v1981 = vmul.f32 %v1980, %v1979
        %v1982 = vmul.f32 0.5, %v1981
        %v1983 = vsub.f32 1.5, %v1982
        %v1984 = vmul.f32 %v1979, %v1983
        %vm1985 = vweird.f32 %v1978
        %vm1986 = vweird.f32 %v1979
        %vm1987 = vmor %vm1985, %vm1986
        %v1988 = vsel %vm1987, %v1979, %v1984
        %v1989 = vmul.f32 %v1972, %v1988
        %v1990 = vperm.slane %v406, 1
        %v1991 = vmul.f32 %v1989, %v1990
        %v1992 = vperm.slane %v406, 4
        %v1993 = vadd.f32 %v1991, %v1992
        %v1994 = vpack.c.bf16 %v1993, %v1993
        %v1995 = vld [vmem:[%s7] sm:$0xf]
        %v1996 = vld [vmem:[%s7 + $0x4] sm:$0xf]
        %v1997 = vld [vmem:[%s7 + $0x8] sm:$0xf]
        %v1998 = vld [vmem:[%s7 + $0xc] sm:$0xf]
        %v1999 = vld [vmem:[%s8] sm:$0x1]
        %v2001 = vperm.slane %v1999, 0
        %v2007 = vunpack.c.l.b16 %v1995
        %v2008 = vunpack.c.l.b16 %v1996
        %v2009 = vunpack.c.l.b16 %v1997
        %v2010 = vunpack.c.l.b16 %v1998
        %v2011 = vpack.c.b16 %v2008, %v2007
        %v2012 = vpack.c.b16 %v2010, %v2009
        %v2016 = vsel %vm450, %v1994, 0
        %2018 = vmatpush.bf16.msra.mxu0 0
        %2019 = vmatpush.bf16.msra.mxu0 0
        %2020 = vmatpush.bf16.msra.mxu0 0
        %2021 = vmatpush.bf16.msra.mxu0 0
        %2022 = vmatpush.bf16.msra.mxu0 0
        %2023 = vmatpush.bf16.msra.mxu0 0
        %2024 = vmatpush.bf16.msra.mxu0 %v2012
        %2025 = vmatpush.bf16.msra.mxu0 %v2011
        %2026 = vmatmul.bf16.gmra.mxu0 %v2016
        %v2027 = vpop.f32.mrf.mxu0
        %v2028 = vadd.f32 %v2001, %v2027
        %v2029 = vpop.f32.mrf.mxu0
        %2030 = vdwg.mxu0
        %v2031 = vmax.f32 %v2028, 0.0
        %v2032 = vpack.c.bf16 %v2031, %v2031
        %v2033 = vld [vmem:[%s9] sm:$0xf]
        %v2034 = vld [vmem:[%s9 + $0x4] sm:$0xf]
        %v2035 = vld [vmem:[%s9 + $0x8] sm:$0xf]
        %v2036 = vld [vmem:[%s9 + $0xc] sm:$0xf]
        %v2037 = vld [vmem:[%s9 + $0x10] sm:$0xf]
        %v2038 = vld [vmem:[%s9 + $0x14] sm:$0xf]
        %v2039 = vld [vmem:[%s9 + $0x18] sm:$0xf]
        %v2040 = vld [vmem:[%s9 + $0x1c] sm:$0xf]
        %v2041 = vld [vmem:[%s9 + $0x20] sm:$0xf]
        %v2042 = vld [vmem:[%s9 + $0x24] sm:$0xf]
        %v2043 = vld [vmem:[%s9 + $0x28] sm:$0xf]
        %v2044 = vld [vmem:[%s9 + $0x2c] sm:$0xf]
        %v2045 = vld [vmem:[%s9 + $0x30] sm:$0xf]
        %v2046 = vld [vmem:[%s9 + $0x34] sm:$0xf]
        %v2047 = vld [vmem:[%s9 + $0x38] sm:$0xf]
        %v2048 = vld [vmem:[%s9 + $0x3c] sm:$0xf]
        %v2049 = vperm.slane %v407, 0
        %v2066 = vunpack.c.l.b16 %v2033
        %v2067 = vunpack.c.l.b16 %v2034
        %v2068 = vunpack.c.l.b16 %v2035
        %v2069 = vunpack.c.l.b16 %v2036
        %v2070 = vunpack.c.l.b16 %v2037
        %v2071 = vunpack.c.l.b16 %v2038
        %v2072 = vunpack.c.l.b16 %v2039
        %v2073 = vunpack.c.l.b16 %v2040
        %v2074 = vunpack.c.l.b16 %v2041
        %v2075 = vunpack.c.l.b16 %v2042
        %v2076 = vunpack.c.l.b16 %v2043
        %v2077 = vunpack.c.l.b16 %v2044
        %v2078 = vunpack.c.l.b16 %v2045
        %v2079 = vunpack.c.l.b16 %v2046
        %v2080 = vunpack.c.l.b16 %v2047
        %v2081 = vunpack.c.l.b16 %v2048
        %v2082 = vpack.c.b16 %v2067, %v2066
        %v2083 = vpack.c.b16 %v2069, %v2068
        %v2084 = vpack.c.b16 %v2071, %v2070
        %v2085 = vpack.c.b16 %v2073, %v2072
        %v2086 = vpack.c.b16 %v2075, %v2074
        %v2087 = vpack.c.b16 %v2077, %v2076
        %v2088 = vpack.c.b16 %v2079, %v2078
        %v2089 = vpack.c.b16 %v2081, %v2080
        %2098 = vmatpush.bf16.msra.mxu0 %v2089
        %2099 = vmatpush.bf16.msra.mxu0 %v2088
        %2100 = vmatpush.bf16.msra.mxu0 %v2087
        %2101 = vmatpush.bf16.msra.mxu0 %v2086
        %2102 = vmatpush.bf16.msra.mxu0 %v2085
        %2103 = vmatpush.bf16.msra.mxu0 %v2084
        %2104 = vmatpush.bf16.msra.mxu0 %v2083
        %2105 = vmatpush.bf16.msra.mxu0 %v2082
        %2106 = vmatmul.bf16.gmra.mxu0 %v2032
        %v2107 = vpop.f32.mrf.mxu0
        %v2108 = vadd.f32 %v2049, %v2107
        %v2109 = vpop.f32.mrf.mxu0
        %2110 = vdwg.mxu0
        %v2111 = vadd.f32 %v1993, %v2108
        %v2112 = vsel %vm450, %v2111, 0.0
        %2113 = vadd.xlane.f32.xlu0 %v2112
        %v2114 = vpop.xlane.xlu0 %2113
        %v2115 = vmul.f32 %v2114, %v1181
        %v2116 = vsub.f32 %v2111, %v2115
        %v2117 = vmul.f32 %v2116, %v2116
        %v2118 = vsel %vm450, %v2117, 0.0
        %2119 = vadd.xlane.f32.xlu0 %v2118
        %v2120 = vpop.xlane.xlu0 %2119
        %v2121 = vmul.f32 %v2120, %v1181
        %v2122 = vadd.f32 %v2121, 1e-05
        %v2123 = vrsqrt.pop %v2122
        %v2124 = vmul.f32 %v2123, %v2122
        %v2125 = vmul.f32 %v2124, %v2123
        %v2126 = vmul.f32 0.5, %v2125
        %v2127 = vsub.f32 1.5, %v2126
        %v2128 = vmul.f32 %v2123, %v2127
        %vm2129 = vweird.f32 %v2122
        %vm2130 = vweird.f32 %v2123
        %vm2131 = vmor %vm2129, %vm2130
        %v2132 = vsel %vm2131, %v2123, %v2128
        %v2133 = vmul.f32 %v2116, %v2132
        %v2134 = vperm.slane %v406, 2
        %v2135 = vmul.f32 %v2133, %v2134
        %v2136 = vperm.slane %v406, 5
        %v2137 = vadd.f32 %v2135, %v2136
        %s2138 = scalar_lea.vmem %s10, 16
        %v2139 = vld [vmem:[%s2138] sm:$0xff]
        %v2140 = vld [vmem:[%s2138 + $0x8] sm:$0x1]
        %v2141 = vpack.c.bf16 %v2137, %v2137
        %s2142 = scalar_lea.vmem %s4, 384
        %v2143 = vld [vmem:[%s2142] sm:$0xf]
        %v2144 = vld [vmem:[%s2142 + $0x4] sm:$0xf]
        %v2145 = vld [vmem:[%s2142 + $0x8] sm:$0xf]
        %v2146 = vld [vmem:[%s2142 + $0xc] sm:$0xf]
        %v2147 = vld [vmem:[%s2142 + $0x10] sm:$0xf]
        %v2148 = vld [vmem:[%s2142 + $0x14] sm:$0xf]
        %v2149 = vld [vmem:[%s2142 + $0x18] sm:$0xf]
        %v2150 = vld [vmem:[%s2142 + $0x1c] sm:$0xf]
        %v2151 = vld [vmem:[%s2142 + $0x20] sm:$0xf]
        %v2152 = vld [vmem:[%s2142 + $0x24] sm:$0xf]
        %v2153 = vld [vmem:[%s2142 + $0x28] sm:$0xf]
        %v2154 = vld [vmem:[%s2142 + $0x2c] sm:$0xf]
        %v2155 = vld [vmem:[%s2142 + $0x30] sm:$0xf]
        %v2156 = vld [vmem:[%s2142 + $0x34] sm:$0xf]
        %v2157 = vld [vmem:[%s2142 + $0x38] sm:$0xf]
        %v2158 = vld [vmem:[%s2142 + $0x3c] sm:$0xf]
        %s2159 = scalar_lea.vmem %s5, 24
        %v2160 = vld [vmem:[%s2159] sm:$0xf]
        %v2162 = vrot.slane %v2160, 1
        %v2163 = vrot.slane %v2160, 2
        %v2164 = vrot.slane %v2160, 3
        %v2165 = vperm.slane %v2160, 0
        %v2166 = vperm.slane %v2162, 0
        %v2167 = vperm.slane %v2163, 0
        %v2168 = vperm.slane %v2164, 0
        %v2177 = vunpack.c.l.b16 %v2143
        %v2178 = vunpack.c.l.b16 %v2144
        %v2179 = vunpack.c.l.b16 %v2145
        %v2180 = vunpack.c.l.b16 %v2146
        %v2181 = vpack.c.b16 %v2178, %v2177
        %v2182 = vpack.c.b16 %v2180, %v2179
        %v2186 = vsel %vm450, %v2141, 0
        %2188 = vmatpush.bf16.msra.mxu0 0
        %2189 = vmatpush.bf16.msra.mxu0 0
        %2190 = vmatpush.bf16.msra.mxu0 0
        %2191 = vmatpush.bf16.msra.mxu0 0
        %2192 = vmatpush.bf16.msra.mxu0 0
        %2193 = vmatpush.bf16.msra.mxu0 0
        %2194 = vmatpush.bf16.msra.mxu0 %v2182
        %2195 = vmatpush.bf16.msra.mxu0 %v2181
        %2196 = vmatmul.bf16.gmra.mxu0 %v2186
        %v2197 = vpop.f32.mrf.mxu0
        %v2198 = vadd.f32 %v2165, %v2197
        %v2199 = vpop.f32.mrf.mxu0
        %2200 = vdwg.mxu0
        %v2205 = vunpack.c.l.b16 %v2147
        %v2206 = vunpack.c.l.b16 %v2148
        %v2207 = vunpack.c.l.b16 %v2149
        %v2208 = vunpack.c.l.b16 %v2150
        %v2209 = vpack.c.b16 %v2206, %v2205
        %v2210 = vpack.c.b16 %v2208, %v2207
        %2213 = vmatpush.bf16.msra.mxu0 0
        %2214 = vmatpush.bf16.msra.mxu0 0
        %2215 = vmatpush.bf16.msra.mxu0 0
        %2216 = vmatpush.bf16.msra.mxu0 0
        %2217 = vmatpush.bf16.msra.mxu0 0
        %2218 = vmatpush.bf16.msra.mxu0 0
        %2219 = vmatpush.bf16.msra.mxu0 %v2210
        %2220 = vmatpush.bf16.msra.mxu0 %v2209
        %2221 = vmatmul.bf16.gmra.mxu0 %v2186
        %v2222 = vpop.f32.mrf.mxu0
        %v2223 = vadd.f32 %v2166, %v2222
        %v2224 = vpop.f32.mrf.mxu0
        %2225 = vdwg.mxu0
        %v2230 = vunpack.c.l.b16 %v2151
        %v2231 = vunpack.c.l.b16 %v2152
        %v2232 = vunpack.c.l.b16 %v2153
        %v2233 = vunpack.c.l.b16 %v2154
        %v2234 = vpack.c.b16 %v2231, %v2230
        %v2235 = vpack.c.b16 %v2233, %v2232
        %2238 = vmatpush.bf16.msra.mxu0 0
        %2239 = vmatpush.bf16.msra.mxu0 0
        %2240 = vmatpush.bf16.msra.mxu0 0
        %2241 = vmatpush.bf16.msra.mxu0 0
        %2242 = vmatpush.bf16.msra.mxu0 0
        %2243 = vmatpush.bf16.msra.mxu0 0
        %2244 = vmatpush.bf16.msra.mxu0 %v2235
        %2245 = vmatpush.bf16.msra.mxu0 %v2234
        %2246 = vmatmul.bf16.gmra.mxu0 %v2186
        %v2247 = vpop.f32.mrf.mxu0
        %v2248 = vadd.f32 %v2167, %v2247
        %v2249 = vpop.f32.mrf.mxu0
        %2250 = vdwg.mxu0
        %v2255 = vunpack.c.l.b16 %v2155
        %v2256 = vunpack.c.l.b16 %v2156
        %v2257 = vunpack.c.l.b16 %v2157
        %v2258 = vunpack.c.l.b16 %v2158
        %v2259 = vpack.c.b16 %v2256, %v2255
        %v2260 = vpack.c.b16 %v2258, %v2257
        %2263 = vmatpush.bf16.msra.mxu0 0
        %2264 = vmatpush.bf16.msra.mxu0 0
        %2265 = vmatpush.bf16.msra.mxu0 0
        %2266 = vmatpush.bf16.msra.mxu0 0
        %2267 = vmatpush.bf16.msra.mxu0 0
        %2268 = vmatpush.bf16.msra.mxu0 0
        %2269 = vmatpush.bf16.msra.mxu0 %v2260
        %2270 = vmatpush.bf16.msra.mxu0 %v2259
        %2271 = vmatmul.bf16.gmra.mxu0 %v2186
        %v2272 = vpop.f32.mrf.mxu0
        %v2273 = vadd.f32 %v2168, %v2272
        %v2274 = vpop.f32.mrf.mxu0
        %2275 = vdwg.mxu0
        %s2276 = scalar_lea.vmem %s4, 448
        %v2277 = vld [vmem:[%s2276] sm:$0xf]
        %v2278 = vld [vmem:[%s2276 + $0x4] sm:$0xf]
        %v2279 = vld [vmem:[%s2276 + $0x8] sm:$0xf]
        %v2280 = vld [vmem:[%s2276 + $0xc] sm:$0xf]
        %v2281 = vld [vmem:[%s2276 + $0x10] sm:$0xf]
        %v2282 = vld [vmem:[%s2276 + $0x14] sm:$0xf]
        %v2283 = vld [vmem:[%s2276 + $0x18] sm:$0xf]
        %v2284 = vld [vmem:[%s2276 + $0x1c] sm:$0xf]
        %v2285 = vld [vmem:[%s2276 + $0x20] sm:$0xf]
        %v2286 = vld [vmem:[%s2276 + $0x24] sm:$0xf]
        %v2287 = vld [vmem:[%s2276 + $0x28] sm:$0xf]
        %v2288 = vld [vmem:[%s2276 + $0x2c] sm:$0xf]
        %v2289 = vld [vmem:[%s2276 + $0x30] sm:$0xf]
        %v2290 = vld [vmem:[%s2276 + $0x34] sm:$0xf]
        %v2291 = vld [vmem:[%s2276 + $0x38] sm:$0xf]
        %v2292 = vld [vmem:[%s2276 + $0x3c] sm:$0xf]
        %s2293 = scalar_lea.vmem %s5, 28
        %v2294 = vld [vmem:[%s2293] sm:$0xf]
        %v2296 = vrot.slane %v2294, 1
        %v2297 = vrot.slane %v2294, 2
        %v2298 = vrot.slane %v2294, 3
        %v2299 = vperm.slane %v2294, 0
        %v2300 = vperm.slane %v2296, 0
        %v2301 = vperm.slane %v2297, 0
        %v2302 = vperm.slane %v2298, 0
        %v2311 = vunpack.c.l.b16 %v2277
        %v2312 = vunpack.c.l.b16 %v2278
        %v2313 = vunpack.c.l.b16 %v2279
        %v2314 = vunpack.c.l.b16 %v2280
        %v2315 = vpack.c.b16 %v2312, %v2311
        %v2316 = vpack.c.b16 %v2314, %v2313
        %2319 = vmatpush.bf16.msra.mxu0 0
        %2320 = vmatpush.bf16.msra.mxu0 0
        %2321 = vmatpush.bf16.msra.mxu0 0
        %2322 = vmatpush.bf16.msra.mxu0 0
        %2323 = vmatpush.bf16.msra.mxu0 0
        %2324 = vmatpush.bf16.msra.mxu0 0
        %2325 = vmatpush.bf16.msra.mxu0 %v2316
        %2326 = vmatpush.bf16.msra.mxu0 %v2315
        %2327 = vmatmul.bf16.gmra.mxu0 %v2186
        %v2328 = vpop.f32.mrf.mxu0
        %v2329 = vadd.f32 %v2299, %v2328
        %v2330 = vpop.f32.mrf.mxu0
        %2331 = vdwg.mxu0
        %v2336 = vunpack.c.l.b16 %v2281
        %v2337 = vunpack.c.l.b16 %v2282
        %v2338 = vunpack.c.l.b16 %v2283
        %v2339 = vunpack.c.l.b16 %v2284
        %v2340 = vpack.c.b16 %v2337, %v2336
        %v2341 = vpack.c.b16 %v2339, %v2338
        %2344 = vmatpush.bf16.msra.mxu0 0
        %2345 = vmatpush.bf16.msra.mxu0 0
        %2346 = vmatpush.bf16.msra.mxu0 0
        %2347 = vmatpush.bf16.msra.mxu0 0
        %2348 = vmatpush.bf16.msra.mxu0 0
        %2349 = vmatpush.bf16.msra.mxu0 0
        %2350 = vmatpush.bf16.msra.mxu0 %v2341
        %2351 = vmatpush.bf16.msra.mxu0 %v2340
        %2352 = vmatmul.bf16.gmra.mxu0 %v2186
        %v2353 = vpop.f32.mrf.mxu0
        %v2354 = vadd.f32 %v2300, %v2353
        %v2355 = vpop.f32.mrf.mxu0
        %2356 = vdwg.mxu0
        %v2361 = vunpack.c.l.b16 %v2285
        %v2362 = vunpack.c.l.b16 %v2286
        %v2363 = vunpack.c.l.b16 %v2287
        %v2364 = vunpack.c.l.b16 %v2288
        %v2365 = vpack.c.b16 %v2362, %v2361
        %v2366 = vpack.c.b16 %v2364, %v2363
        %2369 = vmatpush.bf16.msra.mxu0 0
        %2370 = vmatpush.bf16.msra.mxu0 0
        %2371 = vmatpush.bf16.msra.mxu0 0
        %2372 = vmatpush.bf16.msra.mxu0 0
        %2373 = vmatpush.bf16.msra.mxu0 0
        %2374 = vmatpush.bf16.msra.mxu0 0
        %2375 = vmatpush.bf16.msra.mxu0 %v2366
        %2376 = vmatpush.bf16.msra.mxu0 %v2365
        %2377 = vmatmul.bf16.gmra.mxu0 %v2186
        %v2378 = vpop.f32.mrf.mxu0
        %v2379 = vadd.f32 %v2301, %v2378
        %v2380 = vpop.f32.mrf.mxu0
        %2381 = vdwg.mxu0
        %v2386 = vunpack.c.l.b16 %v2289
        %v2387 = vunpack.c.l.b16 %v2290
        %v2388 = vunpack.c.l.b16 %v2291
        %v2389 = vunpack.c.l.b16 %v2292
        %v2390 = vpack.c.b16 %v2387, %v2386
        %v2391 = vpack.c.b16 %v2389, %v2388
        %2394 = vmatpush.bf16.msra.mxu0 0
        %2395 = vmatpush.bf16.msra.mxu0 0
        %2396 = vmatpush.bf16.msra.mxu0 0
        %2397 = vmatpush.bf16.msra.mxu0 0
        %2398 = vmatpush.bf16.msra.mxu0 0
        %2399 = vmatpush.bf16.msra.mxu0 0
        %2400 = vmatpush.bf16.msra.mxu0 %v2391
        %2401 = vmatpush.bf16.msra.mxu0 %v2390
        %2402 = vmatmul.bf16.gmra.mxu0 %v2186
        %v2403 = vpop.f32.mrf.mxu0
        %v2404 = vadd.f32 %v2302, %v2403
        %v2405 = vpop.f32.mrf.mxu0
        %2406 = vdwg.mxu0
        %s2407 = scalar_lea.vmem %s4, 512
        %v2408 = vld [vmem:[%s2407] sm:$0xf]
        %v2409 = vld [vmem:[%s2407 + $0x4] sm:$0xf]
        %v2410 = vld [vmem:[%s2407 + $0x8] sm:$0xf]
        %v2411 = vld [vmem:[%s2407 + $0xc] sm:$0xf]
        %v2412 = vld [vmem:[%s2407 + $0x10] sm:$0xf]
        %v2413 = vld [vmem:[%s2407 + $0x14] sm:$0xf]
        %v2414 = vld [vmem:[%s2407 + $0x18] sm:$0xf]
        %v2415 = vld [vmem:[%s2407 + $0x1c] sm:$0xf]
        %v2416 = vld [vmem:[%s2407 + $0x20] sm:$0xf]
        %v2417 = vld [vmem:[%s2407 + $0x24] sm:$0xf]
        %v2418 = vld [vmem:[%s2407 + $0x28] sm:$0xf]
        %v2419 = vld [vmem:[%s2407 + $0x2c] sm:$0xf]
        %v2420 = vld [vmem:[%s2407 + $0x30] sm:$0xf]
        %v2421 = vld [vmem:[%s2407 + $0x34] sm:$0xf]
        %v2422 = vld [vmem:[%s2407 + $0x38] sm:$0xf]
        %v2423 = vld [vmem:[%s2407 + $0x3c] sm:$0xf]
        %s2424 = scalar_lea.vmem %s5, 32
        %v2425 = vld [vmem:[%s2424] sm:$0xf]
        %v2427 = vrot.slane %v2425, 1
        %v2428 = vrot.slane %v2425, 2
        %v2429 = vrot.slane %v2425, 3
        %v2430 = vperm.slane %v2425, 0
        %v2431 = vperm.slane %v2427, 0
        %v2432 = vperm.slane %v2428, 0
        %v2433 = vperm.slane %v2429, 0
        %v2442 = vunpack.c.l.b16 %v2408
        %v2443 = vunpack.c.l.b16 %v2409
        %v2444 = vunpack.c.l.b16 %v2410
        %v2445 = vunpack.c.l.b16 %v2411
        %v2446 = vpack.c.b16 %v2443, %v2442
        %v2447 = vpack.c.b16 %v2445, %v2444
        %2450 = vmatpush.bf16.msra.mxu0 0
        %2451 = vmatpush.bf16.msra.mxu0 0
        %2452 = vmatpush.bf16.msra.mxu0 0
        %2453 = vmatpush.bf16.msra.mxu0 0
        %2454 = vmatpush.bf16.msra.mxu0 0
        %2455 = vmatpush.bf16.msra.mxu0 0
        %2456 = vmatpush.bf16.msra.mxu0 %v2447
        %2457 = vmatpush.bf16.msra.mxu0 %v2446
        %2458 = vmatmul.bf16.gmra.mxu0 %v2186
        %v2459 = vpop.f32.mrf.mxu0
        %v2460 = vadd.f32 %v2430, %v2459
        %v2461 = vpop.f32.mrf.mxu0
        %2462 = vdwg.mxu0
        %v2467 = vunpack.c.l.b16 %v2412
        %v2468 = vunpack.c.l.b16 %v2413
        %v2469 = vunpack.c.l.b16 %v2414
        %v2470 = vunpack.c.l.b16 %v2415
        %v2471 = vpack.c.b16 %v2468, %v2467
        %v2472 = vpack.c.b16 %v2470, %v2469
        %2475 = vmatpush.bf16.msra.mxu0 0
        %2476 = vmatpush.bf16.msra.mxu0 0
        %2477 = vmatpush.bf16.msra.mxu0 0
        %2478 = vmatpush.bf16.msra.mxu0 0
        %2479 = vmatpush.bf16.msra.mxu0 0
        %2480 = vmatpush.bf16.msra.mxu0 0
        %2481 = vmatpush.bf16.msra.mxu0 %v2472
        %2482 = vmatpush.bf16.msra.mxu0 %v2471
        %2483 = vmatmul.bf16.gmra.mxu0 %v2186
        %v2484 = vpop.f32.mrf.mxu0
        %v2485 = vadd.f32 %v2431, %v2484
        %v2486 = vpop.f32.mrf.mxu0
        %2487 = vdwg.mxu0
        %v2492 = vunpack.c.l.b16 %v2416
        %v2493 = vunpack.c.l.b16 %v2417
        %v2494 = vunpack.c.l.b16 %v2418
        %v2495 = vunpack.c.l.b16 %v2419
        %v2496 = vpack.c.b16 %v2493, %v2492
        %v2497 = vpack.c.b16 %v2495, %v2494
        %2500 = vmatpush.bf16.msra.mxu0 0
        %2501 = vmatpush.bf16.msra.mxu0 0
        %2502 = vmatpush.bf16.msra.mxu0 0
        %2503 = vmatpush.bf16.msra.mxu0 0
        %2504 = vmatpush.bf16.msra.mxu0 0
        %2505 = vmatpush.bf16.msra.mxu0 0
        %2506 = vmatpush.bf16.msra.mxu0 %v2497
        %2507 = vmatpush.bf16.msra.mxu0 %v2496
        %2508 = vmatmul.bf16.gmra.mxu0 %v2186
        %v2509 = vpop.f32.mrf.mxu0
        %v2510 = vadd.f32 %v2432, %v2509
        %v2511 = vpop.f32.mrf.mxu0
        %2512 = vdwg.mxu0
        %v2517 = vunpack.c.l.b16 %v2420
        %v2518 = vunpack.c.l.b16 %v2421
        %v2519 = vunpack.c.l.b16 %v2422
        %v2520 = vunpack.c.l.b16 %v2423
        %v2521 = vpack.c.b16 %v2518, %v2517
        %v2522 = vpack.c.b16 %v2520, %v2519
        %2525 = vmatpush.bf16.msra.mxu0 0
        %2526 = vmatpush.bf16.msra.mxu0 0
        %2527 = vmatpush.bf16.msra.mxu0 0
        %2528 = vmatpush.bf16.msra.mxu0 0
        %2529 = vmatpush.bf16.msra.mxu0 0
        %2530 = vmatpush.bf16.msra.mxu0 0
        %2531 = vmatpush.bf16.msra.mxu0 %v2522
        %2532 = vmatpush.bf16.msra.mxu0 %v2521
        %2533 = vmatmul.bf16.gmra.mxu0 %v2186
        %v2534 = vpop.f32.mrf.mxu0
        %v2535 = vadd.f32 %v2433, %v2534
        %v2536 = vpop.f32.mrf.mxu0
        %2537 = vdwg.mxu0
        %v2538 = vpack.c.bf16 %v2198, %v2198
        %v2539 = vpack.c.bf16 %v2223, %v2223
        %v2540 = vpack.c.bf16 %v2248, %v2248
        %v2541 = vpack.c.bf16 %v2273, %v2273
        %v2542 = vpack.c.bf16 %v2329, %v2329
        %v2543 = vpack.c.bf16 %v2354, %v2354
        %v2544 = vpack.c.bf16 %v2379, %v2379
        %v2545 = vpack.c.bf16 %v2404, %v2404
        %v2546 = vpack.c.bf16 %v2460, %v2460
        %v2547 = vpack.c.bf16 %v2485, %v2485
        %v2548 = vpack.c.bf16 %v2510, %v2510
        %v2549 = vpack.c.bf16 %v2535, %v2535
        %v2551 = vsel %vm816, %v2538, 0
        %v2554 = vsel %vm816, %v2542, 0
        %2556 = vmatpush.bf16.xpose.msra.mxu0 0
        %2557 = vmatpush.bf16.xpose.msra.mxu0 0
        %2558 = vmatpush.bf16.xpose.msra.mxu0 0
        %2559 = vmatpush.bf16.xpose.msra.mxu0 0
        %2560 = vmatpush.bf16.xpose.msra.mxu0 0
        %2561 = vmatpush.bf16.xpose.msra.mxu0 0
        %2562 = vmatpush.bf16.xpose.msra.mxu0 0
        %2563 = vmatpush.bf16.xpose.msra.mxu0 %v2554
        %2564 = vmatmul.bf16.gmra.mxu0 %v2551
        %v2565 = vpop.f32.mrf.mxu0
        %v2566 = vadd.f32 0.0, %v2565
        %v2567 = vpop.f32.mrf.mxu0
        %2568 = vdwg.mxu0
        %v2570 = vsel %vm816, %v2539, 0
        %v2573 = vsel %vm816, %v2543, 0
        %2575 = vmatpush.bf16.xpose.msra.mxu0 0
        %2576 = vmatpush.bf16.xpose.msra.mxu0 0
        %2577 = vmatpush.bf16.xpose.msra.mxu0 0
        %2578 = vmatpush.bf16.xpose.msra.mxu0 0
        %2579 = vmatpush.bf16.xpose.msra.mxu0 0
        %2580 = vmatpush.bf16.xpose.msra.mxu0 0
        %2581 = vmatpush.bf16.xpose.msra.mxu0 0
        %2582 = vmatpush.bf16.xpose.msra.mxu0 %v2573
        %2583 = vmatmul.bf16.gmra.mxu0 %v2570
        %v2584 = vpop.f32.mrf.mxu0
        %v2585 = vadd.f32 0.0, %v2584
        %v2586 = vpop.f32.mrf.mxu0
        %2587 = vdwg.mxu0
        %v2589 = vsel %vm816, %v2540, 0
        %v2592 = vsel %vm816, %v2544, 0
        %2594 = vmatpush.bf16.xpose.msra.mxu0 0
        %2595 = vmatpush.bf16.xpose.msra.mxu0 0
        %2596 = vmatpush.bf16.xpose.msra.mxu0 0
        %2597 = vmatpush.bf16.xpose.msra.mxu0 0
        %2598 = vmatpush.bf16.xpose.msra.mxu0 0
        %2599 = vmatpush.bf16.xpose.msra.mxu0 0
        %2600 = vmatpush.bf16.xpose.msra.mxu0 0
        %2601 = vmatpush.bf16.xpose.msra.mxu0 %v2592
        %2602 = vmatmul.bf16.gmra.mxu0 %v2589
        %v2603 = vpop.f32.mrf.mxu0
        %v2604 = vadd.f32 0.0, %v2603
        %v2605 = vpop.f32.mrf.mxu0
        %2606 = vdwg.mxu0
        %v2608 = vsel %vm816, %v2541, 0
        %v2611 = vsel %vm816, %v2545, 0
        %2613 = vmatpush.bf16.xpose.msra.mxu0 0
        %2614 = vmatpush.bf16.xpose.msra.mxu0 0
        %2615 = vmatpush.bf16.xpose.msra.mxu0 0
        %2616 = vmatpush.bf16.xpose.msra.mxu0 0
        %2617 = vmatpush.bf16.xpose.msra.mxu0 0
        %2618 = vmatpush.bf16.xpose.msra.mxu0 0
        %2619 = vmatpush.bf16.xpose.msra.mxu0 0
        %2620 = vmatpush.bf16.xpose.msra.mxu0 %v2611
        %2621 = vmatmul.bf16.gmra.mxu0 %v2608
        %v2622 = vpop.f32.mrf.mxu0
        %v2623 = vadd.f32 0.0, %v2622
        %v2624 = vpop.f32.mrf.mxu0
        %2625 = vdwg.mxu0
        %v2626 = vmul.f32 %v2566, 0.35355338
        %v2627 = vmul.f32 %v2585, 0.35355338
        %v2628 = vmul.f32 %v2604, 0.35355338
        %v2629 = vmul.f32 %v2623, 0.35355338
        %v2630 = vadd.f32 %v2626, %v405
        %v2631 = vadd.f32 %v2627, %v405
        %v2632 = vadd.f32 %v2628, %v405
        %v2633 = vadd.f32 %v2629, %v405
        %v2634 = vsel %vm816, %v2630, -inf
        %2635 = vmax.xlane.f32.xlu0 %v2634
        %v2636 = vpop.xlane.xlu0 %2635
        %v2637 = vsel %vm816, %v2631, -inf
        %2638 = vmax.xlane.f32.xlu0 %v2637
        %v2639 = vpop.xlane.xlu0 %2638
        %v2640 = vsel %vm816, %v2632, -inf
        %2641 = vmax.xlane.f32.xlu0 %v2640
        %v2642 = vpop.xlane.xlu0 %2641
        %v2643 = vsel %vm816, %v2633, -inf
        %2644 = vmax.xlane.f32.xlu0 %v2643
        %v2645 = vpop.xlane.xlu0 %2644
        %v2646 = vsub.f32 %v2630, %v2636
        %v2647 = vsub.f32 %v2631, %v2639
        %v2648 = vsub.f32 %v2632, %v2642
        %v2649 = vsub.f32 %v2633, %v2645
        %v2650 = vmul.f32 %v2646, 1.442695
        %v2651 = vpow.pop %v2650
        %v2652 = vmul.f32 %v2647, 1.442695
        %v2653 = vpow.pop %v2652
        %v2654 = vmul.f32 %v2648, 1.442695
        %v2655 = vpow.pop %v2654
        %v2656 = vmul.f32 %v2649, 1.442695
        %v2657 = vpow.pop %v2656
        %v2658 = vsel %vm816, %v2651, 0.0
        %2659 = vadd.xlane.f32.xlu0 %v2658
        %v2660 = vpop.xlane.xlu0 %2659
        %v2661 = vsel %vm816, %v2653, 0.0
        %2662 = vadd.xlane.f32.xlu0 %v2661
        %v2663 = vpop.xlane.xlu0 %2662
        %v2664 = vsel %vm816, %v2655, 0.0
        %2665 = vadd.xlane.f32.xlu0 %v2664
        %v2666 = vpop.xlane.xlu0 %2665
        %v2667 = vsel %vm816, %v2657, 0.0
        %2668 = vadd.xlane.f32.xlu0 %v2667
        %v2669 = vpop.xlane.xlu0 %2668
        %v2670 = vrcp.pop %v2660
        %v2671 = vmul.f32 %v2660, %v2670
        %v2672 = vsub.f32 1.0, %v2671
        %v2673 = vmul.f32 %v2670, %v2672
        %v2674 = vadd.f32 %v2670, %v2673
        %vm2675 = vweird.f32 %v2660
        %vm2676 = vweird.f32 %v2670
        %vm2677 = vmor %vm2675, %vm2676
        %v2678 = vsel %vm2677, %v2670, %v2674
        %v2679 = vand.u32 2147483647, %v2660
        %vm2680 = vcmp.eq.f32.partialorder %v2679, 8.507059e+37
        %v2681 = vand.u32 %v2660, 2147483648
        %v2682 = vor.u32 1.1754944e-38, %v2681
        %v2683 = vsel %vm2680, %v2682, %v2678
        %v2684 = vmul.f32 %v2651, %v2683
        %v2685 = vrcp.pop %v2663
        %v2686 = vmul.f32 %v2663, %v2685
        %v2687 = vsub.f32 1.0, %v2686
        %v2688 = vmul.f32 %v2685, %v2687
        %v2689 = vadd.f32 %v2685, %v2688
        %vm2690 = vweird.f32 %v2663
        %vm2691 = vweird.f32 %v2685
        %vm2692 = vmor %vm2690, %vm2691
        %v2693 = vsel %vm2692, %v2685, %v2689
        %v2694 = vand.u32 2147483647, %v2663
        %vm2695 = vcmp.eq.f32.partialorder %v2694, 8.507059e+37
        %v2696 = vand.u32 %v2663, 2147483648
        %v2697 = vor.u32 1.1754944e-38, %v2696
        %v2698 = vsel %vm2695, %v2697, %v2693
        %v2699 = vmul.f32 %v2653, %v2698
        %v2700 = vrcp.pop %v2666
        %v2701 = vmul.f32 %v2666, %v2700
        %v2702 = vsub.f32 1.0, %v2701
        %v2703 = vmul.f32 %v2700, %v2702
        %v2704 = vadd.f32 %v2700, %v2703
        %vm2705 = vweird.f32 %v2666
        %vm2706 = vweird.f32 %v2700
        %vm2707 = vmor %vm2705, %vm2706
        %v2708 = vsel %vm2707, %v2700, %v2704
        %v2709 = vand.u32 2147483647, %v2666
        %vm2710 = vcmp.eq.f32.partialorder %v2709, 8.507059e+37
        %v2711 = vand.u32 %v2666, 2147483648
        %v2712 = vor.u32 1.1754944e-38, %v2711
        %v2713 = vsel %vm2710, %v2712, %v2708
        %v2714 = vmul.f32 %v2655, %v2713
        %v2715 = vrcp.pop %v2669
        %v2716 = vmul.f32 %v2669, %v2715
        %v2717 = vsub.f32 1.0, %v2716
        %v2718 = vmul.f32 %v2715, %v2717
        %v2719 = vadd.f32 %v2715, %v2718
        %vm2720 = vweird.f32 %v2669
        %vm2721 = vweird.f32 %v2715
        %vm2722 = vmor %vm2720, %vm2721
        %v2723 = vsel %vm2722, %v2715, %v2719
        %v2724 = vand.u32 2147483647, %v2669
        %vm2725 = vcmp.eq.f32.partialorder %v2724, 8.507059e+37
        %v2726 = vand.u32 %v2669, 2147483648
        %v2727 = vor.u32 1.1754944e-38, %v2726
        %v2728 = vsel %vm2725, %v2727, %v2723
        %v2729 = vmul.f32 %v2657, %v2728
        %v2730 = vpack.c.bf16 %v2684, %v2684
        %v2731 = vpack.c.bf16 %v2699, %v2699
        %v2732 = vpack.c.bf16 %v2714, %v2714
        %v2733 = vpack.c.bf16 %v2729, %v2729
        %v2735 = vsel %vm816, %v2730, 0
        %v2738 = vsel %vm1004, %v2546, 0
        %2740 = vmatpush.bf16.msra.mxu0 0
        %2741 = vmatpush.bf16.msra.mxu0 0
        %2742 = vmatpush.bf16.msra.mxu0 0
        %2743 = vmatpush.bf16.msra.mxu0 0
        %2744 = vmatpush.bf16.msra.mxu0 0
        %2745 = vmatpush.bf16.msra.mxu0 0
        %2746 = vmatpush.bf16.msra.mxu0 0
        %2747 = vmatpush.bf16.msra.mxu0 %v2738
        %2748 = vmatmul.bf16.gmra.mxu0 %v2735
        %v2749 = vpop.f32.mrf.mxu0
        %v2750 = vadd.f32 0.0, %v2749
        %v2751 = vpop.f32.mrf.mxu0
        %2752 = vdwg.mxu0
        %v2754 = vsel %vm816, %v2731, 0
        %v2757 = vsel %vm1004, %v2547, 0
        %2759 = vmatpush.bf16.msra.mxu0 0
        %2760 = vmatpush.bf16.msra.mxu0 0
        %2761 = vmatpush.bf16.msra.mxu0 0
        %2762 = vmatpush.bf16.msra.mxu0 0
        %2763 = vmatpush.bf16.msra.mxu0 0
        %2764 = vmatpush.bf16.msra.mxu0 0
        %2765 = vmatpush.bf16.msra.mxu0 0
        %2766 = vmatpush.bf16.msra.mxu0 %v2757
        %2767 = vmatmul.bf16.gmra.mxu0 %v2754
        %v2768 = vpop.f32.mrf.mxu0
        %v2769 = vadd.f32 0.0, %v2768
        %v2770 = vpop.f32.mrf.mxu0
        %2771 = vdwg.mxu0
        %v2773 = vsel %vm816, %v2732, 0
        %v2776 = vsel %vm1004, %v2548, 0
        %2778 = vmatpush.bf16.msra.mxu0 0
        %2779 = vmatpush.bf16.msra.mxu0 0
        %2780 = vmatpush.bf16.msra.mxu0 0
        %2781 = vmatpush.bf16.msra.mxu0 0
        %2782 = vmatpush.bf16.msra.mxu0 0
        %2783 = vmatpush.bf16.msra.mxu0 0
        %2784 = vmatpush.bf16.msra.mxu0 0
        %2785 = vmatpush.bf16.msra.mxu0 %v2776
        %2786 = vmatmul.bf16.gmra.mxu0 %v2773
        %v2787 = vpop.f32.mrf.mxu0
        %v2788 = vadd.f32 0.0, %v2787
        %v2789 = vpop.f32.mrf.mxu0
        %2790 = vdwg.mxu0
        %v2792 = vsel %vm816, %v2733, 0
        %v2795 = vsel %vm1004, %v2549, 0
        %2797 = vmatpush.bf16.msra.mxu0 0
        %2798 = vmatpush.bf16.msra.mxu0 0
        %2799 = vmatpush.bf16.msra.mxu0 0
        %2800 = vmatpush.bf16.msra.mxu0 0
        %2801 = vmatpush.bf16.msra.mxu0 0
        %2802 = vmatpush.bf16.msra.mxu0 0
        %2803 = vmatpush.bf16.msra.mxu0 0
        %2804 = vmatpush.bf16.msra.mxu0 %v2795
        %2805 = vmatmul.bf16.gmra.mxu0 %v2792
        %v2806 = vpop.f32.mrf.mxu0
        %v2807 = vadd.f32 0.0, %v2806
        %v2808 = vpop.f32.mrf.mxu0
        %2809 = vdwg.mxu0
        %s2810 = scalar_lea.vmem %s6, 32
        %v2811 = vld [vmem:[%s2810] sm:$0xf]
        %v2812 = vld [vmem:[%s2810 + $0x4] sm:$0xf]
        %v2813 = vld [vmem:[%s2810 + $0x8] sm:$0xf]
        %v2814 = vld [vmem:[%s2810 + $0xc] sm:$0xf]
        %v2815 = vpack.c.bf16 %v2750, %v2750
        %v2816 = vpack.c.bf16 %v2769, %v2769
        %v2817 = vpack.c.bf16 %v2788, %v2788
        %v2818 = vpack.c.bf16 %v2807, %v2807
        %v2820 = vsel %vm816, %v2815, 0
        %v2823 = vsel %vm1004, %v2811, 0
        %2825 = vmatpush.bf16.msra.mxu0 0
        %2826 = vmatpush.bf16.msra.mxu0 0
        %2827 = vmatpush.bf16.msra.mxu0 0
        %2828 = vmatpush.bf16.msra.mxu0 0
        %2829 = vmatpush.bf16.msra.mxu0 0
        %2830 = vmatpush.bf16.msra.mxu0 0
        %2831 = vmatpush.bf16.msra.mxu0 0
        %2832 = vmatpush.bf16.msra.mxu0 %v2823
        %2833 = vmatmul.bf16.gmra.mxu0 %v2820
        %v2834 = vpop.f32.mrf.mxu0
        %v2835 = vadd.f32 0.0, %v2834
        %v2836 = vpop.f32.mrf.mxu0
        %2837 = vdwg.mxu0
        %v2839 = vsel %vm816, %v2816, 0
        %v2842 = vsel %vm1004, %v2812, 0
        %2844 = vmatpush.bf16.msra.mxu0 0
        %2845 = vmatpush.bf16.msra.mxu0 0
        %2846 = vmatpush.bf16.msra.mxu0 0
        %2847 = vmatpush.bf16.msra.mxu0 0
        %2848 = vmatpush.bf16.msra.mxu0 0
        %2849 = vmatpush.bf16.msra.mxu0 0
        %2850 = vmatpush.bf16.msra.mxu0 0
        %2851 = vmatpush.bf16.msra.mxu0 %v2842
        %2852 = vmatmul.bf16.gmra.mxu0 %v2839
        %v2853 = vpop.f32.mrf.mxu0
        %v2854 = vadd.f32 0.0, %v2853
        %v2855 = vpop.f32.mrf.mxu0
        %2856 = vdwg.mxu0
        %v2858 = vsel %vm816, %v2817, 0
        %v2861 = vsel %vm1004, %v2813, 0
        %2863 = vmatpush.bf16.msra.mxu0 0
        %2864 = vmatpush.bf16.msra.mxu0 0
        %2865 = vmatpush.bf16.msra.mxu0 0
        %2866 = vmatpush.bf16.msra.mxu0 0
        %2867 = vmatpush.bf16.msra.mxu0 0
        %2868 = vmatpush.bf16.msra.mxu0 0
        %2869 = vmatpush.bf16.msra.mxu0 0
        %2870 = vmatpush.bf16.msra.mxu0 %v2861
        %2871 = vmatmul.bf16.gmra.mxu0 %v2858
        %v2872 = vpop.f32.mrf.mxu0
        %v2873 = vadd.f32 0.0, %v2872
        %v2874 = vpop.f32.mrf.mxu0
        %2875 = vdwg.mxu0
        %v2877 = vsel %vm816, %v2818, 0
        %v2880 = vsel %vm1004, %v2814, 0
        %2882 = vmatpush.bf16.msra.mxu0 0
        %2883 = vmatpush.bf16.msra.mxu0 0
        %2884 = vmatpush.bf16.msra.mxu0 0
        %2885 = vmatpush.bf16.msra.mxu0 0
        %2886 = vmatpush.bf16.msra.mxu0 0
        %2887 = vmatpush.bf16.msra.mxu0 0
        %2888 = vmatpush.bf16.msra.mxu0 0
        %2889 = vmatpush.bf16.msra.mxu0 %v2880
        %2890 = vmatmul.bf16.gmra.mxu0 %v2877
        %v2891 = vpop.f32.mrf.mxu0
        %v2892 = vadd.f32 0.0, %v2891
        %v2893 = vpop.f32.mrf.mxu0
        %2894 = vdwg.mxu0
        %v2895 = vsel %vm450, %v2835, 0.0
        %v2896 = vsel %vm450, %v2854, 0.0
        %v2897 = vadd.f32 %v2895, %v2896
        %v2898 = vsel %vm450, %v2873, 0.0
        %v2899 = vadd.f32 %v2897, %v2898
        %v2900 = vsel %vm450, %v2892, 0.0
        %v2901 = vadd.f32 %v2899, %v2900
        %v2902 = vperm.slane %v2139, 6
        %v2903 = vadd.f32 %v2901, %v2902
        %v2904 = vadd.f32 %v2137, %v2903
        %v2905 = vsel %vm450, %v2904, 0.0
        %2906 = vadd.xlane.f32.xlu0 %v2905
        %v2907 = vpop.xlane.xlu0 %2906
        %v2908 = vmul.f32 %v2907, %v1181
        %v2909 = vsub.f32 %v2904, %v2908
        %v2910 = vmul.f32 %v2909, %v2909
        %v2911 = vsel %vm450, %v2910, 0.0
        %2912 = vadd.xlane.f32.xlu0 %v2911
        %v2913 = vpop.xlane.xlu0 %2912
        %v2914 = vmul.f32 %v2913, %v1181
        %v2915 = vadd.f32 %v2914, 1e-05
        %v2916 = vrsqrt.pop %v2915
        %v2917 = vmul.f32 %v2916, %v2915
        %v2918 = vmul.f32 %v2917, %v2916
        %v2919 = vmul.f32 0.5, %v2918
        %v2920 = vsub.f32 1.5, %v2919
        %v2921 = vmul.f32 %v2916, %v2920
        %vm2922 = vweird.f32 %v2915
        %vm2923 = vweird.f32 %v2916
        %vm2924 = vmor %vm2922, %vm2923
        %v2925 = vsel %vm2924, %v2916, %v2921
        %v2926 = vmul.f32 %v2909, %v2925
        %v2927 = vperm.slane %v2139, 0
        %v2928 = vmul.f32 %v2926, %v2927
        %v2929 = vperm.slane %v2139, 3
        %v2930 = vadd.f32 %v2928, %v2929
        %v2931 = vpack.c.bf16 %v2930, %v2930
        %s2932 = scalar_lea.vmem %s4, 576
        %v2933 = vld [vmem:[%s2932] sm:$0xf]
        %v2934 = vld [vmem:[%s2932 + $0x4] sm:$0xf]
        %v2935 = vld [vmem:[%s2932 + $0x8] sm:$0xf]
        %v2936 = vld [vmem:[%s2932 + $0xc] sm:$0xf]
        %v2937 = vld [vmem:[%s2932 + $0x10] sm:$0xf]
        %v2938 = vld [vmem:[%s2932 + $0x14] sm:$0xf]
        %v2939 = vld [vmem:[%s2932 + $0x18] sm:$0xf]
        %v2940 = vld [vmem:[%s2932 + $0x1c] sm:$0xf]
        %v2941 = vld [vmem:[%s2932 + $0x20] sm:$0xf]
        %v2942 = vld [vmem:[%s2932 + $0x24] sm:$0xf]
        %v2943 = vld [vmem:[%s2932 + $0x28] sm:$0xf]
        %v2944 = vld [vmem:[%s2932 + $0x2c] sm:$0xf]
        %v2945 = vld [vmem:[%s2932 + $0x30] sm:$0xf]
        %v2946 = vld [vmem:[%s2932 + $0x34] sm:$0xf]
        %v2947 = vld [vmem:[%s2932 + $0x38] sm:$0xf]
        %v2948 = vld [vmem:[%s2932 + $0x3c] sm:$0xf]
        %s2949 = scalar_lea.vmem %s5, 36
        %v2950 = vld [vmem:[%s2949] sm:$0xf]
        %v2952 = vrot.slane %v2950, 1
        %v2953 = vrot.slane %v2950, 2
        %v2954 = vrot.slane %v2950, 3
        %v2955 = vperm.slane %v2950, 0
        %v2956 = vperm.slane %v2952, 0
        %v2957 = vperm.slane %v2953, 0
        %v2958 = vperm.slane %v2954, 0
        %v2967 = vunpack.c.l.b16 %v2933
        %v2968 = vunpack.c.l.b16 %v2934
        %v2969 = vunpack.c.l.b16 %v2935
        %v2970 = vunpack.c.l.b16 %v2936
        %v2971 = vpack.c.b16 %v2968, %v2967
        %v2972 = vpack.c.b16 %v2970, %v2969
        %v2976 = vsel %vm450, %v2931, 0
        %2978 = vmatpush.bf16.msra.mxu0 0
        %2979 = vmatpush.bf16.msra.mxu0 0
        %2980 = vmatpush.bf16.msra.mxu0 0
        %2981 = vmatpush.bf16.msra.mxu0 0
        %2982 = vmatpush.bf16.msra.mxu0 0
        %2983 = vmatpush.bf16.msra.mxu0 0
        %2984 = vmatpush.bf16.msra.mxu0 %v2972
        %2985 = vmatpush.bf16.msra.mxu0 %v2971
        %2986 = vmatmul.bf16.gmra.mxu0 %v2976
        %v2987 = vpop.f32.mrf.mxu0
        %v2988 = vadd.f32 %v2955, %v2987
        %v2989 = vpop.f32.mrf.mxu0
        %2990 = vdwg.mxu0
        %v2995 = vunpack.c.l.b16 %v2937
        %v2996 = vunpack.c.l.b16 %v2938
        %v2997 = vunpack.c.l.b16 %v2939
        %v2998 = vunpack.c.l.b16 %v2940
        %v2999 = vpack.c.b16 %v2996, %v2995
        %v3000 = vpack.c.b16 %v2998, %v2997
        %3003 = vmatpush.bf16.msra.mxu0 0
        %3004 = vmatpush.bf16.msra.mxu0 0
        %3005 = vmatpush.bf16.msra.mxu0 0
        %3006 = vmatpush.bf16.msra.mxu0 0
        %3007 = vmatpush.bf16.msra.mxu0 0
        %3008 = vmatpush.bf16.msra.mxu0 0
        %3009 = vmatpush.bf16.msra.mxu0 %v3000
        %3010 = vmatpush.bf16.msra.mxu0 %v2999
        %3011 = vmatmul.bf16.gmra.mxu0 %v2976
        %v3012 = vpop.f32.mrf.mxu0
        %v3013 = vadd.f32 %v2956, %v3012
        %v3014 = vpop.f32.mrf.mxu0
        %3015 = vdwg.mxu0
        %v3020 = vunpack.c.l.b16 %v2941
        %v3021 = vunpack.c.l.b16 %v2942
        %v3022 = vunpack.c.l.b16 %v2943
        %v3023 = vunpack.c.l.b16 %v2944
        %v3024 = vpack.c.b16 %v3021, %v3020
        %v3025 = vpack.c.b16 %v3023, %v3022
        %3028 = vmatpush.bf16.msra.mxu0 0
        %3029 = vmatpush.bf16.msra.mxu0 0
        %3030 = vmatpush.bf16.msra.mxu0 0
        %3031 = vmatpush.bf16.msra.mxu0 0
        %3032 = vmatpush.bf16.msra.mxu0 0
        %3033 = vmatpush.bf16.msra.mxu0 0
        %3034 = vmatpush.bf16.msra.mxu0 %v3025
        %3035 = vmatpush.bf16.msra.mxu0 %v3024
        %3036 = vmatmul.bf16.gmra.mxu0 %v2976
        %v3037 = vpop.f32.mrf.mxu0
        %v3038 = vadd.f32 %v2957, %v3037
        %v3039 = vpop.f32.mrf.mxu0
        %3040 = vdwg.mxu0
        %v3045 = vunpack.c.l.b16 %v2945
        %v3046 = vunpack.c.l.b16 %v2946
        %v3047 = vunpack.c.l.b16 %v2947
        %v3048 = vunpack.c.l.b16 %v2948
        %v3049 = vpack.c.b16 %v3046, %v3045
        %v3050 = vpack.c.b16 %v3048, %v3047
        %3053 = vmatpush.bf16.msra.mxu0 0
        %3054 = vmatpush.bf16.msra.mxu0 0
        %3055 = vmatpush.bf16.msra.mxu0 0
        %3056 = vmatpush.bf16.msra.mxu0 0
        %3057 = vmatpush.bf16.msra.mxu0 0
        %3058 = vmatpush.bf16.msra.mxu0 0
        %3059 = vmatpush.bf16.msra.mxu0 %v3050
        %3060 = vmatpush.bf16.msra.mxu0 %v3049
        %3061 = vmatmul.bf16.gmra.mxu0 %v2976
        %v3062 = vpop.f32.mrf.mxu0
        %v3063 = vadd.f32 %v2958, %v3062
        %v3064 = vpop.f32.mrf.mxu0
        %3065 = vdwg.mxu0
        %s3066 = scalar_lea.vmem %s4, 640
        %v3067 = vld [vmem:[%s3066] sm:$0xf]
        %v3068 = vld [vmem:[%s3066 + $0x4] sm:$0xf]
        %v3069 = vld [vmem:[%s3066 + $0x8] sm:$0xf]
        %v3070 = vld [vmem:[%s3066 + $0xc] sm:$0xf]
        %v3071 = vld [vmem:[%s3066 + $0x10] sm:$0xf]
        %v3072 = vld [vmem:[%s3066 + $0x14] sm:$0xf]
        %v3073 = vld [vmem:[%s3066 + $0x18] sm:$0xf]
        %v3074 = vld [vmem:[%s3066 + $0x1c] sm:$0xf]
        %v3075 = vld [vmem:[%s3066 + $0x20] sm:$0xf]
        %v3076 = vld [vmem:[%s3066 + $0x24] sm:$0xf]
        %v3077 = vld [vmem:[%s3066 + $0x28] sm:$0xf]
        %v3078 = vld [vmem:[%s3066 + $0x2c] sm:$0xf]
        %v3079 = vld [vmem:[%s3066 + $0x30] sm:$0xf]
        %v3080 = vld [vmem:[%s3066 + $0x34] sm:$0xf]
        %v3081 = vld [vmem:[%s3066 + $0x38] sm:$0xf]
        %v3082 = vld [vmem:[%s3066 + $0x3c] sm:$0xf]
        %s3083 = scalar_lea.vmem %s5, 40
        %v3084 = vld [vmem:[%s3083] sm:$0xf]
        %v3086 = vrot.slane %v3084, 1
        %v3087 = vrot.slane %v3084, 2
        %v3088 = vrot.slane %v3084, 3
        %v3089 = vperm.slane %v3084, 0
        %v3090 = vperm.slane %v3086, 0
        %v3091 = vperm.slane %v3087, 0
        %v3092 = vperm.slane %v3088, 0
        %v3101 = vunpack.c.l.b16 %v3067
        %v3102 = vunpack.c.l.b16 %v3068
        %v3103 = vunpack.c.l.b16 %v3069
        %v3104 = vunpack.c.l.b16 %v3070
        %v3105 = vpack.c.b16 %v3102, %v3101
        %v3106 = vpack.c.b16 %v3104, %v3103
        %3109 = vmatpush.bf16.msra.mxu0 0
        %3110 = vmatpush.bf16.msra.mxu0 0
        %3111 = vmatpush.bf16.msra.mxu0 0
        %3112 = vmatpush.bf16.msra.mxu0 0
        %3113 = vmatpush.bf16.msra.mxu0 0
        %3114 = vmatpush.bf16.msra.mxu0 0
        %3115 = vmatpush.bf16.msra.mxu0 %v3106
        %3116 = vmatpush.bf16.msra.mxu0 %v3105
        %3117 = vmatmul.bf16.gmra.mxu0 %v1384
        %v3118 = vpop.f32.mrf.mxu0
        %v3119 = vadd.f32 %v3089, %v3118
        %v3120 = vpop.f32.mrf.mxu0
        %3121 = vdwg.mxu0
        %v3126 = vunpack.c.l.b16 %v3071
        %v3127 = vunpack.c.l.b16 %v3072
        %v3128 = vunpack.c.l.b16 %v3073
        %v3129 = vunpack.c.l.b16 %v3074
        %v3130 = vpack.c.b16 %v3127, %v3126
        %v3131 = vpack.c.b16 %v3129, %v3128
        %3134 = vmatpush.bf16.msra.mxu0 0
        %3135 = vmatpush.bf16.msra.mxu0 0
        %3136 = vmatpush.bf16.msra.mxu0 0
        %3137 = vmatpush.bf16.msra.mxu0 0
        %3138 = vmatpush.bf16.msra.mxu0 0
        %3139 = vmatpush.bf16.msra.mxu0 0
        %3140 = vmatpush.bf16.msra.mxu0 %v3131
        %3141 = vmatpush.bf16.msra.mxu0 %v3130
        %3142 = vmatmul.bf16.gmra.mxu0 %v1384
        %v3143 = vpop.f32.mrf.mxu0
        %v3144 = vadd.f32 %v3090, %v3143
        %v3145 = vpop.f32.mrf.mxu0
        %3146 = vdwg.mxu0
        %v3151 = vunpack.c.l.b16 %v3075
        %v3152 = vunpack.c.l.b16 %v3076
        %v3153 = vunpack.c.l.b16 %v3077
        %v3154 = vunpack.c.l.b16 %v3078
        %v3155 = vpack.c.b16 %v3152, %v3151
        %v3156 = vpack.c.b16 %v3154, %v3153
        %3159 = vmatpush.bf16.msra.mxu0 0
        %3160 = vmatpush.bf16.msra.mxu0 0
        %3161 = vmatpush.bf16.msra.mxu0 0
        %3162 = vmatpush.bf16.msra.mxu0 0
        %3163 = vmatpush.bf16.msra.mxu0 0
        %3164 = vmatpush.bf16.msra.mxu0 0
        %3165 = vmatpush.bf16.msra.mxu0 %v3156
        %3166 = vmatpush.bf16.msra.mxu0 %v3155
        %3167 = vmatmul.bf16.gmra.mxu0 %v1384
        %v3168 = vpop.f32.mrf.mxu0
        %v3169 = vadd.f32 %v3091, %v3168
        %v3170 = vpop.f32.mrf.mxu0
        %3171 = vdwg.mxu0
        %v3176 = vunpack.c.l.b16 %v3079
        %v3177 = vunpack.c.l.b16 %v3080
        %v3178 = vunpack.c.l.b16 %v3081
        %v3179 = vunpack.c.l.b16 %v3082
        %v3180 = vpack.c.b16 %v3177, %v3176
        %v3181 = vpack.c.b16 %v3179, %v3178
        %3184 = vmatpush.bf16.msra.mxu0 0
        %3185 = vmatpush.bf16.msra.mxu0 0
        %3186 = vmatpush.bf16.msra.mxu0 0
        %3187 = vmatpush.bf16.msra.mxu0 0
        %3188 = vmatpush.bf16.msra.mxu0 0
        %3189 = vmatpush.bf16.msra.mxu0 0
        %3190 = vmatpush.bf16.msra.mxu0 %v3181
        %3191 = vmatpush.bf16.msra.mxu0 %v3180
        %3192 = vmatmul.bf16.gmra.mxu0 %v1384
        %v3193 = vpop.f32.mrf.mxu0
        %v3194 = vadd.f32 %v3092, %v3193
        %v3195 = vpop.f32.mrf.mxu0
        %3196 = vdwg.mxu0
        %s3197 = scalar_lea.vmem %s4, 704
        %v3198 = vld [vmem:[%s3197] sm:$0xf]
        %v3199 = vld [vmem:[%s3197 + $0x4] sm:$0xf]
        %v3200 = vld [vmem:[%s3197 + $0x8] sm:$0xf]
        %v3201 = vld [vmem:[%s3197 + $0xc] sm:$0xf]
        %v3202 = vld [vmem:[%s3197 + $0x10] sm:$0xf]
        %v3203 = vld [vmem:[%s3197 + $0x14] sm:$0xf]
        %v3204 = vld [vmem:[%s3197 + $0x18] sm:$0xf]
        %v3205 = vld [vmem:[%s3197 + $0x1c] sm:$0xf]
        %v3206 = vld [vmem:[%s3197 + $0x20] sm:$0xf]
        %v3207 = vld [vmem:[%s3197 + $0x24] sm:$0xf]
        %v3208 = vld [vmem:[%s3197 + $0x28] sm:$0xf]
        %v3209 = vld [vmem:[%s3197 + $0x2c] sm:$0xf]
        %v3210 = vld [vmem:[%s3197 + $0x30] sm:$0xf]
        %v3211 = vld [vmem:[%s3197 + $0x34] sm:$0xf]
        %v3212 = vld [vmem:[%s3197 + $0x38] sm:$0xf]
        %v3213 = vld [vmem:[%s3197 + $0x3c] sm:$0xf]
        %s3214 = scalar_lea.vmem %s5, 44
        %v3215 = vld [vmem:[%s3214] sm:$0xf]
        %v3217 = vrot.slane %v3215, 1
        %v3218 = vrot.slane %v3215, 2
        %v3219 = vrot.slane %v3215, 3
        %v3220 = vperm.slane %v3215, 0
        %v3221 = vperm.slane %v3217, 0
        %v3222 = vperm.slane %v3218, 0
        %v3223 = vperm.slane %v3219, 0
        %v3232 = vunpack.c.l.b16 %v3198
        %v3233 = vunpack.c.l.b16 %v3199
        %v3234 = vunpack.c.l.b16 %v3200
        %v3235 = vunpack.c.l.b16 %v3201
        %v3236 = vpack.c.b16 %v3233, %v3232
        %v3237 = vpack.c.b16 %v3235, %v3234
        %3240 = vmatpush.bf16.msra.mxu0 0
        %3241 = vmatpush.bf16.msra.mxu0 0
        %3242 = vmatpush.bf16.msra.mxu0 0
        %3243 = vmatpush.bf16.msra.mxu0 0
        %3244 = vmatpush.bf16.msra.mxu0 0
        %3245 = vmatpush.bf16.msra.mxu0 0
        %3246 = vmatpush.bf16.msra.mxu0 %v3237
        %3247 = vmatpush.bf16.msra.mxu0 %v3236
        %3248 = vmatmul.bf16.gmra.mxu0 %v1384
        %v3249 = vpop.f32.mrf.mxu0
        %v3250 = vadd.f32 %v3220, %v3249
        %v3251 = vpop.f32.mrf.mxu0
        %3252 = vdwg.mxu0
        %v3257 = vunpack.c.l.b16 %v3202
        %v3258 = vunpack.c.l.b16 %v3203
        %v3259 = vunpack.c.l.b16 %v3204
        %v3260 = vunpack.c.l.b16 %v3205
        %v3261 = vpack.c.b16 %v3258, %v3257
        %v3262 = vpack.c.b16 %v3260, %v3259
        %3265 = vmatpush.bf16.msra.mxu0 0
        %3266 = vmatpush.bf16.msra.mxu0 0
        %3267 = vmatpush.bf16.msra.mxu0 0
        %3268 = vmatpush.bf16.msra.mxu0 0
        %3269 = vmatpush.bf16.msra.mxu0 0
        %3270 = vmatpush.bf16.msra.mxu0 0
        %3271 = vmatpush.bf16.msra.mxu0 %v3262
        %3272 = vmatpush.bf16.msra.mxu0 %v3261
        %3273 = vmatmul.bf16.gmra.mxu0 %v1384
        %v3274 = vpop.f32.mrf.mxu0
        %v3275 = vadd.f32 %v3221, %v3274
        %v3276 = vpop.f32.mrf.mxu0
        %3277 = vdwg.mxu0
        %v3282 = vunpack.c.l.b16 %v3206
        %v3283 = vunpack.c.l.b16 %v3207
        %v3284 = vunpack.c.l.b16 %v3208
        %v3285 = vunpack.c.l.b16 %v3209
        %v3286 = vpack.c.b16 %v3283, %v3282
        %v3287 = vpack.c.b16 %v3285, %v3284
        %3290 = vmatpush.bf16.msra.mxu0 0
        %3291 = vmatpush.bf16.msra.mxu0 0
        %3292 = vmatpush.bf16.msra.mxu0 0
        %3293 = vmatpush.bf16.msra.mxu0 0
        %3294 = vmatpush.bf16.msra.mxu0 0
        %3295 = vmatpush.bf16.msra.mxu0 0
        %3296 = vmatpush.bf16.msra.mxu0 %v3287
        %3297 = vmatpush.bf16.msra.mxu0 %v3286
        %3298 = vmatmul.bf16.gmra.mxu0 %v1384
        %v3299 = vpop.f32.mrf.mxu0
        %v3300 = vadd.f32 %v3222, %v3299
        %v3301 = vpop.f32.mrf.mxu0
        %3302 = vdwg.mxu0
        %v3307 = vunpack.c.l.b16 %v3210
        %v3308 = vunpack.c.l.b16 %v3211
        %v3309 = vunpack.c.l.b16 %v3212
        %v3310 = vunpack.c.l.b16 %v3213
        %v3311 = vpack.c.b16 %v3308, %v3307
        %v3312 = vpack.c.b16 %v3310, %v3309
        %3315 = vmatpush.bf16.msra.mxu0 0
        %3316 = vmatpush.bf16.msra.mxu0 0
        %3317 = vmatpush.bf16.msra.mxu0 0
        %3318 = vmatpush.bf16.msra.mxu0 0
        %3319 = vmatpush.bf16.msra.mxu0 0
        %3320 = vmatpush.bf16.msra.mxu0 0
        %3321 = vmatpush.bf16.msra.mxu0 %v3312
        %3322 = vmatpush.bf16.msra.mxu0 %v3311
        %3323 = vmatmul.bf16.gmra.mxu0 %v1384
        %v3324 = vpop.f32.mrf.mxu0
        %v3325 = vadd.f32 %v3223, %v3324
        %v3326 = vpop.f32.mrf.mxu0
        %3327 = vdwg.mxu0
        %v3328 = vpack.c.bf16 %v2988, %v2988
        %v3329 = vpack.c.bf16 %v3013, %v3013
        %v3330 = vpack.c.bf16 %v3038, %v3038
        %v3331 = vpack.c.bf16 %v3063, %v3063
        %v3332 = vpack.c.bf16 %v3119, %v3119
        %v3333 = vpack.c.bf16 %v3144, %v3144
        %v3334 = vpack.c.bf16 %v3169, %v3169
        %v3335 = vpack.c.bf16 %v3194, %v3194
        %v3336 = vpack.c.bf16 %v3250, %v3250
        %v3337 = vpack.c.bf16 %v3275, %v3275
        %v3338 = vpack.c.bf16 %v3300, %v3300
        %v3339 = vpack.c.bf16 %v3325, %v3325
        %v3341 = vsel %vm816, %v3328, 0
        %v3344 = vsel %vm816, %v3332, 0
        %3346 = vmatpush.bf16.xpose.msra.mxu0 0
        %3347 = vmatpush.bf16.xpose.msra.mxu0 0
        %3348 = vmatpush.bf16.xpose.msra.mxu0 0
        %3349 = vmatpush.bf16.xpose.msra.mxu0 0
        %3350 = vmatpush.bf16.xpose.msra.mxu0 0
        %3351 = vmatpush.bf16.xpose.msra.mxu0 0
        %3352 = vmatpush.bf16.xpose.msra.mxu0 0
        %3353 = vmatpush.bf16.xpose.msra.mxu0 %v3344
        %3354 = vmatmul.bf16.gmra.mxu0 %v3341
        %v3355 = vpop.f32.mrf.mxu0
        %v3356 = vadd.f32 0.0, %v3355
        %v3357 = vpop.f32.mrf.mxu0
        %3358 = vdwg.mxu0
        %v3360 = vsel %vm816, %v3329, 0
        %v3363 = vsel %vm816, %v3333, 0
        %3365 = vmatpush.bf16.xpose.msra.mxu0 0
        %3366 = vmatpush.bf16.xpose.msra.mxu0 0
        %3367 = vmatpush.bf16.xpose.msra.mxu0 0
        %3368 = vmatpush.bf16.xpose.msra.mxu0 0
        %3369 = vmatpush.bf16.xpose.msra.mxu0 0
        %3370 = vmatpush.bf16.xpose.msra.mxu0 0
        %3371 = vmatpush.bf16.xpose.msra.mxu0 0
        %3372 = vmatpush.bf16.xpose.msra.mxu0 %v3363
        %3373 = vmatmul.bf16.gmra.mxu0 %v3360
        %v3374 = vpop.f32.mrf.mxu0
        %v3375 = vadd.f32 0.0, %v3374
        %v3376 = vpop.f32.mrf.mxu0
        %3377 = vdwg.mxu0
        %v3379 = vsel %vm816, %v3330, 0
        %v3382 = vsel %vm816, %v3334, 0
        %3384 = vmatpush.bf16.xpose.msra.mxu0 0
        %3385 = vmatpush.bf16.xpose.msra.mxu0 0
        %3386 = vmatpush.bf16.xpose.msra.mxu0 0
        %3387 = vmatpush.bf16.xpose.msra.mxu0 0
        %3388 = vmatpush.bf16.xpose.msra.mxu0 0
        %3389 = vmatpush.bf16.xpose.msra.mxu0 0
        %3390 = vmatpush.bf16.xpose.msra.mxu0 0
        %3391 = vmatpush.bf16.xpose.msra.mxu0 %v3382
        %3392 = vmatmul.bf16.gmra.mxu0 %v3379
        %v3393 = vpop.f32.mrf.mxu0
        %v3394 = vadd.f32 0.0, %v3393
        %v3395 = vpop.f32.mrf.mxu0
        %3396 = vdwg.mxu0
        %v3398 = vsel %vm816, %v3331, 0
        %v3401 = vsel %vm816, %v3335, 0
        %3403 = vmatpush.bf16.xpose.msra.mxu0 0
        %3404 = vmatpush.bf16.xpose.msra.mxu0 0
        %3405 = vmatpush.bf16.xpose.msra.mxu0 0
        %3406 = vmatpush.bf16.xpose.msra.mxu0 0
        %3407 = vmatpush.bf16.xpose.msra.mxu0 0
        %3408 = vmatpush.bf16.xpose.msra.mxu0 0
        %3409 = vmatpush.bf16.xpose.msra.mxu0 0
        %3410 = vmatpush.bf16.xpose.msra.mxu0 %v3401
        %3411 = vmatmul.bf16.gmra.mxu0 %v3398
        %v3412 = vpop.f32.mrf.mxu0
        %v3413 = vadd.f32 0.0, %v3412
        %v3414 = vpop.f32.mrf.mxu0
        %3415 = vdwg.mxu0
        %v3416 = vmul.f32 %v3356, 0.35355338
        %v3417 = vmul.f32 %v3375, 0.35355338
        %v3418 = vmul.f32 %v3394, 0.35355338
        %v3419 = vmul.f32 %v3413, 0.35355338
        %v3420 = vsel %vm816, %v3416, -inf
        %3421 = vmax.xlane.f32.xlu0 %v3420
        %v3422 = vpop.xlane.xlu0 %3421
        %v3423 = vsel %vm816, %v3417, -inf
        %3424 = vmax.xlane.f32.xlu0 %v3423
        %v3425 = vpop.xlane.xlu0 %3424
        %v3426 = vsel %vm816, %v3418, -inf
        %3427 = vmax.xlane.f32.xlu0 %v3426
        %v3428 = vpop.xlane.xlu0 %3427
        %v3429 = vsel %vm816, %v3419, -inf
        %3430 = vmax.xlane.f32.xlu0 %v3429
        %v3431 = vpop.xlane.xlu0 %3430
        %v3432 = vsub.f32 %v3416, %v3422
        %v3433 = vsub.f32 %v3417, %v3425
        %v3434 = vsub.f32 %v3418, %v3428
        %v3435 = vsub.f32 %v3419, %v3431
        %v3436 = vmul.f32 %v3432, 1.442695
        %v3437 = vpow.pop %v3436
        %v3438 = vmul.f32 %v3433, 1.442695
        %v3439 = vpow.pop %v3438
        %v3440 = vmul.f32 %v3434, 1.442695
        %v3441 = vpow.pop %v3440
        %v3442 = vmul.f32 %v3435, 1.442695
        %v3443 = vpow.pop %v3442
        %v3444 = vsel %vm816, %v3437, 0.0
        %3445 = vadd.xlane.f32.xlu0 %v3444
        %v3446 = vpop.xlane.xlu0 %3445
        %v3447 = vsel %vm816, %v3439, 0.0
        %3448 = vadd.xlane.f32.xlu0 %v3447
        %v3449 = vpop.xlane.xlu0 %3448
        %v3450 = vsel %vm816, %v3441, 0.0
        %3451 = vadd.xlane.f32.xlu0 %v3450
        %v3452 = vpop.xlane.xlu0 %3451
        %v3453 = vsel %vm816, %v3443, 0.0
        %3454 = vadd.xlane.f32.xlu0 %v3453
        %v3455 = vpop.xlane.xlu0 %3454
        %v3456 = vrcp.pop %v3446
        %v3457 = vmul.f32 %v3446, %v3456
        %v3458 = vsub.f32 1.0, %v3457
        %v3459 = vmul.f32 %v3456, %v3458
        %v3460 = vadd.f32 %v3456, %v3459
        %vm3461 = vweird.f32 %v3446
        %vm3462 = vweird.f32 %v3456
        %vm3463 = vmor %vm3461, %vm3462
        %v3464 = vsel %vm3463, %v3456, %v3460
        %v3465 = vand.u32 2147483647, %v3446
        %vm3466 = vcmp.eq.f32.partialorder %v3465, 8.507059e+37
        %v3467 = vand.u32 %v3446, 2147483648
        %v3468 = vor.u32 1.1754944e-38, %v3467
        %v3469 = vsel %vm3466, %v3468, %v3464
        %v3470 = vmul.f32 %v3437, %v3469
        %v3471 = vrcp.pop %v3449
        %v3472 = vmul.f32 %v3449, %v3471
        %v3473 = vsub.f32 1.0, %v3472
        %v3474 = vmul.f32 %v3471, %v3473
        %v3475 = vadd.f32 %v3471, %v3474
        %vm3476 = vweird.f32 %v3449
        %vm3477 = vweird.f32 %v3471
        %vm3478 = vmor %vm3476, %vm3477
        %v3479 = vsel %vm3478, %v3471, %v3475
        %v3480 = vand.u32 2147483647, %v3449
        %vm3481 = vcmp.eq.f32.partialorder %v3480, 8.507059e+37
        %v3482 = vand.u32 %v3449, 2147483648
        %v3483 = vor.u32 1.1754944e-38, %v3482
        %v3484 = vsel %vm3481, %v3483, %v3479
        %v3485 = vmul.f32 %v3439, %v3484
        %v3486 = vrcp.pop %v3452
        %v3487 = vmul.f32 %v3452, %v3486
        %v3488 = vsub.f32 1.0, %v3487
        %v3489 = vmul.f32 %v3486, %v3488
        %v3490 = vadd.f32 %v3486, %v3489
        %vm3491 = vweird.f32 %v3452
        %vm3492 = vweird.f32 %v3486
        %vm3493 = vmor %vm3491, %vm3492
        %v3494 = vsel %vm3493, %v3486, %v3490
        %v3495 = vand.u32 2147483647, %v3452
        %vm3496 = vcmp.eq.f32.partialorder %v3495, 8.507059e+37
        %v3497 = vand.u32 %v3452, 2147483648
        %v3498 = vor.u32 1.1754944e-38, %v3497
        %v3499 = vsel %vm3496, %v3498, %v3494
        %v3500 = vmul.f32 %v3441, %v3499
        %v3501 = vrcp.pop %v3455
        %v3502 = vmul.f32 %v3455, %v3501
        %v3503 = vsub.f32 1.0, %v3502
        %v3504 = vmul.f32 %v3501, %v3503
        %v3505 = vadd.f32 %v3501, %v3504
        %vm3506 = vweird.f32 %v3455
        %vm3507 = vweird.f32 %v3501
        %vm3508 = vmor %vm3506, %vm3507
        %v3509 = vsel %vm3508, %v3501, %v3505
        %v3510 = vand.u32 2147483647, %v3455
        %vm3511 = vcmp.eq.f32.partialorder %v3510, 8.507059e+37
        %v3512 = vand.u32 %v3455, 2147483648
        %v3513 = vor.u32 1.1754944e-38, %v3512
        %v3514 = vsel %vm3511, %v3513, %v3509
        %v3515 = vmul.f32 %v3443, %v3514
        %v3516 = vpack.c.bf16 %v3470, %v3470
        %v3517 = vpack.c.bf16 %v3485, %v3485
        %v3518 = vpack.c.bf16 %v3500, %v3500
        %v3519 = vpack.c.bf16 %v3515, %v3515
        %v3521 = vsel %vm816, %v3516, 0
        %v3524 = vsel %vm1004, %v3336, 0
        %3526 = vmatpush.bf16.msra.mxu0 0
        %3527 = vmatpush.bf16.msra.mxu0 0
        %3528 = vmatpush.bf16.msra.mxu0 0
        %3529 = vmatpush.bf16.msra.mxu0 0
        %3530 = vmatpush.bf16.msra.mxu0 0
        %3531 = vmatpush.bf16.msra.mxu0 0
        %3532 = vmatpush.bf16.msra.mxu0 0
        %3533 = vmatpush.bf16.msra.mxu0 %v3524
        %3534 = vmatmul.bf16.gmra.mxu0 %v3521
        %v3535 = vpop.f32.mrf.mxu0
        %v3536 = vadd.f32 0.0, %v3535
        %v3537 = vpop.f32.mrf.mxu0
        %3538 = vdwg.mxu0
        %v3540 = vsel %vm816, %v3517, 0
        %v3543 = vsel %vm1004, %v3337, 0
        %3545 = vmatpush.bf16.msra.mxu0 0
        %3546 = vmatpush.bf16.msra.mxu0 0
        %3547 = vmatpush.bf16.msra.mxu0 0
        %3548 = vmatpush.bf16.msra.mxu0 0
        %3549 = vmatpush.bf16.msra.mxu0 0
        %3550 = vmatpush.bf16.msra.mxu0 0
        %3551 = vmatpush.bf16.msra.mxu0 0
        %3552 = vmatpush.bf16.msra.mxu0 %v3543
        %3553 = vmatmul.bf16.gmra.mxu0 %v3540
        %v3554 = vpop.f32.mrf.mxu0
        %v3555 = vadd.f32 0.0, %v3554
        %v3556 = vpop.f32.mrf.mxu0
        %3557 = vdwg.mxu0
        %v3559 = vsel %vm816, %v3518, 0
        %v3562 = vsel %vm1004, %v3338, 0
        %3564 = vmatpush.bf16.msra.mxu0 0
        %3565 = vmatpush.bf16.msra.mxu0 0
        %3566 = vmatpush.bf16.msra.mxu0 0
        %3567 = vmatpush.bf16.msra.mxu0 0
        %3568 = vmatpush.bf16.msra.mxu0 0
        %3569 = vmatpush.bf16.msra.mxu0 0
        %3570 = vmatpush.bf16.msra.mxu0 0
        %3571 = vmatpush.bf16.msra.mxu0 %v3562
        %3572 = vmatmul.bf16.gmra.mxu0 %v3559
        %v3573 = vpop.f32.mrf.mxu0
        %v3574 = vadd.f32 0.0, %v3573
        %v3575 = vpop.f32.mrf.mxu0
        %3576 = vdwg.mxu0
        %v3578 = vsel %vm816, %v3519, 0
        %v3581 = vsel %vm1004, %v3339, 0
        %3583 = vmatpush.bf16.msra.mxu0 0
        %3584 = vmatpush.bf16.msra.mxu0 0
        %3585 = vmatpush.bf16.msra.mxu0 0
        %3586 = vmatpush.bf16.msra.mxu0 0
        %3587 = vmatpush.bf16.msra.mxu0 0
        %3588 = vmatpush.bf16.msra.mxu0 0
        %3589 = vmatpush.bf16.msra.mxu0 0
        %3590 = vmatpush.bf16.msra.mxu0 %v3581
        %3591 = vmatmul.bf16.gmra.mxu0 %v3578
        %v3592 = vpop.f32.mrf.mxu0
        %v3593 = vadd.f32 0.0, %v3592
        %v3594 = vpop.f32.mrf.mxu0
        %3595 = vdwg.mxu0
        %s3596 = scalar_lea.vmem %s6, 48
        %v3597 = vld [vmem:[%s3596] sm:$0xf]
        %v3598 = vld [vmem:[%s3596 + $0x4] sm:$0xf]
        %v3599 = vld [vmem:[%s3596 + $0x8] sm:$0xf]
        %v3600 = vld [vmem:[%s3596 + $0xc] sm:$0xf]
        %v3601 = vpack.c.bf16 %v3536, %v3536
        %v3602 = vpack.c.bf16 %v3555, %v3555
        %v3603 = vpack.c.bf16 %v3574, %v3574
        %v3604 = vpack.c.bf16 %v3593, %v3593
        %v3606 = vsel %vm816, %v3601, 0
        %v3609 = vsel %vm1004, %v3597, 0
        %3611 = vmatpush.bf16.msra.mxu0 0
        %3612 = vmatpush.bf16.msra.mxu0 0
        %3613 = vmatpush.bf16.msra.mxu0 0
        %3614 = vmatpush.bf16.msra.mxu0 0
        %3615 = vmatpush.bf16.msra.mxu0 0
        %3616 = vmatpush.bf16.msra.mxu0 0
        %3617 = vmatpush.bf16.msra.mxu0 0
        %3618 = vmatpush.bf16.msra.mxu0 %v3609
        %3619 = vmatmul.bf16.gmra.mxu0 %v3606
        %v3620 = vpop.f32.mrf.mxu0
        %v3621 = vadd.f32 0.0, %v3620
        %v3622 = vpop.f32.mrf.mxu0
        %3623 = vdwg.mxu0
        %v3625 = vsel %vm816, %v3602, 0
        %v3628 = vsel %vm1004, %v3598, 0
        %3630 = vmatpush.bf16.msra.mxu0 0
        %3631 = vmatpush.bf16.msra.mxu0 0
        %3632 = vmatpush.bf16.msra.mxu0 0
        %3633 = vmatpush.bf16.msra.mxu0 0
        %3634 = vmatpush.bf16.msra.mxu0 0
        %3635 = vmatpush.bf16.msra.mxu0 0
        %3636 = vmatpush.bf16.msra.mxu0 0
        %3637 = vmatpush.bf16.msra.mxu0 %v3628
        %3638 = vmatmul.bf16.gmra.mxu0 %v3625
        %v3639 = vpop.f32.mrf.mxu0
        %v3640 = vadd.f32 0.0, %v3639
        %v3641 = vpop.f32.mrf.mxu0
        %3642 = vdwg.mxu0
        %v3644 = vsel %vm816, %v3603, 0
        %v3647 = vsel %vm1004, %v3599, 0
        %3649 = vmatpush.bf16.msra.mxu0 0
        %3650 = vmatpush.bf16.msra.mxu0 0
        %3651 = vmatpush.bf16.msra.mxu0 0
        %3652 = vmatpush.bf16.msra.mxu0 0
        %3653 = vmatpush.bf16.msra.mxu0 0
        %3654 = vmatpush.bf16.msra.mxu0 0
        %3655 = vmatpush.bf16.msra.mxu0 0
        %3656 = vmatpush.bf16.msra.mxu0 %v3647
        %3657 = vmatmul.bf16.gmra.mxu0 %v3644
        %v3658 = vpop.f32.mrf.mxu0
        %v3659 = vadd.f32 0.0, %v3658
        %v3660 = vpop.f32.mrf.mxu0
        %3661 = vdwg.mxu0
        %v3663 = vsel %vm816, %v3604, 0
        %v3666 = vsel %vm1004, %v3600, 0
        %3668 = vmatpush.bf16.msra.mxu0 0
        %3669 = vmatpush.bf16.msra.mxu0 0
        %3670 = vmatpush.bf16.msra.mxu0 0
        %3671 = vmatpush.bf16.msra.mxu0 0
        %3672 = vmatpush.bf16.msra.mxu0 0
        %3673 = vmatpush.bf16.msra.mxu0 0
        %3674 = vmatpush.bf16.msra.mxu0 0
        %3675 = vmatpush.bf16.msra.mxu0 %v3666
        %3676 = vmatmul.bf16.gmra.mxu0 %v3663
        %v3677 = vpop.f32.mrf.mxu0
        %v3678 = vadd.f32 0.0, %v3677
        %v3679 = vpop.f32.mrf.mxu0
        %3680 = vdwg.mxu0
        %v3681 = vsel %vm450, %v3621, 0.0
        %v3682 = vsel %vm450, %v3640, 0.0
        %v3683 = vadd.f32 %v3681, %v3682
        %v3684 = vsel %vm450, %v3659, 0.0
        %v3685 = vadd.f32 %v3683, %v3684
        %v3686 = vsel %vm450, %v3678, 0.0
        %v3687 = vadd.f32 %v3685, %v3686
        %v3688 = vperm.slane %v2139, 7
        %v3689 = vadd.f32 %v3687, %v3688
        %v3690 = vadd.f32 %v2930, %v3689
        %v3691 = vsel %vm450, %v3690, 0.0
        %3692 = vadd.xlane.f32.xlu0 %v3691
        %v3693 = vpop.xlane.xlu0 %3692
        %v3694 = vmul.f32 %v3693, %v1181
        %v3695 = vsub.f32 %v3690, %v3694
        %v3696 = vmul.f32 %v3695, %v3695
        %v3697 = vsel %vm450, %v3696, 0.0
        %3698 = vadd.xlane.f32.xlu0 %v3697
        %v3699 = vpop.xlane.xlu0 %3698
        %v3700 = vmul.f32 %v3699, %v1181
        %v3701 = vadd.f32 %v3700, 1e-05
        %v3702 = vrsqrt.pop %v3701
        %v3703 = vmul.f32 %v3702, %v3701
        %v3704 = vmul.f32 %v3703, %v3702
        %v3705 = vmul.f32 0.5, %v3704
        %v3706 = vsub.f32 1.5, %v3705
        %v3707 = vmul.f32 %v3702, %v3706
        %vm3708 = vweird.f32 %v3701
        %vm3709 = vweird.f32 %v3702
        %vm3710 = vmor %vm3708, %vm3709
        %v3711 = vsel %vm3710, %v3702, %v3707
        %v3712 = vmul.f32 %v3695, %v3711
        %v3713 = vperm.slane %v2139, 1
        %v3714 = vmul.f32 %v3712, %v3713
        %v3715 = vperm.slane %v2139, 4
        %v3716 = vadd.f32 %v3714, %v3715
        %v3717 = vpack.c.bf16 %v3716, %v3716
        %s3718 = scalar_lea.vmem %s7, 16
        %v3719 = vld [vmem:[%s3718] sm:$0xf]
        %v3720 = vld [vmem:[%s3718 + $0x4] sm:$0xf]
        %v3721 = vld [vmem:[%s3718 + $0x8] sm:$0xf]
        %v3722 = vld [vmem:[%s3718 + $0xc] sm:$0xf]
        %s3723 = scalar_lea.vmem %s8, 1
        %v3724 = vld [vmem:[%s3723] sm:$0x1]
        %v3726 = vperm.slane %v3724, 0
        %v3732 = vunpack.c.l.b16 %v3719
        %v3733 = vunpack.c.l.b16 %v3720
        %v3734 = vunpack.c.l.b16 %v3721
        %v3735 = vunpack.c.l.b16 %v3722
        %v3736 = vpack.c.b16 %v3733, %v3732
        %v3737 = vpack.c.b16 %v3735, %v3734
        %v3741 = vsel %vm450, %v3717, 0
        %3743 = vmatpush.bf16.msra.mxu0 0
        %3744 = vmatpush.bf16.msra.mxu0 0
        %3745 = vmatpush.bf16.msra.mxu0 0
        %3746 = vmatpush.bf16.msra.mxu0 0
        %3747 = vmatpush.bf16.msra.mxu0 0
        %3748 = vmatpush.bf16.msra.mxu0 0
        %3749 = vmatpush.bf16.msra.mxu0 %v3737
        %3750 = vmatpush.bf16.msra.mxu0 %v3736
        %3751 = vmatmul.bf16.gmra.mxu0 %v3741
        %v3752 = vpop.f32.mrf.mxu0
        %v3753 = vadd.f32 %v3726, %v3752
        %v3754 = vpop.f32.mrf.mxu0
        %3755 = vdwg.mxu0
        %v3756 = vmax.f32 %v3753, 0.0
        %v3757 = vpack.c.bf16 %v3756, %v3756
        %s3758 = scalar_lea.vmem %s9, 64
        %v3759 = vld [vmem:[%s3758] sm:$0xf]
        %v3760 = vld [vmem:[%s3758 + $0x4] sm:$0xf]
        %v3761 = vld [vmem:[%s3758 + $0x8] sm:$0xf]
        %v3762 = vld [vmem:[%s3758 + $0xc] sm:$0xf]
        %v3763 = vld [vmem:[%s3758 + $0x10] sm:$0xf]
        %v3764 = vld [vmem:[%s3758 + $0x14] sm:$0xf]
        %v3765 = vld [vmem:[%s3758 + $0x18] sm:$0xf]
        %v3766 = vld [vmem:[%s3758 + $0x1c] sm:$0xf]
        %v3767 = vld [vmem:[%s3758 + $0x20] sm:$0xf]
        %v3768 = vld [vmem:[%s3758 + $0x24] sm:$0xf]
        %v3769 = vld [vmem:[%s3758 + $0x28] sm:$0xf]
        %v3770 = vld [vmem:[%s3758 + $0x2c] sm:$0xf]
        %v3771 = vld [vmem:[%s3758 + $0x30] sm:$0xf]
        %v3772 = vld [vmem:[%s3758 + $0x34] sm:$0xf]
        %v3773 = vld [vmem:[%s3758 + $0x38] sm:$0xf]
        %v3774 = vld [vmem:[%s3758 + $0x3c] sm:$0xf]
        %v3775 = vperm.slane %v2140, 0
        %v3792 = vunpack.c.l.b16 %v3759
        %v3793 = vunpack.c.l.b16 %v3760
        %v3794 = vunpack.c.l.b16 %v3761
        %v3795 = vunpack.c.l.b16 %v3762
        %v3796 = vunpack.c.l.b16 %v3763
        %v3797 = vunpack.c.l.b16 %v3764
        %v3798 = vunpack.c.l.b16 %v3765
        %v3799 = vunpack.c.l.b16 %v3766
        %v3800 = vunpack.c.l.b16 %v3767
        %v3801 = vunpack.c.l.b16 %v3768
        %v3802 = vunpack.c.l.b16 %v3769
        %v3803 = vunpack.c.l.b16 %v3770
        %v3804 = vunpack.c.l.b16 %v3771
        %v3805 = vunpack.c.l.b16 %v3772
        %v3806 = vunpack.c.l.b16 %v3773
        %v3807 = vunpack.c.l.b16 %v3774
        %v3808 = vpack.c.b16 %v3793, %v3792
        %v3809 = vpack.c.b16 %v3795, %v3794
        %v3810 = vpack.c.b16 %v3797, %v3796
        %v3811 = vpack.c.b16 %v3799, %v3798
        %v3812 = vpack.c.b16 %v3801, %v3800
        %v3813 = vpack.c.b16 %v3803, %v3802
        %v3814 = vpack.c.b16 %v3805, %v3804
        %v3815 = vpack.c.b16 %v3807, %v3806
        %3824 = vmatpush.bf16.msra.mxu0 %v3815
        %3825 = vmatpush.bf16.msra.mxu0 %v3814
        %3826 = vmatpush.bf16.msra.mxu0 %v3813
        %3827 = vmatpush.bf16.msra.mxu0 %v3812
        %3828 = vmatpush.bf16.msra.mxu0 %v3811
        %3829 = vmatpush.bf16.msra.mxu0 %v3810
        %3830 = vmatpush.bf16.msra.mxu0 %v3809
        %3831 = vmatpush.bf16.msra.mxu0 %v3808
        %3832 = vmatmul.bf16.gmra.mxu0 %v3757
        %v3833 = vpop.f32.mrf.mxu0
        %v3834 = vadd.f32 %v3775, %v3833
        %v3835 = vpop.f32.mrf.mxu0
        %3836 = vdwg.mxu0
        %v3837 = vadd.f32 %v3716, %v3834
        %v3838 = vsel %vm450, %v3837, 0.0
        %3839 = vadd.xlane.f32.xlu0 %v3838
        %v3840 = vpop.xlane.xlu0 %3839
        %v3841 = vmul.f32 %v3840, %v1181
        %v3842 = vsub.f32 %v3837, %v3841
        %v3843 = vmul.f32 %v3842, %v3842
        %v3844 = vsel %vm450, %v3843, 0.0
        %3845 = vadd.xlane.f32.xlu0 %v3844
        %v3846 = vpop.xlane.xlu0 %3845
        %v3847 = vmul.f32 %v3846, %v1181
        %v3848 = vadd.f32 %v3847, 1e-05
        %v3849 = vrsqrt.pop %v3848
        %v3850 = vmul.f32 %v3849, %v3848
        %v3851 = vmul.f32 %v3850, %v3849
        %v3852 = vmul.f32 0.5, %v3851
        %v3853 = vsub.f32 1.5, %v3852
        %v3854 = vmul.f32 %v3849, %v3853
        %vm3855 = vweird.f32 %v3848
        %vm3856 = vweird.f32 %v3849
        %vm3857 = vmor %vm3855, %vm3856
        %v3858 = vsel %vm3857, %v3849, %v3854
        %v3859 = vmul.f32 %v3842, %v3858
        %v3860 = vperm.slane %v2139, 2
        %v3861 = vmul.f32 %v3859, %v3860
        %v3862 = vperm.slane %v2139, 5
        %v3863 = vadd.f32 %v3861, %v3862
        %3864 = vst.msk [vmem:[%s390] sm:$0xff] %vm450, %v3863
        %s3865 = sand.u32 %s274, 1
        %s3866 = scalar_lea.sflag [#allocation3], %s3865
        %s3867 = sand.u32 %s274, 1
        %s3868 = smul.addr %s3867, 8
        %s3869 = scalar_lea.vmem [#allocation2], %s3868
        // Predicated region
        $region65: #{_lambda_.1} parent=63 // pred_check
          %p3870 = pneg %p284
        $region66: #{_lambda_.1} parent=63 // pred_check_branch
          %3872 = sbr.rel (%p3870) target = $region68
        $region67: #{_lambda_.1} parent=63 // pred_region
          %3874 = vsyncadd %s3866, 0
          %s3875 = smul.addr %s25, 8
          %s3876 = scalar_lea.hbm %s11, %s3875
          %s3878 = sshll.u32 %s3869, 4
          %s3879 = int_to_ptr.vmem [resolvable:$true] %s3878
          %s3880 = sshll.u32 %s3876, 4
          %s3881 = int_to_ptr.hbm [resolvable:$true] %s3880
          %3883 = dma.vmem_to_hbm [thread:$0]  %s3879, 128, %s3881, %s3866
        $region68: #{_lambda_.1} parent=63 // pred_fallthru
          _
      $region64: #{_lambda_.1} parent=5 // pred_fallthru
        _
      %p3884 = scmp.le.s32.totalorder 2, %s20
      // Predicated region
      $region69: #{_lambda_.1} parent=5 // pred_check
        %p3885 = pneg %p3884
      $region70: #{_lambda_.1} parent=5 // pred_check_branch
        %3887 = sbr.rel (%p3885) target = $region72
      $region71: #{_lambda_.1} parent=5 // pred_region
        %s3888 = ssub.s32 %s20, 2
        // Predicated region
        $region73: #{_lambda_.1} parent=71 // pred_check
          %p3889 = pneg %p290
        $region74: #{_lambda_.1} parent=71 // pred_check_branch
          %3891 = sbr.rel (%p3889) target = $region76
        $region75: #{_lambda_.1} parent=71 // pred_region
          %s3892 = sand.u32 %s275, 1
          %s3893 = scalar_lea.sflag [#allocation3], %s3892
          %s3894 = sand.u32 %s275, 1
          %s3895 = smul.addr %s3894, 8
          %s3896 = scalar_lea.vmem [#allocation2], %s3895
          %3898 = dma.done %s3893, 128
        $region76: #{_lambda_.1} parent=71 // pred_fallthru
          _
      $region72: #{_lambda_.1} parent=5 // pred_fallthru
        _
    $region6: #{_lambda_.1} parent=1 // loop_footer
      %s24 = sadd.s32 1, %s20
    $region7: #{_lambda_.1} parent=1 // loop_footer_branch
      %19 = sbr.rel target = $region3
    $region8: #{_lambda_.1} parent=1 // loop_exit
      _
    %3899 = vsyncpa [#allocation3], 1
    %s3900 = scalar_lea.sflag [#allocation3], 1
    %3901 = vsyncpa %s3900, 1

</llo_original>
